<compile_context>
chip_gen: v6e
topology: v6e:2x2x1
jax: 0.10.0
libtpu: 0.0.40
codegen_flags: <defaults>
</compile_context>

<pallas_src>
import functools

import jax
import jax.numpy as jnp
import numpy as np
from jax import lax
from jax.experimental import pallas as pl
from jax.experimental.pallas import tpu as pltpu

_VMEM_LIMIT_BYTES = 48 * 1024 * 1024   # safe on v5e/v6e (128 MiB) and v7x (64 MiB)
_VMEM_TILE_BUDGET = 8 * 1024 * 1024    # target footprint for pipelined blocks


# --------------------------------------------------------------------------
# Kernel 1: fused conv (+ bias [+ LeakyReLU + per-channel stats]) per row tile
# --------------------------------------------------------------------------
def _make_conv_kernel(*, k, stride, tile_rows, wo, halo_rows, use_lrelu,
                      out_dtype):
    def kernel(*refs):
        if halo_rows > 0:
            w_ref, b_ref, body_ref, halo_ref = refs[:4]
            out_refs = refs[4:]
        else:
            w_ref, b_ref, body_ref = refs[:3]
            halo_ref = None
            out_refs = refs[3:]
        y_ref = out_refs[0]
        stats_ref = out_refs[1] if use_lrelu else None

        h = pl.program_id(1)

        body = body_ref[0]                           # (tile_rows*stride, Wp, C_in)
        if halo_rows > 0:
            band = jnp.concatenate([body, halo_ref[0, :halo_rows]], axis=0)
        else:
            band = body
        c_in = band.shape[-1]
        c_out = b_ref.shape[-1]

        # Conv as k*k shifted (M, C_in) @ (C_in, C_out) MXU matmuls, f32 acc.
        acc = jnp.zeros((tile_rows * wo, c_out), jnp.float32)
        for di in range(k):
            for dj in range(k):
                tap = band[di:di + (tile_rows - 1) * stride + 1:stride,
                           dj:dj + (wo - 1) * stride + 1:stride, :]
                tap = tap.reshape(tile_rows * wo, c_in)   # (M, C_in), free if Wo%8==0
                acc = acc + jnp.dot(tap, w_ref[di * k + dj],
                                    preferred_element_type=jnp.float32)

        y = acc + b_ref[...]                          # (M, C_out) + (1, C_out)

        if use_lrelu:
            y = jnp.where(y >= 0, y, 0.2 * y)         # LeakyReLU(0.2)
            # Partial per-channel sums for InstanceNorm, accumulated across the
            # row-tile grid axis into a resident output block (P3 pattern).
            s1 = jnp.sum(y, axis=0, keepdims=True)
            s2 = jnp.sum(y * y, axis=0, keepdims=True)

            @pl.when(h == 0)
            def _init():
                stats_ref[0, 0:1, :] = s1
                stats_ref[0, 1:2, :] = s2

            @pl.when(h != 0)
            def _accum():
                stats_ref[0, 0:1, :] = stats_ref[0, 0:1, :] + s1
                stats_ref[0, 1:2, :] = stats_ref[0, 1:2, :] + s2

        y_ref[0] = y.astype(out_dtype)

    return kernel


# --------------------------------------------------------------------------
# Kernel 2: InstanceNorm apply (only when use_lrelu)
# --------------------------------------------------------------------------
def _norm_kernel(stats_ref, y_ref, o_ref, *, inv_hw, eps):
    s1 = stats_ref[0, 0:1, :].astype(jnp.float32)
    s2 = stats_ref[0, 1:2, :].astype(jnp.float32)
    mean = s1 * inv_hw
    var = jnp.maximum(s2 * inv_hw - mean * mean, 0.0)
    inv_std = lax.rsqrt(var + eps)                    # EUP, effectively free
    y = y_ref[0].astype(jnp.float32)
    o_ref[0] = ((y - mean) * inv_std).astype(o_ref.dtype)


# --------------------------------------------------------------------------
# Tile sizing (VMEM-bounded; conservative enough for v7x's 64 MiB VMEM)
# --------------------------------------------------------------------------
def _pick_tile_rows(ho, wo, wp, c_in, c_out, stride, itemsize,
                    budget=_VMEM_TILE_BUDGET):
    per_row = (2 * stride * wp * c_in * itemsize      # body block (x2 buffers)
               + 2 * wo * c_out * itemsize            # output block (x2 buffers)
               + wo * c_out * 4                       # f32 accumulator
               + 2 * wo * c_in * itemsize)            # tap temporaries
    cap = max(1, budget // per_row)
    divisors = [d for d in range(1, ho + 1) if ho % d == 0]
    good = [d for d in divisors if d <= cap and ((d * wo) % 8 == 0 or d == ho)]
    if good:
        return max(good)
    fallback = [d for d in divisors if d <= cap]
    th = max(fallback) if fallback else ho
    if (th * wo) % 8 != 0 and th != ho:
        th = ho   # keep the flattened (tile_rows*Wo) axis 8-sublane aligned
    return th


# --------------------------------------------------------------------------
# Wrapper
# --------------------------------------------------------------------------
def conv_layer_forward(x, weight, bias, *, kernel_size, stride, use_lrelu,
                       eps=1e-5, compute_dtype=jnp.bfloat16, tile_rows=None):
    """x: (N, C_in, H, W) NCHW; weight: (C_out, C_in, k, k); bias: (C_out,)."""
    n, c_in, height, width = x.shape
    c_out = weight.shape[0]
    k = kernel_size
    s = stride
    pad = k // 2
    out_dtype = jnp.float32

    # Glue: NCHW -> NHWC + reflection pad (fused into the surrounding jit).
    x_nhwc = jnp.transpose(x, (0, 2, 3, 1))
    if pad > 0:
        x_nhwc = jnp.pad(x_nhwc, ((0, 0), (pad, pad), (pad, pad), (0, 0)),
                         mode="reflect")
    hp, wp = height + 2 * pad, width + 2 * pad
    ho = (hp - k) // s + 1
    wo = (wp - k) // s + 1

    itemsize = jnp.dtype(compute_dtype).itemsize
    th = tile_rows or _pick_tile_rows(ho, wo, wp, c_in, c_out, s, itemsize)
    assert ho % th == 0, "tile_rows must divide the output height"
    nh = ho // th
    halo_rows = max(k - s, 0)
    assert th * s >= halo_rows, "row tile too small for the conv halo"

    x_pad = x_nhwc.astype(compute_dtype)
    if halo_rows > 0:
        hh = -(-halo_rows // 8) * 8          # halo block height (>=8, mult of 8)
        if (th * s) % hh != 0:
            hh = th * s                      # fallback: body-sized halo blocks
        total_h = nh * th * s + hh
        # Bottom zero-pad so the (h+1) halo block stays in bounds; never read.
        x_pad = jnp.pad(x_pad, ((0, 0), (0, total_h - hp), (0, 0), (0, 0)))
        halo_bpt = (th * s) // hh
    else:
        hh = 0
        halo_bpt = 0

    # (C_out, C_in, k, k) -> (k*k, C_in, C_out) to match the tap-loop order.
    w_taps = jnp.transpose(weight, (2, 3, 1, 0)).reshape(k * k, c_in, c_out)
    w_taps = w_taps.astype(compute_dtype)
    b_row = bias.reshape(1, c_out).astype(jnp.float32)

    inter_dtype = compute_dtype if use_lrelu else out_dtype

    in_specs = [
        pl.BlockSpec((k * k, c_in, c_out), lambda i, j: (0, 0, 0)),   # resident
        pl.BlockSpec((1, c_out), lambda i, j: (0, 0)),                # resident
        pl.BlockSpec((1, th * s, wp, c_in), lambda i, j: (i, j, 0, 0)),
    ]
    operands = [w_taps, b_row, x_pad]
    if halo_rows > 0:
        # Same array, overlapping halo rows via a second (small) block stream.
        in_specs.append(
            pl.BlockSpec((1, hh, wp, c_in),
                         lambda i, j: (i, (j + 1) * halo_bpt, 0, 0)))
        operands.append(x_pad)

    y_spec = pl.BlockSpec((1, th * wo, c_out), lambda i, j: (i, j, 0))
    if use_lrelu:
        out_shape = (jax.ShapeDtypeStruct((n, ho * wo, c_out), inter_dtype),
                     jax.ShapeDtypeStruct((n, 2, c_out), jnp.float32))
        out_specs = (y_spec,
                     pl.BlockSpec((1, 2, c_out), lambda i, j: (i, 0, 0)))
        semantics = ("parallel", "arbitrary")   # h axis reduces into stats
    else:
        out_shape = jax.ShapeDtypeStruct((n, ho * wo, c_out), inter_dtype)
        out_specs = y_spec
        semantics = ("parallel", "parallel")

    conv_flops = 2 * n * ho * wo * c_out * c_in * k * k
    conv_bytes = (x_pad.size + n * nh * hh * wp * c_in + w_taps.size) * itemsize
    conv_bytes += n * ho * wo * c_out * jnp.dtype(inter_dtype).itemsize
    conv_bytes += b_row.size * 4 + (n * 2 * c_out * 4 if use_lrelu else 0)

    kernel = _make_conv_kernel(k=k, stride=s, tile_rows=th, wo=wo,
                               halo_rows=halo_rows, use_lrelu=use_lrelu,
                               out_dtype=inter_dtype)

    conv_out = pl.pallas_call(
        kernel,
        out_shape=out_shape,
        grid_spec=pltpu.PrefetchScalarGridSpec(
            num_scalar_prefetch=0,
            grid=(n, nh),
            in_specs=in_specs,
            out_specs=out_specs),
        compiler_params=pltpu.CompilerParams(
            dimension_semantics=semantics,
            vmem_limit_bytes=_VMEM_LIMIT_BYTES),
        cost_estimate=pl.CostEstimate(flops=int(conv_flops), transcendentals=0,
                                      bytes_accessed=int(conv_bytes)),
    )(*operands)

    if use_lrelu:
        y_flat, stats = conv_out
        norm_bytes = (y_flat.size * (jnp.dtype(inter_dtype).itemsize + 4)
                      + stats.size * 4)
        y_flat = pl.pallas_call(
            functools.partial(_norm_kernel, inv_hw=1.0 / float(ho * wo),
                              eps=float(eps)),
            out_shape=jax.ShapeDtypeStruct((n, ho * wo, c_out), out_dtype),
            grid_spec=pltpu.PrefetchScalarGridSpec(
                num_scalar_prefetch=0,
                grid=(n, nh),
                in_specs=[
                    pl.BlockSpec((1, 2, c_out), lambda i, j: (i, 0, 0)),
                    pl.BlockSpec((1, th * wo, c_out), lambda i, j: (i, j, 0)),
                ],
                out_specs=pl.BlockSpec((1, th * wo, c_out),
                                       lambda i, j: (i, j, 0))),
            compiler_params=pltpu.CompilerParams(
                dimension_semantics=("parallel", "parallel"),
                vmem_limit_bytes=_VMEM_LIMIT_BYTES),
            cost_estimate=pl.CostEstimate(
                flops=int(3 * n * ho * wo * c_out),
                transcendentals=int(n * nh * c_out),
                bytes_accessed=int(norm_bytes)),
        )(stats, y_flat)
    else:
        y_flat = conv_out

    # Glue: flat NHWC -> NCHW (kept only to match the PyTorch interface).
    out = y_flat.reshape(n, ho, wo, c_out).transpose(0, 3, 1, 2)
    return out.astype(out_dtype)


# --------------------------------------------------------------------------
# Pure-JAX reference (PyTorch semantics)
# --------------------------------------------------------------------------
def conv_layer_reference(x, weight, bias, *, kernel_size, stride, use_lrelu,
                         eps=1e-5):
    pad = kernel_size // 2
    if pad > 0:
        x = jnp.pad(x, ((0, 0), (0, 0), (pad, pad), (pad, pad)), mode="reflect")
    y = lax.conv_general_dilated(
        x, weight, window_strides=(stride, stride), padding="VALID",
        dimension_numbers=("NCHW", "OIHW", "NCHW"))
    y = y + bias.reshape(1, -1, 1, 1)
    if use_lrelu:
        y = jnp.where(y >= 0, y, 0.2 * y)
        mean = jnp.mean(y, axis=(2, 3), keepdims=True)
        var = jnp.mean((y - mean) ** 2, axis=(2, 3), keepdims=True)
        y = (y - mean) * lax.rsqrt(var + eps)
    return y


if __name__ == "__main__":
    batch, in_channels, out_channels = 2, 4, 8
    spatial, kernel_size, stride = 16, 3, 1

    key = jax.random.PRNGKey(0)
    kx, kw, kb = jax.random.split(key, 3)

    x = jax.random.normal(kx, (batch, in_channels, spatial, spatial),
                          dtype=jnp.float32)
    fan_in = in_channels * kernel_size * kernel_size
    bound = 1.0 / np.sqrt(fan_in)
    weight = jax.random.uniform(
        kw, (out_channels, in_channels, kernel_size, kernel_size),
        minval=-bound, maxval=bound, dtype=jnp.float32)
    bias = jax.random.uniform(kb, (out_channels,), minval=-bound, maxval=bound,
                              dtype=jnp.float32)

    for use_lrelu in (True, False):
        ref = jax.block_until_ready(conv_layer_reference(
            x, weight, bias, kernel_size=kernel_size, stride=stride,
            use_lrelu=use_lrelu))

        # f32 compute path: tight check of the kernel structure.
        fwd_f32 = jax.jit(functools.partial(
            conv_layer_forward, kernel_size=kernel_size, stride=stride,
            use_lrelu=use_lrelu, compute_dtype=jnp.float32))
        out_f32 = jax.block_until_ready(fwd_f32(x, weight, bias))
        np.testing.assert_allclose(np.asarray(out_f32), np.asarray(ref),
                                   rtol=1e-4, atol=1e-4)

        # bf16 MXU path (default / production): bf16-level tolerance.
        fwd_bf16 = jax.jit(functools.partial(
            conv_layer_forward, kernel_size=kernel_size, stride=stride,
            use_lrelu=use_lrelu, compute_dtype=jnp.bfloat16))
        out_bf16 = jax.block_until_ready(fwd_bf16(x, weight, bias))
        np.testing.assert_allclose(np.asarray(out_bf16), np.asarray(ref),
                                   rtol=5e-2, atol=5e-2)

    print("KERNEL_OK")
</pallas_src>

<mosaic_0001>
module attributes {stable_mosaic.version = 11 : i64} {
  func.func @kernel(%arg0: i32, %arg1: i32, %arg2: memref<9x4x8xf32, #tpu.memory_space<vmem>>, %arg3: memref<1x8xf32, #tpu.memory_space<vmem>>, %arg4: memref<1x16x18x4xf32, #tpu.memory_space<vmem>>, %arg5: memref<1x8x18x4xf32, #tpu.memory_space<vmem>>, %arg6: memref<1x256x8xf32, #tpu.memory_space<vmem>>, %arg7: memref<1x2x8xf32, #tpu.memory_space<vmem>>) attributes {dimension_semantics = [#tpu.dimension_semantics<parallel>, #tpu.dimension_semantics<arbitrary>], iteration_bounds = array<i64: 2, 1>, scalar_prefetch = 0 : i64, scratch_operands = 0 : i64, tpu.core_type = #tpu.core_type<tc>, window_params = [{pipeline_mode = #tpu.pipeline_mode<synchronous>, transform_indices = @transform_0, window_bounds = array<i64: 9, 4, 8>}, {pipeline_mode = #tpu.pipeline_mode<synchronous>, transform_indices = @transform_1, window_bounds = array<i64: 1, 8>}, {transform_indices = @transform_2, window_bounds = array<i64: 1, 16, 18, 4>}, {transform_indices = @transform_3, window_bounds = array<i64: 1, 8, 18, 4>}, {transform_indices = @transform_4, window_bounds = array<i64: 1, 256, 8>}, {transform_indices = @transform_5, window_bounds = array<i64: 1, 2, 8>}]} {
    %c0 = arith.constant 0 : index
    %c0_0 = arith.constant 0 : index
    %c0_1 = arith.constant 0 : index
    %c0_2 = arith.constant 0 : index
    %0 = vector.load %arg4[%c0, %c0_0, %c0_1, %c0_2] : memref<1x16x18x4xf32, #tpu.memory_space<vmem>>, vector<1x16x18x4xf32>
    %1 = vector.shape_cast %0 : vector<1x16x18x4xf32> to vector<16x18x4xf32>
    %c0_3 = arith.constant 0 : index
    %c0_4 = arith.constant 0 : index
    %c0_5 = arith.constant 0 : index
    %c0_6 = arith.constant 0 : index
    %2 = vector.load %arg5[%c0_3, %c0_4, %c0_5, %c0_6] : memref<1x8x18x4xf32, #tpu.memory_space<vmem>>, vector<1x2x18x4xf32>
    %3 = vector.shape_cast %2 : vector<1x2x18x4xf32> to vector<2x18x4xf32>
    %4 = tpu.concatenate %1, %3 in 0 : vector<16x18x4xf32>, vector<2x18x4xf32> -> vector<18x18x4xf32>
    %cst = arith.constant 0.000000e+00 : f32
    %5 = vector.broadcast %cst : f32 to vector<256x8xf32>
    %6 = vector.extract_strided_slice %4 {offsets = [0, 0, 0], sizes = [16, 16, 4], strides = [1, 1, 1]} : vector<18x18x4xf32> to vector<16x16x4xf32>
    %7 = vector.shape_cast %6 : vector<16x16x4xf32> to vector<256x4xf32>
    %c0_7 = arith.constant 0 : index
    %c0_8 = arith.constant 0 : index
    %c0_9 = arith.constant 0 : index
    %8 = vector.load %arg2[%c0_7, %c0_8, %c0_9] : memref<9x4x8xf32, #tpu.memory_space<vmem>>, vector<1x4x8xf32>
    %9 = vector.shape_cast %8 : vector<1x4x8xf32> to vector<4x8xf32>
    %cst_10 = arith.constant dense<0.000000e+00> : vector<256x8xf32>
    %10 = tpu.matmul %7, %9, %cst_10 {dimension_numbers = #tpu.dot_dimension_numbers<[1], [0], [0], [1], [0, 0, 1, 1], [], []>} : vector<256x4xf32>, vector<4x8xf32>, vector<256x8xf32> -> vector<256x8xf32>
    %11 = arith.addf %5, %10 : vector<256x8xf32>
    %12 = vector.extract_strided_slice %4 {offsets = [0, 1, 0], sizes = [16, 16, 4], strides = [1, 1, 1]} : vector<18x18x4xf32> to vector<16x16x4xf32>
    %13 = vector.shape_cast %12 : vector<16x16x4xf32> to vector<256x4xf32>
    %c1 = arith.constant 1 : index
    %c0_11 = arith.constant 0 : index
    %c0_12 = arith.constant 0 : index
    %14 = vector.load %arg2[%c1, %c0_11, %c0_12] : memref<9x4x8xf32, #tpu.memory_space<vmem>>, vector<1x4x8xf32>
    %15 = vector.shape_cast %14 : vector<1x4x8xf32> to vector<4x8xf32>
    %cst_13 = arith.constant dense<0.000000e+00> : vector<256x8xf32>
    %16 = tpu.matmul %13, %15, %cst_13 {dimension_numbers = #tpu.dot_dimension_numbers<[1], [0], [0], [1], [0, 0, 1, 1], [], []>} : vector<256x4xf32>, vector<4x8xf32>, vector<256x8xf32> -> vector<256x8xf32>
    %17 = arith.addf %11, %16 : vector<256x8xf32>
    %18 = vector.extract_strided_slice %4 {offsets = [0, 2, 0], sizes = [16, 16, 4], strides = [1, 1, 1]} : vector<18x18x4xf32> to vector<16x16x4xf32>
    %19 = vector.shape_cast %18 : vector<16x16x4xf32> to vector<256x4xf32>
    %c2 = arith.constant 2 : index
    %c0_14 = arith.constant 0 : index
    %c0_15 = arith.constant 0 : index
    %20 = vector.load %arg2[%c2, %c0_14, %c0_15] : memref<9x4x8xf32, #tpu.memory_space<vmem>>, vector<1x4x8xf32>
    %21 = vector.shape_cast %20 : vector<1x4x8xf32> to vector<4x8xf32>
    %cst_16 = arith.constant dense<0.000000e+00> : vector<256x8xf32>
    %22 = tpu.matmul %19, %21, %cst_16 {dimension_numbers = #tpu.dot_dimension_numbers<[1], [0], [0], [1], [0, 0, 1, 1], [], []>} : vector<256x4xf32>, vector<4x8xf32>, vector<256x8xf32> -> vector<256x8xf32>
    %23 = arith.addf %17, %22 : vector<256x8xf32>
    %24 = vector.extract_strided_slice %4 {offsets = [1, 0, 0], sizes = [16, 16, 4], strides = [1, 1, 1]} : vector<18x18x4xf32> to vector<16x16x4xf32>
    %25 = vector.shape_cast %24 : vector<16x16x4xf32> to vector<256x4xf32>
    %c3 = arith.constant 3 : index
    %c0_17 = arith.constant 0 : index
    %c0_18 = arith.constant 0 : index
    %26 = vector.load %arg2[%c3, %c0_17, %c0_18] : memref<9x4x8xf32, #tpu.memory_space<vmem>>, vector<1x4x8xf32>
    %27 = vector.shape_cast %26 : vector<1x4x8xf32> to vector<4x8xf32>
    %cst_19 = arith.constant dense<0.000000e+00> : vector<256x8xf32>
    %28 = tpu.matmul %25, %27, %cst_19 {dimension_numbers = #tpu.dot_dimension_numbers<[1], [0], [0], [1], [0, 0, 1, 1], [], []>} : vector<256x4xf32>, vector<4x8xf32>, vector<256x8xf32> -> vector<256x8xf32>
    %29 = arith.addf %23, %28 : vector<256x8xf32>
    %30 = vector.extract_strided_slice %4 {offsets = [1, 1, 0], sizes = [16, 16, 4], strides = [1, 1, 1]} : vector<18x18x4xf32> to vector<16x16x4xf32>
    %31 = vector.shape_cast %30 : vector<16x16x4xf32> to vector<256x4xf32>
    %c4 = arith.constant 4 : index
    %c0_20 = arith.constant 0 : index
    %c0_21 = arith.constant 0 : index
    %32 = vector.load %arg2[%c4, %c0_20, %c0_21] : memref<9x4x8xf32, #tpu.memory_space<vmem>>, vector<1x4x8xf32>
    %33 = vector.shape_cast %32 : vector<1x4x8xf32> to vector<4x8xf32>
    %cst_22 = arith.constant dense<0.000000e+00> : vector<256x8xf32>
    %34 = tpu.matmul %31, %33, %cst_22 {dimension_numbers = #tpu.dot_dimension_numbers<[1], [0], [0], [1], [0, 0, 1, 1], [], []>} : vector<256x4xf32>, vector<4x8xf32>, vector<256x8xf32> -> vector<256x8xf32>
    %35 = arith.addf %29, %34 : vector<256x8xf32>
    %36 = vector.extract_strided_slice %4 {offsets = [1, 2, 0], sizes = [16, 16, 4], strides = [1, 1, 1]} : vector<18x18x4xf32> to vector<16x16x4xf32>
    %37 = vector.shape_cast %36 : vector<16x16x4xf32> to vector<256x4xf32>
    %c5 = arith.constant 5 : index
    %c0_23 = arith.constant 0 : index
    %c0_24 = arith.constant 0 : index
    %38 = vector.load %arg2[%c5, %c0_23, %c0_24] : memref<9x4x8xf32, #tpu.memory_space<vmem>>, vector<1x4x8xf32>
    %39 = vector.shape_cast %38 : vector<1x4x8xf32> to vector<4x8xf32>
    %cst_25 = arith.constant dense<0.000000e+00> : vector<256x8xf32>
    %40 = tpu.matmul %37, %39, %cst_25 {dimension_numbers = #tpu.dot_dimension_numbers<[1], [0], [0], [1], [0, 0, 1, 1], [], []>} : vector<256x4xf32>, vector<4x8xf32>, vector<256x8xf32> -> vector<256x8xf32>
    %41 = arith.addf %35, %40 : vector<256x8xf32>
    %42 = vector.extract_strided_slice %4 {offsets = [2, 0, 0], sizes = [16, 16, 4], strides = [1, 1, 1]} : vector<18x18x4xf32> to vector<16x16x4xf32>
    %43 = vector.shape_cast %42 : vector<16x16x4xf32> to vector<256x4xf32>
    %c6 = arith.constant 6 : index
    %c0_26 = arith.constant 0 : index
    %c0_27 = arith.constant 0 : index
    %44 = vector.load %arg2[%c6, %c0_26, %c0_27] : memref<9x4x8xf32, #tpu.memory_space<vmem>>, vector<1x4x8xf32>
    %45 = vector.shape_cast %44 : vector<1x4x8xf32> to vector<4x8xf32>
    %cst_28 = arith.constant dense<0.000000e+00> : vector<256x8xf32>
    %46 = tpu.matmul %43, %45, %cst_28 {dimension_numbers = #tpu.dot_dimension_numbers<[1], [0], [0], [1], [0, 0, 1, 1], [], []>} : vector<256x4xf32>, vector<4x8xf32>, vector<256x8xf32> -> vector<256x8xf32>
    %47 = arith.addf %41, %46 : vector<256x8xf32>
    %48 = vector.extract_strided_slice %4 {offsets = [2, 1, 0], sizes = [16, 16, 4], strides = [1, 1, 1]} : vector<18x18x4xf32> to vector<16x16x4xf32>
    %49 = vector.shape_cast %48 : vector<16x16x4xf32> to vector<256x4xf32>
    %c7 = arith.constant 7 : index
    %c0_29 = arith.constant 0 : index
    %c0_30 = arith.constant 0 : index
    %50 = vector.load %arg2[%c7, %c0_29, %c0_30] : memref<9x4x8xf32, #tpu.memory_space<vmem>>, vector<1x4x8xf32>
    %51 = vector.shape_cast %50 : vector<1x4x8xf32> to vector<4x8xf32>
    %cst_31 = arith.constant dense<0.000000e+00> : vector<256x8xf32>
    %52 = tpu.matmul %49, %51, %cst_31 {dimension_numbers = #tpu.dot_dimension_numbers<[1], [0], [0], [1], [0, 0, 1, 1], [], []>} : vector<256x4xf32>, vector<4x8xf32>, vector<256x8xf32> -> vector<256x8xf32>
    %53 = arith.addf %47, %52 : vector<256x8xf32>
    %54 = vector.extract_strided_slice %4 {offsets = [2, 2, 0], sizes = [16, 16, 4], strides = [1, 1, 1]} : vector<18x18x4xf32> to vector<16x16x4xf32>
    %55 = vector.shape_cast %54 : vector<16x16x4xf32> to vector<256x4xf32>
    %c8 = arith.constant 8 : index
    %c0_32 = arith.constant 0 : index
    %c0_33 = arith.constant 0 : index
    %56 = vector.load %arg2[%c8, %c0_32, %c0_33] : memref<9x4x8xf32, #tpu.memory_space<vmem>>, vector<1x4x8xf32>
    %57 = vector.shape_cast %56 : vector<1x4x8xf32> to vector<4x8xf32>
    %cst_34 = arith.constant dense<0.000000e+00> : vector<256x8xf32>
    %58 = tpu.matmul %55, %57, %cst_34 {dimension_numbers = #tpu.dot_dimension_numbers<[1], [0], [0], [1], [0, 0, 1, 1], [], []>} : vector<256x4xf32>, vector<4x8xf32>, vector<256x8xf32> -> vector<256x8xf32>
    %59 = arith.addf %53, %58 : vector<256x8xf32>
    %c0_35 = arith.constant 0 : index
    %c0_36 = arith.constant 0 : index
    %60 = vector.load %arg3[%c0_35, %c0_36] : memref<1x8xf32, #tpu.memory_space<vmem>>, vector<1x8xf32>
    %61 = vector.broadcast %60 : vector<1x8xf32> to vector<256x8xf32>
    %62 = arith.addf %59, %61 : vector<256x8xf32>
    %cst_37 = arith.constant 0.000000e+00 : f32
    %63 = vector.broadcast %cst_37 : f32 to vector<256x8xf32>
    %64 = arith.cmpf oge, %62, %63 : vector<256x8xf32>
    %cst_38 = arith.constant 2.000000e-01 : f32
    %65 = vector.broadcast %cst_38 : f32 to vector<256x8xf32>
    %66 = arith.mulf %65, %62 : vector<256x8xf32>
    %67 = arith.select %64, %62, %66 : vector<256x8xi1>, vector<256x8xf32>
    %cst_39 = arith.constant dense<0.000000e+00> : vector<8xf32>
    %68 = vector.multi_reduction <add>, %67, %cst_39 [0] : vector<256x8xf32> to vector<8xf32>
    %69 = vector.shape_cast %68 : vector<8xf32> to vector<1x8xf32>
    %70 = arith.mulf %67, %67 : vector<256x8xf32>
    %cst_40 = arith.constant dense<0.000000e+00> : vector<8xf32>
    %71 = vector.multi_reduction <add>, %70, %cst_40 [0] : vector<256x8xf32> to vector<8xf32>
    %72 = vector.shape_cast %71 : vector<8xf32> to vector<1x8xf32>
    %c0_i32 = arith.constant 0 : i32
    %73 = arith.cmpi eq, %arg1, %c0_i32 : i32
    %74 = arith.extui %73 : i1 to i32
    %c0_i32_41 = arith.constant 0 : i32
    %75 = arith.cmpi ne, %74, %c0_i32_41 : i32
    scf.if %75 {
      %c0_47 = arith.constant 0 : index
      %c0_48 = arith.constant 0 : index
      %c0_49 = arith.constant 0 : index
      %82 = vector.load %arg7[%c0_47, %c0_48, %c0_49] : memref<1x2x8xf32, #tpu.memory_space<vmem>>, vector<1x1x8xf32>
      %83 = vector.shape_cast %82 : vector<1x1x8xf32> to vector<1x8xf32>
      %84 = vector.shape_cast %69 : vector<1x8xf32> to vector<1x1x8xf32>
      tpu.vector_store %arg7[%c0_47, %c0_48, %c0_49], %84 {strides = array<i32>} : memref<1x2x8xf32, #tpu.memory_space<vmem>>, vector<1x1x8xf32>,
      %c0_50 = arith.constant 0 : index
      %c1_51 = arith.constant 1 : index
      %c0_52 = arith.constant 0 : index
      %85 = vector.load %arg7[%c0_50, %c1_51, %c0_52] : memref<1x2x8xf32, #tpu.memory_space<vmem>>, vector<1x1x8xf32>
      %86 = vector.shape_cast %85 : vector<1x1x8xf32> to vector<1x8xf32>
      %87 = vector.shape_cast %72 : vector<1x8xf32> to vector<1x1x8xf32>
      tpu.vector_store %arg7[%c0_50, %c1_51, %c0_52], %87 {strides = array<i32>} : memref<1x2x8xf32, #tpu.memory_space<vmem>>, vector<1x1x8xf32>,
    } else {
    }
    %c0_i32_42 = arith.constant 0 : i32
    %76 = arith.cmpi ne, %arg1, %c0_i32_42 : i32
    %77 = arith.extui %76 : i1 to i32
    %c0_i32_43 = arith.constant 0 : i32
    %78 = arith.cmpi ne, %77, %c0_i32_43 : i32
    scf.if %78 {
      %c0_47 = arith.constant 0 : index
      %c0_48 = arith.constant 0 : index
      %c0_49 = arith.constant 0 : index
      %82 = vector.load %arg7[%c0_47, %c0_48, %c0_49] : memref<1x2x8xf32, #tpu.memory_space<vmem>>, vector<1x1x8xf32>
      %83 = vector.shape_cast %82 : vector<1x1x8xf32> to vector<1x8xf32>
      %84 = arith.addf %83, %69 : vector<1x8xf32>
      %c0_50 = arith.constant 0 : index
      %c0_51 = arith.constant 0 : index
      %c0_52 = arith.constant 0 : index
      %85 = vector.load %arg7[%c0_50, %c0_51, %c0_52] : memref<1x2x8xf32, #tpu.memory_space<vmem>>, vector<1x1x8xf32>
      %86 = vector.shape_cast %85 : vector<1x1x8xf32> to vector<1x8xf32>
      %87 = vector.shape_cast %84 : vector<1x8xf32> to vector<1x1x8xf32>
      tpu.vector_store %arg7[%c0_50, %c0_51, %c0_52], %87 {strides = array<i32>} : memref<1x2x8xf32, #tpu.memory_space<vmem>>, vector<1x1x8xf32>,
      %c0_53 = arith.constant 0 : index
      %c1_54 = arith.constant 1 : index
      %c0_55 = arith.constant 0 : index
      %88 = vector.load %arg7[%c0_53, %c1_54, %c0_55] : memref<1x2x8xf32, #tpu.memory_space<vmem>>, vector<1x1x8xf32>
      %89 = vector.shape_cast %88 : vector<1x1x8xf32> to vector<1x8xf32>
      %90 = arith.addf %89, %72 : vector<1x8xf32>
      %c0_56 = arith.constant 0 : index
      %c1_57 = arith.constant 1 : index
      %c0_58 = arith.constant 0 : index
      %91 = vector.load %arg7[%c0_56, %c1_57, %c0_58] : memref<1x2x8xf32, #tpu.memory_space<vmem>>, vector<1x1x8xf32>
      %92 = vector.shape_cast %91 : vector<1x1x8xf32> to vector<1x8xf32>
      %93 = vector.shape_cast %90 : vector<1x8xf32> to vector<1x1x8xf32>
      tpu.vector_store %arg7[%c0_56, %c1_57, %c0_58], %93 {strides = array<i32>} : memref<1x2x8xf32, #tpu.memory_space<vmem>>, vector<1x1x8xf32>,
    } else {
    }
    %c0_44 = arith.constant 0 : index
    %c0_45 = arith.constant 0 : index
    %c0_46 = arith.constant 0 : index
    %79 = vector.load %arg6[%c0_44, %c0_45, %c0_46] : memref<1x256x8xf32, #tpu.memory_space<vmem>>, vector<1x256x8xf32>
    %80 = vector.shape_cast %79 : vector<1x256x8xf32> to vector<256x8xf32>
    %81 = vector.shape_cast %67 : vector<256x8xf32> to vector<1x256x8xf32>
    tpu.vector_store %arg6[%c0_44, %c0_45, %c0_46], %81 {strides = array<i32>} : memref<1x256x8xf32, #tpu.memory_space<vmem>>, vector<1x256x8xf32>,
    return
  }
  func.func @transform_0(%arg0: i32, %arg1: i32) -> (i32, i32, i32) {
    %c0_i32 = arith.constant 0 : i32
    %c0_i32_0 = arith.constant 0 : i32
    %c0_i32_1 = arith.constant 0 : i32
    %c0_i32_2 = arith.constant 0 : i32
    return %c0_i32, %c0_i32_0, %c0_i32_1 : i32, i32, i32
  }
  func.func @transform_1(%arg0: i32, %arg1: i32) -> (i32, i32) {
    %c0_i32 = arith.constant 0 : i32
    %c0_i32_0 = arith.constant 0 : i32
    %c0_i32_1 = arith.constant 0 : i32
    return %c0_i32, %c0_i32_0 : i32, i32
  }
  func.func @transform_2(%arg0: i32, %arg1: i32) -> (i32, i32, i32, i32) {
    %c0_i32 = arith.constant 0 : i32
    %c0_i32_0 = arith.constant 0 : i32
    %c0_i32_1 = arith.constant 0 : i32
    return %arg0, %arg1, %c0_i32, %c0_i32_0 : i32, i32, i32, i32
  }
  func.func @transform_3(%arg0: i32, %arg1: i32) -> (i32, i32, i32, i32) {
    %c1_i32 = arith.constant 1 : i32
    %0 = arith.addi %arg1, %c1_i32 : i32
    %c2_i32 = arith.constant 2 : i32
    %1 = arith.muli %0, %c2_i32 : i32
    %c0_i32 = arith.constant 0 : i32
    %c0_i32_0 = arith.constant 0 : i32
    %c0_i32_1 = arith.constant 0 : i32
    return %arg0, %1, %c0_i32, %c0_i32_0 : i32, i32, i32, i32
  }
  func.func @transform_4(%arg0: i32, %arg1: i32) -> (i32, i32, i32) {
    %c0_i32 = arith.constant 0 : i32
    %c0_i32_0 = arith.constant 0 : i32
    return %arg0, %arg1, %c0_i32 : i32, i32, i32
  }
  func.func @transform_5(%arg0: i32, %arg1: i32) -> (i32, i32, i32) {
    %c0_i32 = arith.constant 0 : i32
    %c0_i32_0 = arith.constant 0 : i32
    %c0_i32_1 = arith.constant 0 : i32
    return %arg0, %c0_i32, %c0_i32_0 : i32, i32, i32
  }
}

module attributes {stable_mosaic.version = 11 : i64} {
  func.func @_norm_kernel(%arg0: i32, %arg1: i32, %arg2: memref<1x2x8xf32, #tpu.memory_space<vmem>>, %arg3: memref<1x256x8xf32, #tpu.memory_space<vmem>>, %arg4: memref<1x256x8xf32, #tpu.memory_space<vmem>>) attributes {dimension_semantics = [#tpu.dimension_semantics<parallel>, #tpu.dimension_semantics<parallel>], iteration_bounds = array<i64: 2, 1>, scalar_prefetch = 0 : i64, scratch_operands = 0 : i64, tpu.core_type = #tpu.core_type<tc>, window_params = [{transform_indices = @transform_0, window_bounds = array<i64: 1, 2, 8>}, {transform_indices = @transform_1, window_bounds = array<i64: 1, 256, 8>}, {transform_indices = @transform_2, window_bounds = array<i64: 1, 256, 8>}]} {
    %c0 = arith.constant 0 : index
    %c0_0 = arith.constant 0 : index
    %c0_1 = arith.constant 0 : index
    %0 = vector.load %arg2[%c0, %c0_0, %c0_1] : memref<1x2x8xf32, #tpu.memory_space<vmem>>, vector<1x1x8xf32>
    %1 = vector.shape_cast %0 : vector<1x1x8xf32> to vector<1x8xf32>
    %c0_2 = arith.constant 0 : index
    %c1 = arith.constant 1 : index
    %c0_3 = arith.constant 0 : index
    %2 = vector.load %arg2[%c0_2, %c1, %c0_3] : memref<1x2x8xf32, #tpu.memory_space<vmem>>, vector<1x1x8xf32>
    %3 = vector.shape_cast %2 : vector<1x1x8xf32> to vector<1x8xf32>
    %cst = arith.constant 3.906250e-03 : f32
    %4 = vector.broadcast %cst : f32 to vector<1x8xf32>
    %5 = arith.mulf %1, %4 : vector<1x8xf32>
    %cst_4 = arith.constant 3.906250e-03 : f32
    %6 = vector.broadcast %cst_4 : f32 to vector<1x8xf32>
    %7 = arith.mulf %3, %6 : vector<1x8xf32>
    %8 = arith.mulf %5, %5 : vector<1x8xf32>
    %9 = arith.subf %7, %8 : vector<1x8xf32>
    %cst_5 = arith.constant 0.000000e+00 : f32
    %10 = vector.broadcast %cst_5 : f32 to vector<1x8xf32>
    %11 = arith.maximumf %9, %10 : vector<1x8xf32>
    %cst_6 = arith.constant 9.99999974E-6 : f32
    %12 = vector.broadcast %cst_6 : f32 to vector<1x8xf32>
    %13 = arith.addf %11, %12 : vector<1x8xf32>
    %14 = math.rsqrt %13 : vector<1x8xf32>
    %c0_7 = arith.constant 0 : index
    %c0_8 = arith.constant 0 : index
    %c0_9 = arith.constant 0 : index
    %15 = vector.load %arg3[%c0_7, %c0_8, %c0_9] : memref<1x256x8xf32, #tpu.memory_space<vmem>>, vector<1x256x8xf32>
    %16 = vector.shape_cast %15 : vector<1x256x8xf32> to vector<256x8xf32>
    %17 = vector.broadcast %5 : vector<1x8xf32> to vector<256x8xf32>
    %18 = arith.subf %16, %17 : vector<256x8xf32>
    %19 = vector.broadcast %14 : vector<1x8xf32> to vector<256x8xf32>
    %20 = arith.mulf %18, %19 : vector<256x8xf32>
    %c0_10 = arith.constant 0 : index
    %c0_11 = arith.constant 0 : index
    %c0_12 = arith.constant 0 : index
    %21 = vector.load %arg4[%c0_10, %c0_11, %c0_12] : memref<1x256x8xf32, #tpu.memory_space<vmem>>, vector<1x256x8xf32>
    %22 = vector.shape_cast %21 : vector<1x256x8xf32> to vector<256x8xf32>
    %23 = vector.shape_cast %20 : vector<256x8xf32> to vector<1x256x8xf32>
    tpu.vector_store %arg4[%c0_10, %c0_11, %c0_12], %23 {strides = array<i32>} : memref<1x256x8xf32, #tpu.memory_space<vmem>>, vector<1x256x8xf32>,
    return
  }
  func.func @transform_0(%arg0: i32, %arg1: i32) -> (i32, i32, i32) {
    %c0_i32 = arith.constant 0 : i32
    %c0_i32_0 = arith.constant 0 : i32
    %c0_i32_1 = arith.constant 0 : i32
    return %arg0, %c0_i32, %c0_i32_0 : i32, i32, i32
  }
  func.func @transform_1(%arg0: i32, %arg1: i32) -> (i32, i32, i32) {
    %c0_i32 = arith.constant 0 : i32
    %c0_i32_0 = arith.constant 0 : i32
    return %arg0, %arg1, %c0_i32 : i32, i32, i32
  }
  func.func @transform_2(%arg0: i32, %arg1: i32) -> (i32, i32, i32) {
    %c0_i32 = arith.constant 0 : i32
    %c0_i32_0 = arith.constant 0 : i32
    return %arg0, %arg1, %c0_i32 : i32, i32, i32
  }
}

</mosaic_0001>

<llo_original>
// kernel: conv_layer_forward.3
$region0: #{conv_layer_forward.3}
  #allocation0 [shape = 'u32[]', space=smem, size = 0x4, offset = 0x4, fixed_abs, tag = 'smem constant byte address 0x4 - core index']
  #allocation1 [shape = 'u32[144,128]{1,0:T(1,128)}', space=vmem, size = 0x12000, scoped, tag = 'internal scratch']
  %s0 = inlined_call_operand.vmem [shape: f32[2,2,8], index: 0, kind: input, shape index: {}]
  %s1 = inlined_call_operand.vmem [shape: f32[2,256,8], index: 1, kind: input, shape index: {}]
  %s2 = inlined_call_operand.vmem [shape: f32[2,256,8], index: 2, kind: output, shape index: {}]
  %s3 = sld [smem:[#allocation0]]
  $region41: #{conv_layer_forward.3} parent=0
    _
  %s5 = ssub.s32 1, %s3
  %s6 = scalar_select 0, %s5, %s3
  loop: start=0, step=1, limit=4
  $region2: #{conv_layer_forward.3} parent=0 // loop_pre_header
    _
  $region3: #{conv_layer_forward.3} parent=0 // loop_header
    %s8 = sphi 0, %s12
    %p9 = scmp.ge.s32.totalorder %s8, 4
    %s15 = sphi 0, %s27
    %s16 = sphi 0, %s23
    %s17 = sphi 0, %s15
    %s18 = sphi 0, %s16
    %s19 = sphi 0, %s17
    %s20 = sphi 0, %s18
    %s30 = sphi 0, %s32
    %s33 = sphi 0, %s30
    %s34 = sphi 0, %s33
    %s50 = sphi 0, %s34
    %s58 = sphi 0, %s60
    %s61 = sphi 0, %s58
    %s62 = sphi 0, %s61
    %s78 = sphi 0, %s62
    %s86 = sphi 0, %s88
    %s89 = sphi 0, %s86
    %s90 = sphi 0, %s89
    %s106 = sphi 0, %s90
  $region4: #{conv_layer_forward.3} parent=0 // loop_header_branch
    %11 = sbr.rel (%p9) target = $region8
  $region5: #{conv_layer_forward.3} parent=0 // loop_body
    %s13 = ssub.s32 %s8, 1
    %s14 = ssub.s32 %s8, 2
    %s21 = sadd.s32 1, %s16
    %p22 = scmp.ge.s32.totalorder %s21, 1
    %s23 = scalar_select %p22, 0, %s21
    %s24 = sadd.s32 1, %s15
    %s25 = scalar_select %p22, %s24, %s15
    %p26 = scmp.ge.s32.totalorder %s25, 2
    %s27 = scalar_select %p26, 0, %s25
    %s28 = ssub.s32 %s15, %s27
    %p29 = scmp.eq.s32.totalorder %s28, 0
    %s31 = sadd.s32 %s30, 1
    %s32 = scalar_select %p29, %s30, %s31
    %p35 = pneg %p29
    %p36 = scmp.eq.s32.totalorder %s8, 1
    %p37 = por %p35, %p36
    %p38 = scmp.ne.s32.totalorder %s30, %s33
    %p39 = scmp.eq.s32.totalorder %s8, 0
    %p40 = por %p38, %p39
    %p41 = scmp.ne.s32.totalorder %s30, %s33
    %p42 = scmp.eq.s32.totalorder %s13, 1
    %p43 = por %p41, %p42
    %p44 = scmp.ne.s32.totalorder %s33, %s34
    %p45 = scmp.eq.s32.totalorder %s13, 0
    %p46 = por %p44, %p45
    %p47 = scmp.ne.s32.totalorder %s33, %s34
    %p48 = scmp.eq.s32.totalorder %s14, 1
    %p49 = por %p47, %p48
    %p51 = scmp.ne.s32.totalorder %s34, %s50
    %p52 = scmp.eq.s32.totalorder %s14, 0
    %p53 = por %p51, %p52
    %s54 = ssub.s32 %s15, %s27
    %s55 = ssub.s32 %s16, %s23
    %s56 = sor.u32 %s54, %s55
    %p57 = scmp.eq.s32.totalorder %s56, 0
    %s59 = sadd.s32 %s58, 1
    %s60 = scalar_select %p57, %s58, %s59
    %p63 = pneg %p57
    %p64 = scmp.eq.s32.totalorder %s8, 1
    %p65 = por %p63, %p64
    %p66 = scmp.ne.s32.totalorder %s58, %s61
    %p67 = scmp.eq.s32.totalorder %s8, 0
    %p68 = por %p66, %p67
    %p69 = scmp.ne.s32.totalorder %s58, %s61
    %p70 = scmp.eq.s32.totalorder %s13, 1
    %p71 = por %p69, %p70
    %p72 = scmp.ne.s32.totalorder %s61, %s62
    %p73 = scmp.eq.s32.totalorder %s13, 0
    %p74 = por %p72, %p73
    %p75 = scmp.ne.s32.totalorder %s61, %s62
    %p76 = scmp.eq.s32.totalorder %s14, 1
    %p77 = por %p75, %p76
    %p79 = scmp.ne.s32.totalorder %s62, %s78
    %p80 = scmp.eq.s32.totalorder %s14, 0
    %p81 = por %p79, %p80
    %s82 = ssub.s32 %s15, %s27
    %s83 = ssub.s32 %s16, %s23
    %s84 = sor.u32 %s82, %s83
    %p85 = scmp.eq.s32.totalorder %s84, 0
    %s87 = sadd.s32 %s86, 1
    %s88 = scalar_select %p85, %s86, %s87
    %p91 = pneg %p85
    %p92 = scmp.eq.s32.totalorder %s8, 1
    %p93 = por %p91, %p92
    %p94 = scmp.ne.s32.totalorder %s86, %s89
    %p95 = scmp.eq.s32.totalorder %s8, 0
    %p96 = por %p94, %p95
    %p97 = scmp.ne.s32.totalorder %s86, %s89
    %p98 = scmp.eq.s32.totalorder %s13, 1
    %p99 = por %p97, %p98
    %p100 = scmp.ne.s32.totalorder %s89, %s90
    %p101 = scmp.eq.s32.totalorder %s13, 0
    %p102 = por %p100, %p101
    %p103 = scmp.ne.s32.totalorder %s89, %s90
    %p104 = scmp.eq.s32.totalorder %s14, 1
    %p105 = por %p103, %p104
    %p107 = scmp.ne.s32.totalorder %s90, %s106
    %p108 = scmp.eq.s32.totalorder %s14, 0
    %p109 = por %p107, %p108
    %p110 = scmp.le.s32.totalorder 1, %s8
    %p111 = scmp.lt.s32.totalorder %s8, 3
    %p112 = pnand %p110, %p111
    %p113 = pneg %p112
    // Predicated region
    $region9: #{conv_layer_forward.3} parent=5 // pred_check
      _
    $region10: #{conv_layer_forward.3} parent=5 // pred_check_branch
      %115 = sbr.rel (%p112) target = $region12
    $region11: #{conv_layer_forward.3} parent=5 // pred_region
      %s116 = ssub.s32 %s8, 1
    $region12: #{conv_layer_forward.3} parent=5 // pred_fallthru
      _
    %p117 = scmp.lt.s32.totalorder %s8, 2
    // Predicated region
    $region13: #{conv_layer_forward.3} parent=5 // pred_check
      %p118 = pneg %p117
    $region14: #{conv_layer_forward.3} parent=5 // pred_check_branch
      %120 = sbr.rel (%p118) target = $region16
    $region15: #{conv_layer_forward.3} parent=5 // pred_region
      // Predicated region
      $region17: #{conv_layer_forward.3} parent=15 // pred_check
        %p121 = pneg %p40
      $region18: #{conv_layer_forward.3} parent=15 // pred_check_branch
        %123 = sbr.rel (%p121) target = $region20
      $region19: #{conv_layer_forward.3} parent=15 // pred_region
        %p124 = scmp.lt.s32.totalorder %s15, 1
        %s125 = scalar_select %p124, %s15, 1
        %s126 = smul.addr %s125, 2
        %s127 = scalar_lea.vmem %s0, %s126
      $region20: #{conv_layer_forward.3} parent=15 // pred_fallthru
        _
      // Predicated region
      $region21: #{conv_layer_forward.3} parent=15 // pred_check
        %p128 = pneg %p68
      $region22: #{conv_layer_forward.3} parent=15 // pred_check_branch
        %130 = sbr.rel (%p128) target = $region24
      $region23: #{conv_layer_forward.3} parent=15 // pred_region
        %s131 = smul.u32 32, %s16
        %p132 = scmp.lt.s32.totalorder %s15, 1
        %s133 = scalar_select %p132, %s15, 1
        %p134 = scmp.lt.s32.totalorder %s131, 31
        %s135 = scalar_select %p134, %s131, 31
        %s136 = smul.addr %s133, 32
        %s137 = sadd.s32 %s135, %s136
        %s138 = smul.addr %s137, 8
        %s139 = scalar_lea.vmem %s1, %s138
        %s140 = smul.u32 32, %s16
      $region24: #{conv_layer_forward.3} parent=15 // pred_fallthru
        _
    $region16: #{conv_layer_forward.3} parent=5 // pred_fallthru
      _
    %p141 = scmp.le.s32.totalorder 1, %s8
    %p142 = scmp.lt.s32.totalorder %s8, 3
    %p143 = pnand %p141, %p142
    %p144 = pneg %p143
    // Predicated region
    $region25: #{conv_layer_forward.3} parent=5 // pred_check
      _
    $region26: #{conv_layer_forward.3} parent=5 // pred_check_branch
      %146 = sbr.rel (%p143) target = $region28
    $region27: #{conv_layer_forward.3} parent=5 // pred_region
      %s147 = ssub.s32 %s8, 1
      %p148 = scmp.lt.s32.totalorder %s17, 1
      %s149 = scalar_select %p148, %s17, 1
      %s150 = smul.addr %s149, 2
      %s151 = scalar_lea.vmem %s0, %s150
      %p152 = pneg %p46
      %p153 = pneg %p43
      %s154 = smul.u32 32, %s18
      %p155 = scmp.lt.s32.totalorder %s17, 1
      %s156 = scalar_select %p155, %s17, 1
      %p157 = scmp.lt.s32.totalorder %s154, 31
      %s158 = scalar_select %p157, %s154, 31
      %s159 = smul.addr %s156, 32
      %s160 = sadd.s32 %s158, %s159
      %s161 = smul.addr %s160, 8
      %s162 = scalar_lea.vmem %s1, %s161
      %p163 = pneg %p74
      %p164 = pneg %p71
      %p165 = pneg %p102
      %p166 = pneg %p99
      %s167 = smul.u32 32, %s18
      %p168 = scmp.lt.s32.totalorder %s17, 1
      %s169 = scalar_select %p168, %s17, 1
      %p170 = scmp.lt.s32.totalorder %s167, 31
      %s171 = scalar_select %p170, %s167, 31
      %s172 = smul.addr %s169, 32
      %s173 = sadd.s32 %s171, %s172
      %s174 = smul.addr %s173, 8
      %s175 = scalar_lea.vmem %s2, %s174
      %p176 = scmp.lt.s32.totalorder %s17, 1
      %s177 = scalar_select %p176, %s17, 1
      %s178 = smul.addr %s177, 2
      %s179 = scalar_lea.vmem %s0, %s178
      %s180 = smul.u32 32, %s18
      %p181 = scmp.lt.s32.totalorder %s17, 1
      %s182 = scalar_select %p181, %s17, 1
      %p183 = scmp.lt.s32.totalorder %s180, 31
      %s184 = scalar_select %p183, %s180, 31
      %s185 = smul.addr %s182, 32
      %s186 = sadd.s32 %s184, %s185
      %s187 = smul.addr %s186, 8
      %s188 = scalar_lea.vmem %s1, %s187
      %s189 = smul.u32 32, %s18
      %s190 = smul.u32 32, %s18
      %p191 = scmp.lt.s32.totalorder %s17, 1
      %s192 = scalar_select %p191, %s17, 1
      %p193 = scmp.lt.s32.totalorder %s190, 31
      %s194 = scalar_select %p193, %s190, 31
      %s195 = smul.addr %s192, 32
      %s196 = sadd.s32 %s194, %s195
      %s197 = smul.addr %s196, 8
      %s198 = scalar_lea.vmem %s2, %s197
      %s199 = smul.u32 32, %s18
      %v200 = vld [vmem:[%s179] sm:$0x1]
      %v201 = vld [vmem:[%s179 + $0x1] sm:$0x1]
      %v202 = vmul.f32 %v200, 0.00390625
      %v203 = vmul.f32 %v201, 0.00390625
      %v204 = vmul.f32 %v202, %v202
      %v205 = vsub.f32 %v203, %v204
      %v206 = vmax.f32 %v205, 0.0
      %v207 = vadd.f32 %v206, 1e-05
      %v208 = vrsqrt.pop %v207
      %v209 = vld [vmem:[%s188] sm:$0xff]
      %v210 = vld [vmem:[%s188 + $0x8] sm:$0xff]
      %v211 = vld [vmem:[%s188 + $0x10] sm:$0xff]
      %v212 = vld [vmem:[%s188 + $0x18] sm:$0xff]
      %v213 = vld [vmem:[%s188 + $0x20] sm:$0xff]
      %v214 = vld [vmem:[%s188 + $0x28] sm:$0xff]
      %v215 = vld [vmem:[%s188 + $0x30] sm:$0xff]
      %v216 = vld [vmem:[%s188 + $0x38] sm:$0xff]
      %v217 = vld [vmem:[%s188 + $0x40] sm:$0xff]
      %v218 = vld [vmem:[%s188 + $0x48] sm:$0xff]
      %v219 = vld [vmem:[%s188 + $0x50] sm:$0xff]
      %v220 = vld [vmem:[%s188 + $0x58] sm:$0xff]
      %v221 = vld [vmem:[%s188 + $0x60] sm:$0xff]
      %v222 = vld [vmem:[%s188 + $0x68] sm:$0xff]
      %v223 = vld [vmem:[%s188 + $0x70] sm:$0xff]
      %v224 = vld [vmem:[%s188 + $0x78] sm:$0xff]
      %v225 = vld [vmem:[%s188 + $0x80] sm:$0xff]
      %v226 = vld [vmem:[%s188 + $0x88] sm:$0xff]
      %v227 = vld [vmem:[%s188 + $0x90] sm:$0xff]
      %v228 = vld [vmem:[%s188 + $0x98] sm:$0xff]
      %v229 = vld [vmem:[%s188 + $0xa0] sm:$0xff]
      %v230 = vld [vmem:[%s188 + $0xa8] sm:$0xff]
      %v231 = vld [vmem:[%s188 + $0xb0] sm:$0xff]
      %v232 = vld [vmem:[%s188 + $0xb8] sm:$0xff]
      %v233 = vld [vmem:[%s188 + $0xc0] sm:$0xff]
      %v234 = vld [vmem:[%s188 + $0xc8] sm:$0xff]
      %v235 = vld [vmem:[%s188 + $0xd0] sm:$0xff]
      %v236 = vld [vmem:[%s188 + $0xd8] sm:$0xff]
      %v237 = vld [vmem:[%s188 + $0xe0] sm:$0xff]
      %v238 = vld [vmem:[%s188 + $0xe8] sm:$0xff]
      %v239 = vld [vmem:[%s188 + $0xf0] sm:$0xff]
      %v240 = vld [vmem:[%s188 + $0xf8] sm:$0xff]
      %v241 = vlaneseq
      %v242 = vshrl.u32 %v241, 7
      %v243 = vsub.s32 0, %v242
      %v244 = vrot.slane %v202, %v243
      %v245 = vsub.f32 %v209, %v244
      %v246 = vsub.f32 %v210, %v244
      %v247 = vsub.f32 %v211, %v244
      %v248 = vsub.f32 %v212, %v244
      %v249 = vsub.f32 %v213, %v244
      %v250 = vsub.f32 %v214, %v244
      %v251 = vsub.f32 %v215, %v244
      %v252 = vsub.f32 %v216, %v244
      %v253 = vsub.f32 %v217, %v244
      %v254 = vsub.f32 %v218, %v244
      %v255 = vsub.f32 %v219, %v244
      %v256 = vsub.f32 %v220, %v244
      %v257 = vsub.f32 %v221, %v244
      %v258 = vsub.f32 %v222, %v244
      %v259 = vsub.f32 %v223, %v244
      %v260 = vsub.f32 %v224, %v244
      %v261 = vsub.f32 %v225, %v244
      %v262 = vsub.f32 %v226, %v244
      %v263 = vsub.f32 %v227, %v244
      %v264 = vsub.f32 %v228, %v244
      %v265 = vsub.f32 %v229, %v244
      %v266 = vsub.f32 %v230, %v244
      %v267 = vsub.f32 %v231, %v244
      %v268 = vsub.f32 %v232, %v244
      %v269 = vsub.f32 %v233, %v244
      %v270 = vsub.f32 %v234, %v244
      %v271 = vsub.f32 %v235, %v244
      %v272 = vsub.f32 %v236, %v244
      %v273 = vsub.f32 %v237, %v244
      %v274 = vsub.f32 %v238, %v244
      %v275 = vsub.f32 %v239, %v244
      %v276 = vsub.f32 %v240, %v244
      %v277 = vlaneseq
      %v278 = vshrl.u32 %v277, 7
      %v279 = vsub.s32 0, %v278
      %v280 = vrot.slane %v208, %v279
      %v281 = vmul.f32 %v245, %v280
      %v282 = vmul.f32 %v246, %v280
      %v283 = vmul.f32 %v247, %v280
      %v284 = vmul.f32 %v248, %v280
      %v285 = vmul.f32 %v249, %v280
      %v286 = vmul.f32 %v250, %v280
      %v287 = vmul.f32 %v251, %v280
      %v288 = vmul.f32 %v252, %v280
      %v289 = vmul.f32 %v253, %v280
      %v290 = vmul.f32 %v254, %v280
      %v291 = vmul.f32 %v255, %v280
      %v292 = vmul.f32 %v256, %v280
      %v293 = vmul.f32 %v257, %v280
      %v294 = vmul.f32 %v258, %v280
      %v295 = vmul.f32 %v259, %v280
      %v296 = vmul.f32 %v260, %v280
      %v297 = vmul.f32 %v261, %v280
      %v298 = vmul.f32 %v262, %v280
      %v299 = vmul.f32 %v263, %v280
      %v300 = vmul.f32 %v264, %v280
      %v301 = vmul.f32 %v265, %v280
      %v302 = vmul.f32 %v266, %v280
      %v303 = vmul.f32 %v267, %v280
      %v304 = vmul.f32 %v268, %v280
      %v305 = vmul.f32 %v269, %v280
      %v306 = vmul.f32 %v270, %v280
      %v307 = vmul.f32 %v271, %v280
      %v308 = vmul.f32 %v272, %v280
      %v309 = vmul.f32 %v273, %v280
      %v310 = vmul.f32 %v274, %v280
      %v311 = vmul.f32 %v275, %v280
      %v312 = vmul.f32 %v276, %v280
      %vm313 = vcmask 64512
      %314 = vst.msk [vmem:[%s198] sm:$0xff] %vm313, %v281
      %315 = vst.msk [vmem:[%s198 + $0x8] sm:$0xff] %vm313, %v282
      %316 = vst.msk [vmem:[%s198 + $0x10] sm:$0xff] %vm313, %v283
      %317 = vst.msk [vmem:[%s198 + $0x18] sm:$0xff] %vm313, %v284
      %318 = vst.msk [vmem:[%s198 + $0x20] sm:$0xff] %vm313, %v285
      %319 = vst.msk [vmem:[%s198 + $0x28] sm:$0xff] %vm313, %v286
      %320 = vst.msk [vmem:[%s198 + $0x30] sm:$0xff] %vm313, %v287
      %321 = vst.msk [vmem:[%s198 + $0x38] sm:$0xff] %vm313, %v288
      %322 = vst.msk [vmem:[%s198 + $0x40] sm:$0xff] %vm313, %v289
      %323 = vst.msk [vmem:[%s198 + $0x48] sm:$0xff] %vm313, %v290
      %324 = vst.msk [vmem:[%s198 + $0x50] sm:$0xff] %vm313, %v291
      %325 = vst.msk [vmem:[%s198 + $0x58] sm:$0xff] %vm313, %v292
      %326 = vst.msk [vmem:[%s198 + $0x60] sm:$0xff] %vm313, %v293
      %327 = vst.msk [vmem:[%s198 + $0x68] sm:$0xff] %vm313, %v294
      %328 = vst.msk [vmem:[%s198 + $0x70] sm:$0xff] %vm313, %v295
      %329 = vst.msk [vmem:[%s198 + $0x78] sm:$0xff] %vm313, %v296
      %330 = vst.msk [vmem:[%s198 + $0x80] sm:$0xff] %vm313, %v297
      %331 = vst.msk [vmem:[%s198 + $0x88] sm:$0xff] %vm313, %v298
      %332 = vst.msk [vmem:[%s198 + $0x90] sm:$0xff] %vm313, %v299
      %333 = vst.msk [vmem:[%s198 + $0x98] sm:$0xff] %vm313, %v300
      %334 = vst.msk [vmem:[%s198 + $0xa0] sm:$0xff] %vm313, %v301
      %335 = vst.msk [vmem:[%s198 + $0xa8] sm:$0xff] %vm313, %v302
      %336 = vst.msk [vmem:[%s198 + $0xb0] sm:$0xff] %vm313, %v303
      %337 = vst.msk [vmem:[%s198 + $0xb8] sm:$0xff] %vm313, %v304
      %338 = vst.msk [vmem:[%s198 + $0xc0] sm:$0xff] %vm313, %v305
      %339 = vst.msk [vmem:[%s198 + $0xc8] sm:$0xff] %vm313, %v306
      %340 = vst.msk [vmem:[%s198 + $0xd0] sm:$0xff] %vm313, %v307
      %341 = vst.msk [vmem:[%s198 + $0xd8] sm:$0xff] %vm313, %v308
      %342 = vst.msk [vmem:[%s198 + $0xe0] sm:$0xff] %vm313, %v309
      %343 = vst.msk [vmem:[%s198 + $0xe8] sm:$0xff] %vm313, %v310
      %344 = vst.msk [vmem:[%s198 + $0xf0] sm:$0xff] %vm313, %v311
      %345 = vst.msk [vmem:[%s198 + $0xf8] sm:$0xff] %vm313, %v312
      %s346 = smul.u32 32, %s18
      %p347 = scmp.lt.s32.totalorder %s17, 1
      %s348 = scalar_select %p347, %s17, 1
      %p349 = scmp.lt.s32.totalorder %s346, 31
      %s350 = scalar_select %p349, %s346, 31
      %s351 = smul.addr %s348, 32
      %s352 = sadd.s32 %s350, %s351
      %s353 = smul.addr %s352, 8
      %s354 = scalar_lea.vmem %s2, %s353
      // Predicated region
      $region29: #{conv_layer_forward.3} parent=27 // pred_check
        %p355 = pneg %p99
      $region30: #{conv_layer_forward.3} parent=27 // pred_check_branch
        %357 = sbr.rel (%p355) target = $region32
      $region31: #{conv_layer_forward.3} parent=27 // pred_region
        %s358 = smul.u32 32, %s18
      $region32: #{conv_layer_forward.3} parent=27 // pred_fallthru
        _
    $region28: #{conv_layer_forward.3} parent=5 // pred_fallthru
      _
    %p359 = scmp.le.s32.totalorder 2, %s8
    // Predicated region
    $region33: #{conv_layer_forward.3} parent=5 // pred_check
      %p360 = pneg %p359
    $region34: #{conv_layer_forward.3} parent=5 // pred_check_branch
      %362 = sbr.rel (%p360) target = $region36
    $region35: #{conv_layer_forward.3} parent=5 // pred_region
      %s363 = ssub.s32 %s8, 2
      // Predicated region
      $region37: #{conv_layer_forward.3} parent=35 // pred_check
        %p364 = pneg %p105
      $region38: #{conv_layer_forward.3} parent=35 // pred_check_branch
        %366 = sbr.rel (%p364) target = $region40
      $region39: #{conv_layer_forward.3} parent=35 // pred_region
        %s367 = smul.u32 32, %s20
        %p368 = scmp.lt.s32.totalorder %s19, 1
        %s369 = scalar_select %p368, %s19, 1
        %p370 = scmp.lt.s32.totalorder %s367, 31
        %s371 = scalar_select %p370, %s367, 31
        %s372 = smul.addr %s369, 32
        %s373 = sadd.s32 %s371, %s372
        %s374 = smul.addr %s373, 8
        %s375 = scalar_lea.vmem %s2, %s374
      $region40: #{conv_layer_forward.3} parent=35 // pred_fallthru
        _
    $region36: #{conv_layer_forward.3} parent=5 // pred_fallthru
      _
  $region6: #{conv_layer_forward.3} parent=0 // loop_footer
    %s12 = sadd.s32 1, %s8
  $region7: #{conv_layer_forward.3} parent=0 // loop_footer_branch
    %7 = sbr.rel target = $region3
  $region8: #{conv_layer_forward.3} parent=0 // loop_exit
    _

// kernel: conv_layer_forward.2
$region0: #{conv_layer_forward.2}
  #allocation0 [shape = 'u32[]', space=smem, size = 0x4, offset = 0x4, fixed_abs, tag = 'smem constant byte address 0x4 - core index']
  #allocation1 [shape = 'u32[144,128]{1,0:T(1,128)}', space=vmem, size = 0x12000, scoped, tag = 'internal scratch']
  %s0 = inlined_call_operand.vmem [shape: f32[9,4,8], index: 0, kind: input, shape index: {}]
  %s1 = inlined_call_operand.vmem [shape: f32[1,8], index: 1, kind: input, shape index: {}]
  %s2 = inlined_call_operand.vmem [shape: f32[2,24,18,4], index: 2, kind: input, shape index: {}, may-alias: {2,3}]
  %s3 = inlined_call_operand.vmem [shape: f32[2,24,18,4], index: 3, kind: input, shape index: {}, may-alias: {2,3}]
  %s4 = inlined_call_operand.vmem [shape: f32[2,256,8], index: 4, kind: output, shape index: {0}]
  %s5 = inlined_call_operand.vmem [shape: f32[2,2,8], index: 5, kind: output, shape index: {1}]
  %6 = xla_tuple %s4, %s5
  %s7 = sld [smem:[#allocation0]]
  $region65: #{conv_layer_forward.2} parent=0
    _
  %s9 = ssub.s32 1, %s7
  %s10 = scalar_select 0, %s9, %s7
  loop: start=0, step=1, limit=4
  $region2: #{conv_layer_forward.2} parent=0 // loop_pre_header
    _
  $region3: #{conv_layer_forward.2} parent=0 // loop_header
    %s12 = sphi 0, %s16
    %p13 = scmp.ge.s32.totalorder %s12, 4
    %s19 = sphi 0, %s31
    %s20 = sphi 0, %s27
    %s21 = sphi 0, %s19
    %s22 = sphi 0, %s20
    %s23 = sphi 0, %s21
    %s24 = sphi 0, %s22
    %s32 = sphi 0, %s32
    %s34 = sphi 0, %s32
    %s35 = sphi 0, %s34
    %s49 = sphi 0, %s35
    %s53 = sphi 0, %s53
    %s55 = sphi 0, %s53
    %s56 = sphi 0, %s55
    %s70 = sphi 0, %s56
    %s78 = sphi 0, %s80
    %s81 = sphi 0, %s78
    %s82 = sphi 0, %s81
    %s98 = sphi 0, %s82
    %s110 = sphi 0, %s112
    %s113 = sphi 0, %s110
    %s114 = sphi 0, %s113
    %s130 = sphi 0, %s114
    %s138 = sphi 0, %s140
    %s141 = sphi 0, %s138
    %s142 = sphi 0, %s141
    %s158 = sphi 0, %s142
    %s164 = sphi 0, %s166
    %s167 = sphi 0, %s164
    %s168 = sphi 0, %s167
    %s184 = sphi 0, %s168
  $region4: #{conv_layer_forward.2} parent=0 // loop_header_branch
    %15 = sbr.rel (%p13) target = $region8
  $region5: #{conv_layer_forward.2} parent=0 // loop_body
    %s17 = ssub.s32 %s12, 1
    %s18 = ssub.s32 %s12, 2
    %s25 = sadd.s32 1, %s20
    %p26 = scmp.ge.s32.totalorder %s25, 1
    %s27 = scalar_select %p26, 0, %s25
    %s28 = sadd.s32 1, %s19
    %s29 = scalar_select %p26, %s28, %s19
    %p30 = scmp.ge.s32.totalorder %s29, 2
    %s31 = scalar_select %p30, 0, %s29
    %s33 = sadd.s32 %s32, 1
    %p36 = scmp.eq.s32.totalorder %s12, 1
    %p37 = scmp.ne.s32.totalorder %s32, %s34
    %p38 = scmp.eq.s32.totalorder %s12, 0
    %p39 = por %p37, %p38
    %p40 = scmp.ne.s32.totalorder %s32, %s34
    %p41 = scmp.eq.s32.totalorder %s17, 1
    %p42 = por %p40, %p41
    %p43 = scmp.ne.s32.totalorder %s34, %s35
    %p44 = scmp.eq.s32.totalorder %s17, 0
    %p45 = por %p43, %p44
    %p46 = scmp.ne.s32.totalorder %s34, %s35
    %p47 = scmp.eq.s32.totalorder %s18, 1
    %p48 = por %p46, %p47
    %p50 = scmp.ne.s32.totalorder %s35, %s49
    %p51 = scmp.eq.s32.totalorder %s18, 0
    %p52 = por %p50, %p51
    %s54 = sadd.s32 %s53, 1
    %p57 = scmp.eq.s32.totalorder %s12, 1
    %p58 = scmp.ne.s32.totalorder %s53, %s55
    %p59 = scmp.eq.s32.totalorder %s12, 0
    %p60 = por %p58, %p59
    %p61 = scmp.ne.s32.totalorder %s53, %s55
    %p62 = scmp.eq.s32.totalorder %s17, 1
    %p63 = por %p61, %p62
    %p64 = scmp.ne.s32.totalorder %s55, %s56
    %p65 = scmp.eq.s32.totalorder %s17, 0
    %p66 = por %p64, %p65
    %p67 = scmp.ne.s32.totalorder %s55, %s56
    %p68 = scmp.eq.s32.totalorder %s18, 1
    %p69 = por %p67, %p68
    %p71 = scmp.ne.s32.totalorder %s56, %s70
    %p72 = scmp.eq.s32.totalorder %s18, 0
    %p73 = por %p71, %p72
    %s74 = ssub.s32 %s19, %s31
    %s75 = ssub.s32 %s20, %s27
    %s76 = sor.u32 %s74, %s75
    %p77 = scmp.eq.s32.totalorder %s76, 0
    %s79 = sadd.s32 %s78, 1
    %s80 = scalar_select %p77, %s78, %s79
    %p83 = pneg %p77
    %p84 = scmp.eq.s32.totalorder %s12, 1
    %p85 = por %p83, %p84
    %p86 = scmp.ne.s32.totalorder %s78, %s81
    %p87 = scmp.eq.s32.totalorder %s12, 0
    %p88 = por %p86, %p87
    %p89 = scmp.ne.s32.totalorder %s78, %s81
    %p90 = scmp.eq.s32.totalorder %s17, 1
    %p91 = por %p89, %p90
    %p92 = scmp.ne.s32.totalorder %s81, %s82
    %p93 = scmp.eq.s32.totalorder %s17, 0
    %p94 = por %p92, %p93
    %p95 = scmp.ne.s32.totalorder %s81, %s82
    %p96 = scmp.eq.s32.totalorder %s18, 1
    %p97 = por %p95, %p96
    %p99 = scmp.ne.s32.totalorder %s82, %s98
    %p100 = scmp.eq.s32.totalorder %s18, 0
    %p101 = por %p99, %p100
    %s102 = sadd.s32 %s20, 1
    %s103 = smul.u32 %s102, 2
    %s104 = sadd.s32 %s27, 1
    %s105 = smul.u32 %s104, 2
    %s106 = ssub.s32 %s19, %s31
    %s107 = ssub.s32 %s103, %s105
    %s108 = sor.u32 %s106, %s107
    %p109 = scmp.eq.s32.totalorder %s108, 0
    %s111 = sadd.s32 %s110, 1
    %s112 = scalar_select %p109, %s110, %s111
    %p115 = pneg %p109
    %p116 = scmp.eq.s32.totalorder %s12, 1
    %p117 = por %p115, %p116
    %p118 = scmp.ne.s32.totalorder %s110, %s113
    %p119 = scmp.eq.s32.totalorder %s12, 0
    %p120 = por %p118, %p119
    %p121 = scmp.ne.s32.totalorder %s110, %s113
    %p122 = scmp.eq.s32.totalorder %s17, 1
    %p123 = por %p121, %p122
    %p124 = scmp.ne.s32.totalorder %s113, %s114
    %p125 = scmp.eq.s32.totalorder %s17, 0
    %p126 = por %p124, %p125
    %p127 = scmp.ne.s32.totalorder %s113, %s114
    %p128 = scmp.eq.s32.totalorder %s18, 1
    %p129 = por %p127, %p128
    %p131 = scmp.ne.s32.totalorder %s114, %s130
    %p132 = scmp.eq.s32.totalorder %s18, 0
    %p133 = por %p131, %p132
    %s134 = ssub.s32 %s19, %s31
    %s135 = ssub.s32 %s20, %s27
    %s136 = sor.u32 %s134, %s135
    %p137 = scmp.eq.s32.totalorder %s136, 0
    %s139 = sadd.s32 %s138, 1
    %s140 = scalar_select %p137, %s138, %s139
    %p143 = pneg %p137
    %p144 = scmp.eq.s32.totalorder %s12, 1
    %p145 = por %p143, %p144
    %p146 = scmp.ne.s32.totalorder %s138, %s141
    %p147 = scmp.eq.s32.totalorder %s12, 0
    %p148 = por %p146, %p147
    %p149 = scmp.ne.s32.totalorder %s138, %s141
    %p150 = scmp.eq.s32.totalorder %s17, 1
    %p151 = por %p149, %p150
    %p152 = scmp.ne.s32.totalorder %s141, %s142
    %p153 = scmp.eq.s32.totalorder %s17, 0
    %p154 = por %p152, %p153
    %p155 = scmp.ne.s32.totalorder %s141, %s142
    %p156 = scmp.eq.s32.totalorder %s18, 1
    %p157 = por %p155, %p156
    %p159 = scmp.ne.s32.totalorder %s142, %s158
    %p160 = scmp.eq.s32.totalorder %s18, 0
    %p161 = por %p159, %p160
    %s162 = ssub.s32 %s19, %s31
    %p163 = scmp.eq.s32.totalorder %s162, 0
    %s165 = sadd.s32 %s164, 1
    %s166 = scalar_select %p163, %s164, %s165
    %p169 = pneg %p163
    %p170 = scmp.eq.s32.totalorder %s12, 1
    %p171 = por %p169, %p170
    %p172 = scmp.ne.s32.totalorder %s164, %s167
    %p173 = scmp.eq.s32.totalorder %s12, 0
    %p174 = por %p172, %p173
    %p175 = scmp.ne.s32.totalorder %s164, %s167
    %p176 = scmp.eq.s32.totalorder %s17, 1
    %p177 = por %p175, %p176
    %p178 = scmp.ne.s32.totalorder %s167, %s168
    %p179 = scmp.eq.s32.totalorder %s17, 0
    %p180 = por %p178, %p179
    %p181 = scmp.ne.s32.totalorder %s167, %s168
    %p182 = scmp.eq.s32.totalorder %s18, 1
    %p183 = por %p181, %p182
    %p185 = scmp.ne.s32.totalorder %s168, %s184
    %p186 = scmp.eq.s32.totalorder %s18, 0
    %p187 = por %p185, %p186
    %p188 = scmp.le.s32.totalorder 1, %s12
    %p189 = scmp.lt.s32.totalorder %s12, 3
    %p190 = pnand %p188, %p189
    %p191 = pneg %p190
    // Predicated region
    $region9: #{conv_layer_forward.2} parent=5 // pred_check
      _
    $region10: #{conv_layer_forward.2} parent=5 // pred_check_branch
      %193 = sbr.rel (%p190) target = $region12
    $region11: #{conv_layer_forward.2} parent=5 // pred_region
      %s194 = ssub.s32 %s12, 1
      // Predicated region
      $region13: #{conv_layer_forward.2} parent=11 // pred_check
        %p195 = pneg %p45
      $region14: #{conv_layer_forward.2} parent=11 // pred_check_branch
        %197 = sbr.rel (%p195) target = $region16
      $region15: #{conv_layer_forward.2} parent=11 // pred_region
        _
      $region16: #{conv_layer_forward.2} parent=11 // pred_fallthru
        _
      // Predicated region
      $region17: #{conv_layer_forward.2} parent=11 // pred_check
        %p198 = pneg %p66
      $region18: #{conv_layer_forward.2} parent=11 // pred_check_branch
        %200 = sbr.rel (%p198) target = $region20
      $region19: #{conv_layer_forward.2} parent=11 // pred_region
        _
      $region20: #{conv_layer_forward.2} parent=11 // pred_fallthru
        _
    $region12: #{conv_layer_forward.2} parent=5 // pred_fallthru
      _
    %p201 = scmp.lt.s32.totalorder %s12, 2
    // Predicated region
    $region21: #{conv_layer_forward.2} parent=5 // pred_check
      %p202 = pneg %p201
    $region22: #{conv_layer_forward.2} parent=5 // pred_check_branch
      %204 = sbr.rel (%p202) target = $region24
    $region23: #{conv_layer_forward.2} parent=5 // pred_region
      // Predicated region
      $region25: #{conv_layer_forward.2} parent=23 // pred_check
        %p205 = pneg %p88
      $region26: #{conv_layer_forward.2} parent=23 // pred_check_branch
        %207 = sbr.rel (%p205) target = $region28
      $region27: #{conv_layer_forward.2} parent=23 // pred_region
        %s208 = smul.u32 16, %s20
        %s209 = ssub.s32 24, %s208
        %p210 = scmp.lt.s32.totalorder %s209, 16
        %s211 = scalar_select %p210, %s209, 16
        %s212 = smul.u32 128, %s211
        %s213 = smul.u32 %s212, 3
        %p214 = scmp.lt.s32.totalorder %s19, 1
        %s215 = scalar_select %p214, %s19, 1
        %p216 = scmp.lt.s32.totalorder %s208, 23
        %s217 = scalar_select %p216, %s208, 23
        %s218 = smul.addr %s217, 3
        %s219 = smul.addr %s215, 72
        %s220 = sadd.s32 %s218, %s219
        %s221 = smul.addr %s220, 8
        %s222 = scalar_lea.vmem %s2, %s221
        %s223 = smul.u32 16, %s20
        %s224 = ssub.s32 24, %s223
        %p225 = scmp.lt.s32.totalorder %s224, 16
        %s226 = scalar_select %p225, %s224, 16
        %s227 = smul.u32 128, %s226
        %s228 = smul.u32 %s227, 3
      $region28: #{conv_layer_forward.2} parent=23 // pred_fallthru
        _
      // Predicated region
      $region29: #{conv_layer_forward.2} parent=23 // pred_check
        %p229 = pneg %p120
      $region30: #{conv_layer_forward.2} parent=23 // pred_check_branch
        %231 = sbr.rel (%p229) target = $region32
      $region31: #{conv_layer_forward.2} parent=23 // pred_region
        %s232 = sadd.s32 %s20, 1
        %s233 = smul.u32 %s232, 2
        %s234 = smul.u32 8, %s233
        %p235 = scmp.lt.s32.totalorder %s19, 1
        %s236 = scalar_select %p235, %s19, 1
        %p237 = scmp.lt.s32.totalorder %s234, 23
        %s238 = scalar_select %p237, %s234, 23
        %s239 = smul.addr %s238, 3
        %s240 = smul.addr %s236, 72
        %s241 = sadd.s32 %s239, %s240
        %s242 = smul.addr %s241, 8
        %s243 = scalar_lea.vmem %s3, %s242
        %s244 = sadd.s32 %s20, 1
        %s245 = smul.u32 %s244, 2
        %s246 = smul.u32 8, %s245
      $region32: #{conv_layer_forward.2} parent=23 // pred_fallthru
        _
    $region24: #{conv_layer_forward.2} parent=5 // pred_fallthru
      _
    %p247 = scmp.le.s32.totalorder 1, %s12
    %p248 = scmp.lt.s32.totalorder %s12, 3
    %p249 = pnand %p247, %p248
    %p250 = pneg %p249
    // Predicated region
    $region33: #{conv_layer_forward.2} parent=5 // pred_check
      _
    $region34: #{conv_layer_forward.2} parent=5 // pred_check_branch
      %252 = sbr.rel (%p249) target = $region36
    $region35: #{conv_layer_forward.2} parent=5 // pred_region
      %s253 = ssub.s32 %s12, 1
      %p254 = pneg %p45
      %p255 = pneg %p42
      %p256 = pneg %p66
      %p257 = pneg %p63
      %s258 = smul.u32 16, %s22
      %s259 = ssub.s32 24, %s258
      %p260 = scmp.lt.s32.totalorder %s259, 16
      %s261 = scalar_select %p260, %s259, 16
      %s262 = smul.u32 128, %s261
      %s263 = smul.u32 %s262, 3
      %p264 = scmp.lt.s32.totalorder %s21, 1
      %s265 = scalar_select %p264, %s21, 1
      %p266 = scmp.lt.s32.totalorder %s258, 23
      %s267 = scalar_select %p266, %s258, 23
      %s268 = smul.addr %s267, 3
      %s269 = smul.addr %s265, 72
      %s270 = sadd.s32 %s268, %s269
      %s271 = smul.addr %s270, 8
      %s272 = scalar_lea.vmem %s2, %s271
      %p273 = pneg %p94
      %p274 = pneg %p91
      %s275 = sadd.s32 %s22, 1
      %s276 = smul.u32 %s275, 2
      %s277 = smul.u32 8, %s276
      %p278 = scmp.lt.s32.totalorder %s21, 1
      %s279 = scalar_select %p278, %s21, 1
      %p280 = scmp.lt.s32.totalorder %s277, 23
      %s281 = scalar_select %p280, %s277, 23
      %s282 = smul.addr %s281, 3
      %s283 = smul.addr %s279, 72
      %s284 = sadd.s32 %s282, %s283
      %s285 = smul.addr %s284, 8
      %s286 = scalar_lea.vmem %s3, %s285
      %p287 = pneg %p126
      %p288 = pneg %p123
      %p289 = pneg %p154
      %p290 = pneg %p151
      %s291 = smul.u32 32, %s22
      %p292 = scmp.lt.s32.totalorder %s21, 1
      %s293 = scalar_select %p292, %s21, 1
      %p294 = scmp.lt.s32.totalorder %s291, 31
      %s295 = scalar_select %p294, %s291, 31
      %s296 = smul.addr %s293, 32
      %s297 = sadd.s32 %s295, %s296
      %s298 = smul.addr %s297, 8
      %s299 = scalar_lea.vmem %s4, %s298
      %p300 = pneg %p180
      %p301 = pneg %p177
      %p302 = scmp.lt.s32.totalorder %s21, 1
      %s303 = scalar_select %p302, %s21, 1
      %s304 = smul.addr %s303, 2
      %s305 = scalar_lea.vmem %s5, %s304
      %s306 = smul.u32 16, %s22
      %s307 = ssub.s32 24, %s306
      %p308 = scmp.lt.s32.totalorder %s307, 16
      %s309 = scalar_select %p308, %s307, 16
      %s310 = smul.u32 128, %s309
      %s311 = smul.u32 %s310, 3
      %p312 = scmp.lt.s32.totalorder %s21, 1
      %s313 = scalar_select %p312, %s21, 1
      %p314 = scmp.lt.s32.totalorder %s306, 23
      %s315 = scalar_select %p314, %s306, 23
      %s316 = smul.addr %s315, 3
      %s317 = smul.addr %s313, 72
      %s318 = sadd.s32 %s316, %s317
      %s319 = smul.addr %s318, 8
      %s320 = scalar_lea.vmem %s2, %s319
      %s321 = smul.u32 16, %s22
      %s322 = ssub.s32 24, %s321
      %p323 = scmp.lt.s32.totalorder %s322, 16
      %s324 = scalar_select %p323, %s322, 16
      %s325 = smul.u32 128, %s324
      %s326 = smul.u32 %s325, 3
      %s327 = sadd.s32 %s22, 1
      %s328 = smul.u32 %s327, 2
      %s329 = smul.u32 8, %s328
      %p330 = scmp.lt.s32.totalorder %s21, 1
      %s331 = scalar_select %p330, %s21, 1
      %p332 = scmp.lt.s32.totalorder %s329, 23
      %s333 = scalar_select %p332, %s329, 23
      %s334 = smul.addr %s333, 3
      %s335 = smul.addr %s331, 72
      %s336 = sadd.s32 %s334, %s335
      %s337 = smul.addr %s336, 8
      %s338 = scalar_lea.vmem %s3, %s337
      %s339 = sadd.s32 %s22, 1
      %s340 = smul.u32 %s339, 2
      %s341 = smul.u32 8, %s340
      %s342 = smul.u32 32, %s22
      %p343 = scmp.lt.s32.totalorder %s21, 1
      %s344 = scalar_select %p343, %s21, 1
      %p345 = scmp.lt.s32.totalorder %s342, 31
      %s346 = scalar_select %p345, %s342, 31
      %s347 = smul.addr %s344, 32
      %s348 = sadd.s32 %s346, %s347
      %s349 = smul.addr %s348, 8
      %s350 = scalar_lea.vmem %s4, %s349
      %s351 = smul.u32 32, %s22
      %p352 = scmp.lt.s32.totalorder %s21, 1
      %s353 = scalar_select %p352, %s21, 1
      %s354 = smul.addr %s353, 2
      %s355 = scalar_lea.vmem %s5, %s354
      %v356 = vld [vmem:[%s320] sm:$0xff]
      %v357 = vld [vmem:[%s320 + $0x8] sm:$0xff]
      %v358 = vld [vmem:[%s320 + $0x10] sm:$0x3]
      %v359 = vld [vmem:[%s320 + $0x18] sm:$0xff]
      %v360 = vld [vmem:[%s320 + $0x20] sm:$0xff]
      %v361 = vld [vmem:[%s320 + $0x28] sm:$0x3]
      %v362 = vld [vmem:[%s320 + $0x30] sm:$0xff]
      %v363 = vld [vmem:[%s320 + $0x38] sm:$0xff]
      %v364 = vld [vmem:[%s320 + $0x40] sm:$0x3]
      %v365 = vld [vmem:[%s320 + $0x48] sm:$0xff]
      %v366 = vld [vmem:[%s320 + $0x50] sm:$0xff]
      %v367 = vld [vmem:[%s320 + $0x58] sm:$0x3]
      %v368 = vld [vmem:[%s320 + $0x60] sm:$0xff]
      %v369 = vld [vmem:[%s320 + $0x68] sm:$0xff]
      %v370 = vld [vmem:[%s320 + $0x70] sm:$0x3]
      %v371 = vld [vmem:[%s320 + $0x78] sm:$0xff]
      %v372 = vld [vmem:[%s320 + $0x80] sm:$0xff]
      %v373 = vld [vmem:[%s320 + $0x88] sm:$0x3]
      %v374 = vld [vmem:[%s320 + $0x90] sm:$0xff]
      %v375 = vld [vmem:[%s320 + $0x98] sm:$0xff]
      %v376 = vld [vmem:[%s320 + $0xa0] sm:$0x3]
      %v377 = vld [vmem:[%s320 + $0xa8] sm:$0xff]
      %v378 = vld [vmem:[%s320 + $0xb0] sm:$0xff]
      %v379 = vld [vmem:[%s320 + $0xb8] sm:$0x3]
      %v380 = vld [vmem:[%s320 + $0xc0] sm:$0xff]
      %v381 = vld [vmem:[%s320 + $0xc8] sm:$0xff]
      %v382 = vld [vmem:[%s320 + $0xd0] sm:$0x3]
      %v383 = vld [vmem:[%s320 + $0xd8] sm:$0xff]
      %v384 = vld [vmem:[%s320 + $0xe0] sm:$0xff]
      %v385 = vld [vmem:[%s320 + $0xe8] sm:$0x3]
      %v386 = vld [vmem:[%s320 + $0xf0] sm:$0xff]
      %v387 = vld [vmem:[%s320 + $0xf8] sm:$0xff]
      %v388 = vld [vmem:[%s320 + $0x100] sm:$0x3]
      %v389 = vld [vmem:[%s320 + $0x108] sm:$0xff]
      %v390 = vld [vmem:[%s320 + $0x110] sm:$0xff]
      %v391 = vld [vmem:[%s320 + $0x118] sm:$0x3]
      %v392 = vld [vmem:[%s320 + $0x120] sm:$0xff]
      %v393 = vld [vmem:[%s320 + $0x128] sm:$0xff]
      %v394 = vld [vmem:[%s320 + $0x130] sm:$0x3]
      %v395 = vld [vmem:[%s320 + $0x138] sm:$0xff]
      %v396 = vld [vmem:[%s320 + $0x140] sm:$0xff]
      %v397 = vld [vmem:[%s320 + $0x148] sm:$0x3]
      %v398 = vld [vmem:[%s320 + $0x150] sm:$0xff]
      %v399 = vld [vmem:[%s320 + $0x158] sm:$0xff]
      %v400 = vld [vmem:[%s320 + $0x160] sm:$0x3]
      %v401 = vld [vmem:[%s320 + $0x168] sm:$0xff]
      %v402 = vld [vmem:[%s320 + $0x170] sm:$0xff]
      %v403 = vld [vmem:[%s320 + $0x178] sm:$0x3]
      %v404 = vld [vmem:[%s338] sm:$0xff]
      %v405 = vld [vmem:[%s338 + $0x8] sm:$0xff]
      %v406 = vld [vmem:[%s338 + $0x10] sm:$0x3]
      %v407 = vld [vmem:[%s338 + $0x18] sm:$0xff]
      %v408 = vld [vmem:[%s338 + $0x20] sm:$0xff]
      %v409 = vld [vmem:[%s338 + $0x28] sm:$0x3]
      %v410 = vld [vmem:[%s0] sm:$0xf]
      %vm459 = vcmask 1046528
      %v460 = vrot.slane %v356, 1
      %v461 = vrot.slane %v357, 1
      %v462 = vsel %vm459, %v460, %v461
      %v463 = vrot.slane %v358, 1
      %v464 = vsel %vm459, %v461, %v463
      %v465 = vrot.slane %v359, 1
      %v466 = vrot.slane %v360, 1
      %v467 = vsel %vm459, %v465, %v466
      %v468 = vrot.slane %v361, 1
      %v469 = vsel %vm459, %v466, %v468
      %v470 = vrot.slane %v362, 1
      %v471 = vrot.slane %v363, 1
      %v472 = vsel %vm459, %v470, %v471
      %v473 = vrot.slane %v364, 1
      %v474 = vsel %vm459, %v471, %v473
      %v475 = vrot.slane %v365, 1
      %v476 = vrot.slane %v366, 1
      %v477 = vsel %vm459, %v475, %v476
      %v478 = vrot.slane %v367, 1
      %v479 = vsel %vm459, %v476, %v478
      %v480 = vrot.slane %v368, 1
      %v481 = vrot.slane %v369, 1
      %v482 = vsel %vm459, %v480, %v481
      %v483 = vrot.slane %v370, 1
      %v484 = vsel %vm459, %v481, %v483
      %v485 = vrot.slane %v371, 1
      %v486 = vrot.slane %v372, 1
      %v487 = vsel %vm459, %v485, %v486
      %v488 = vrot.slane %v373, 1
      %v489 = vsel %vm459, %v486, %v488
      %v490 = vrot.slane %v374, 1
      %v491 = vrot.slane %v375, 1
      %v492 = vsel %vm459, %v490, %v491
      %v493 = vrot.slane %v376, 1
      %v494 = vsel %vm459, %v491, %v493
      %v495 = vrot.slane %v377, 1
      %v496 = vrot.slane %v378, 1
      %v497 = vsel %vm459, %v495, %v496
      %v498 = vrot.slane %v379, 1
      %v499 = vsel %vm459, %v496, %v498
      %v500 = vrot.slane %v380, 1
      %v501 = vrot.slane %v381, 1
      %v502 = vsel %vm459, %v500, %v501
      %v503 = vrot.slane %v382, 1
      %v504 = vsel %vm459, %v501, %v503
      %v505 = vrot.slane %v383, 1
      %v506 = vrot.slane %v384, 1
      %v507 = vsel %vm459, %v505, %v506
      %v508 = vrot.slane %v385, 1
      %v509 = vsel %vm459, %v506, %v508
      %v510 = vrot.slane %v386, 1
      %v511 = vrot.slane %v387, 1
      %v512 = vsel %vm459, %v510, %v511
      %v513 = vrot.slane %v388, 1
      %v514 = vsel %vm459, %v511, %v513
      %v515 = vrot.slane %v389, 1
      %v516 = vrot.slane %v390, 1
      %v517 = vsel %vm459, %v515, %v516
      %v518 = vrot.slane %v391, 1
      %v519 = vsel %vm459, %v516, %v518
      %v520 = vrot.slane %v392, 1
      %v521 = vrot.slane %v393, 1
      %v522 = vsel %vm459, %v520, %v521
      %v523 = vrot.slane %v394, 1
      %v524 = vsel %vm459, %v521, %v523
      %v525 = vrot.slane %v395, 1
      %v526 = vrot.slane %v396, 1
      %v527 = vsel %vm459, %v525, %v526
      %v528 = vrot.slane %v397, 1
      %v529 = vsel %vm459, %v526, %v528
      %v530 = vrot.slane %v398, 1
      %v531 = vrot.slane %v399, 1
      %v532 = vsel %vm459, %v530, %v531
      %v533 = vrot.slane %v400, 1
      %v534 = vsel %vm459, %v531, %v533
      %v535 = vrot.slane %v401, 1
      %v536 = vrot.slane %v402, 1
      %v537 = vsel %vm459, %v535, %v536
      %v538 = vrot.slane %v403, 1
      %v539 = vsel %vm459, %v536, %v538
      %s540 = scalar_lea.vmem %s0, 4
      %v541 = vld [vmem:[%s540] sm:$0xf]
      %vm542 = vcmask 31744
      %v543 = vsel %vm542, %v462, 0
      %v545 = vsel %vm542, %v464, 0
      %v547 = vsel %vm542, %v467, 0
      %v549 = vsel %vm542, %v469, 0
      %v551 = vsel %vm542, %v472, 0
      %v553 = vsel %vm542, %v474, 0
      %v555 = vsel %vm542, %v477, 0
      %v557 = vsel %vm542, %v479, 0
      %v559 = vsel %vm542, %v482, 0
      %v561 = vsel %vm542, %v484, 0
      %v563 = vsel %vm542, %v487, 0
      %v565 = vsel %vm542, %v489, 0
      %v567 = vsel %vm542, %v492, 0
      %v569 = vsel %vm542, %v494, 0
      %v571 = vsel %vm542, %v497, 0
      %v573 = vsel %vm542, %v499, 0
      %v575 = vsel %vm542, %v502, 0
      %v577 = vsel %vm542, %v504, 0
      %v579 = vsel %vm542, %v507, 0
      %v581 = vsel %vm542, %v509, 0
      %v583 = vsel %vm542, %v512, 0
      %v585 = vsel %vm542, %v514, 0
      %v587 = vsel %vm542, %v517, 0
      %v589 = vsel %vm542, %v519, 0
      %v591 = vsel %vm542, %v522, 0
      %v593 = vsel %vm542, %v524, 0
      %v595 = vsel %vm542, %v527, 0
      %v597 = vsel %vm542, %v529, 0
      %v599 = vsel %vm542, %v532, 0
      %v601 = vsel %vm542, %v534, 0
      %v603 = vsel %vm542, %v537, 0
      %v605 = vsel %vm542, %v539, 0
      %vm607 = vcmask 1043456
      %v609 = vsel %vm607, %v541, 0
      %611 = vmatprep.subr.mxu0 0.0
      %612 = vmatpush1.msra.mxu0 0.0
      %613 = vmatprep.subr.mxu0 0.0
      %614 = vmatpush1.msra.mxu0 0.0
      %615 = vmatprep.subr.mxu0 0.0
      %616 = vmatpush1.msra.mxu0 0.0
      %617 = vmatprep.subr.mxu0 0.0
      %618 = vmatpush1.msra.mxu0 0.0
      %619 = vmatprep.subr.mxu0 0.0
      %620 = vmatpush1.msra.mxu0 0.0
      %621 = vmatprep.subr.mxu0 0.0
      %622 = vmatpush1.msra.mxu0 0.0
      %623 = vmatprep.subr.mxu0 0.0
      %624 = vmatpush1.msra.mxu0 0.0
      %625 = vmatprep.subr.mxu0 0.0
      %626 = vmatpush1.msra.mxu0 0.0
      %627 = vmatprep.subr.mxu0 0.0
      %628 = vmatpush1.msra.mxu0 0.0
      %629 = vmatprep.subr.mxu0 0.0
      %630 = vmatpush1.msra.mxu0 0.0
      %631 = vmatprep.subr.mxu0 0.0
      %632 = vmatpush1.msra.mxu0 0.0
      %633 = vmatprep.subr.mxu0 0.0
      %634 = vmatpush1.msra.mxu0 0.0
      %635 = vmatprep.subr.mxu0 0.0
      %636 = vmatpush1.msra.mxu0 0.0
      %637 = vmatprep.subr.mxu0 0.0
      %638 = vmatpush1.msra.mxu0 0.0
      %639 = vmatprep.subr.mxu0 0.0
      %640 = vmatpush1.msra.mxu0 0.0
      %641 = vmatprep.subr.mxu0 0.0
      %642 = vmatpush1.msra.mxu0 %v609
      %643 = vmatprep.subr.mxu0 0.0
      %644 = vmatpush2.msra.mxu0 0.0
      %645 = vmatprep.subr.mxu0 0.0
      %646 = vmatpush2.msra.mxu0 0.0
      %647 = vmatprep.subr.mxu0 0.0
      %648 = vmatpush2.msra.mxu0 0.0
      %649 = vmatprep.subr.mxu0 0.0
      %650 = vmatpush2.msra.mxu0 0.0
      %651 = vmatprep.subr.mxu0 0.0
      %652 = vmatpush2.msra.mxu0 0.0
      %653 = vmatprep.subr.mxu0 0.0
      %654 = vmatpush2.msra.mxu0 0.0
      %655 = vmatprep.subr.mxu0 0.0
      %656 = vmatpush2.msra.mxu0 0.0
      %657 = vmatprep.subr.mxu0 0.0
      %658 = vmatpush2.msra.mxu0 0.0
      %659 = vmatprep.subr.mxu0 0.0
      %660 = vmatpush2.msra.mxu0 0.0
      %661 = vmatprep.subr.mxu0 0.0
      %662 = vmatpush2.msra.mxu0 0.0
      %663 = vmatprep.subr.mxu0 0.0
      %664 = vmatpush2.msra.mxu0 0.0
      %665 = vmatprep.subr.mxu0 0.0
      %666 = vmatpush2.msra.mxu0 0.0
      %667 = vmatprep.subr.mxu0 0.0
      %668 = vmatpush2.msra.mxu0 0.0
      %669 = vmatprep.subr.mxu0 0.0
      %670 = vmatpush2.msra.mxu0 0.0
      %671 = vmatprep.subr.mxu0 0.0
      %672 = vmatpush2.msra.mxu0 0.0
      %673 = vmatprep.subr.mxu0 0.0
      %674 = vmatpush2.msra.mxu0 0.0
      %675 = vmatprep.mubr.f32.mxu0 0.0
      %676 = vmatmul.mubr.f32.gmra.mxu0 %v543
      %v677 = vpop.f32.mrf.mxu0
      %v678 = vadd.f32 0.0, %v677
      %v679 = vpop.f32.mrf.mxu0
      %680 = vmatprep.mubr.f32.mxu0 0.0
      %681 = vmatmul.mubr.f32.gmra.mxu0 %v545
      %v682 = vpop.f32.mrf.mxu0
      %v683 = vadd.f32 0.0, %v682
      %v684 = vpop.f32.mrf.mxu0
      %685 = vmatprep.mubr.f32.mxu0 0.0
      %686 = vmatmul.mubr.f32.gmra.mxu0 %v547
      %v687 = vpop.f32.mrf.mxu0
      %v688 = vadd.f32 0.0, %v687
      %v689 = vpop.f32.mrf.mxu0
      %690 = vmatprep.mubr.f32.mxu0 0.0
      %691 = vmatmul.mubr.f32.gmra.mxu0 %v549
      %v692 = vpop.f32.mrf.mxu0
      %v693 = vadd.f32 0.0, %v692
      %v694 = vpop.f32.mrf.mxu0
      %695 = vmatprep.mubr.f32.mxu0 0.0
      %696 = vmatmul.mubr.f32.gmra.mxu0 %v551
      %v697 = vpop.f32.mrf.mxu0
      %v698 = vadd.f32 0.0, %v697
      %v699 = vpop.f32.mrf.mxu0
      %700 = vmatprep.mubr.f32.mxu0 0.0
      %701 = vmatmul.mubr.f32.gmra.mxu0 %v553
      %v702 = vpop.f32.mrf.mxu0
      %v703 = vadd.f32 0.0, %v702
      %v704 = vpop.f32.mrf.mxu0
      %705 = vmatprep.mubr.f32.mxu0 0.0
      %706 = vmatmul.mubr.f32.gmra.mxu0 %v555
      %v707 = vpop.f32.mrf.mxu0
      %v708 = vadd.f32 0.0, %v707
      %v709 = vpop.f32.mrf.mxu0
      %710 = vmatprep.mubr.f32.mxu0 0.0
      %711 = vmatmul.mubr.f32.gmra.mxu0 %v557
      %v712 = vpop.f32.mrf.mxu0
      %v713 = vadd.f32 0.0, %v712
      %v714 = vpop.f32.mrf.mxu0
      %715 = vmatprep.mubr.f32.mxu0 0.0
      %716 = vmatmul.mubr.f32.gmra.mxu0 %v559
      %v717 = vpop.f32.mrf.mxu0
      %v718 = vadd.f32 0.0, %v717
      %v719 = vpop.f32.mrf.mxu0
      %720 = vmatprep.mubr.f32.mxu0 0.0
      %721 = vmatmul.mubr.f32.gmra.mxu0 %v561
      %v722 = vpop.f32.mrf.mxu0
      %v723 = vadd.f32 0.0, %v722
      %v724 = vpop.f32.mrf.mxu0
      %725 = vmatprep.mubr.f32.mxu0 0.0
      %726 = vmatmul.mubr.f32.gmra.mxu0 %v563
      %v727 = vpop.f32.mrf.mxu0
      %v728 = vadd.f32 0.0, %v727
      %v729 = vpop.f32.mrf.mxu0
      %730 = vmatprep.mubr.f32.mxu0 0.0
      %731 = vmatmul.mubr.f32.gmra.mxu0 %v565
      %v732 = vpop.f32.mrf.mxu0
      %v733 = vadd.f32 0.0, %v732
      %v734 = vpop.f32.mrf.mxu0
      %735 = vmatprep.mubr.f32.mxu0 0.0
      %736 = vmatmul.mubr.f32.gmra.mxu0 %v567
      %v737 = vpop.f32.mrf.mxu0
      %v738 = vadd.f32 0.0, %v737
      %v739 = vpop.f32.mrf.mxu0
      %740 = vmatprep.mubr.f32.mxu0 0.0
      %741 = vmatmul.mubr.f32.gmra.mxu0 %v569
      %v742 = vpop.f32.mrf.mxu0
      %v743 = vadd.f32 0.0, %v742
      %v744 = vpop.f32.mrf.mxu0
      %745 = vmatprep.mubr.f32.mxu0 0.0
      %746 = vmatmul.mubr.f32.gmra.mxu0 %v571
      %v747 = vpop.f32.mrf.mxu0
      %v748 = vadd.f32 0.0, %v747
      %v749 = vpop.f32.mrf.mxu0
      %750 = vmatprep.mubr.f32.mxu0 0.0
      %751 = vmatmul.mubr.f32.gmra.mxu0 %v573
      %v752 = vpop.f32.mrf.mxu0
      %v753 = vadd.f32 0.0, %v752
      %v754 = vpop.f32.mrf.mxu0
      %755 = vmatprep.mubr.f32.mxu0 0.0
      %756 = vmatmul.mubr.f32.gmra.mxu0 %v575
      %v757 = vpop.f32.mrf.mxu0
      %v758 = vadd.f32 0.0, %v757
      %v759 = vpop.f32.mrf.mxu0
      %760 = vmatprep.mubr.f32.mxu0 0.0
      %761 = vmatmul.mubr.f32.gmra.mxu0 %v577
      %v762 = vpop.f32.mrf.mxu0
      %v763 = vadd.f32 0.0, %v762
      %v764 = vpop.f32.mrf.mxu0
      %765 = vmatprep.mubr.f32.mxu0 0.0
      %766 = vmatmul.mubr.f32.gmra.mxu0 %v579
      %v767 = vpop.f32.mrf.mxu0
      %v768 = vadd.f32 0.0, %v767
      %v769 = vpop.f32.mrf.mxu0
      %770 = vmatprep.mubr.f32.mxu0 0.0
      %771 = vmatmul.mubr.f32.gmra.mxu0 %v581
      %v772 = vpop.f32.mrf.mxu0
      %v773 = vadd.f32 0.0, %v772
      %v774 = vpop.f32.mrf.mxu0
      %775 = vmatprep.mubr.f32.mxu0 0.0
      %776 = vmatmul.mubr.f32.gmra.mxu0 %v583
      %v777 = vpop.f32.mrf.mxu0
      %v778 = vadd.f32 0.0, %v777
      %v779 = vpop.f32.mrf.mxu0
      %780 = vmatprep.mubr.f32.mxu0 0.0
      %781 = vmatmul.mubr.f32.gmra.mxu0 %v585
      %v782 = vpop.f32.mrf.mxu0
      %v783 = vadd.f32 0.0, %v782
      %v784 = vpop.f32.mrf.mxu0
      %785 = vmatprep.mubr.f32.mxu0 0.0
      %786 = vmatmul.mubr.f32.gmra.mxu0 %v587
      %v787 = vpop.f32.mrf.mxu0
      %v788 = vadd.f32 0.0, %v787
      %v789 = vpop.f32.mrf.mxu0
      %790 = vmatprep.mubr.f32.mxu0 0.0
      %791 = vmatmul.mubr.f32.gmra.mxu0 %v589
      %v792 = vpop.f32.mrf.mxu0
      %v793 = vadd.f32 0.0, %v792
      %v794 = vpop.f32.mrf.mxu0
      %795 = vmatprep.mubr.f32.mxu0 0.0
      %796 = vmatmul.mubr.f32.gmra.mxu0 %v591
      %v797 = vpop.f32.mrf.mxu0
      %v798 = vadd.f32 0.0, %v797
      %v799 = vpop.f32.mrf.mxu0
      %800 = vmatprep.mubr.f32.mxu0 0.0
      %801 = vmatmul.mubr.f32.gmra.mxu0 %v593
      %v802 = vpop.f32.mrf.mxu0
      %v803 = vadd.f32 0.0, %v802
      %v804 = vpop.f32.mrf.mxu0
      %805 = vmatprep.mubr.f32.mxu0 0.0
      %806 = vmatmul.mubr.f32.gmra.mxu0 %v595
      %v807 = vpop.f32.mrf.mxu0
      %v808 = vadd.f32 0.0, %v807
      %v809 = vpop.f32.mrf.mxu0
      %810 = vmatprep.mubr.f32.mxu0 0.0
      %811 = vmatmul.mubr.f32.gmra.mxu0 %v597
      %v812 = vpop.f32.mrf.mxu0
      %v813 = vadd.f32 0.0, %v812
      %v814 = vpop.f32.mrf.mxu0
      %815 = vmatprep.mubr.f32.mxu0 0.0
      %816 = vmatmul.mubr.f32.gmra.mxu0 %v599
      %v817 = vpop.f32.mrf.mxu0
      %v818 = vadd.f32 0.0, %v817
      %v819 = vpop.f32.mrf.mxu0
      %820 = vmatprep.mubr.f32.mxu0 0.0
      %821 = vmatmul.mubr.f32.gmra.mxu0 %v601
      %v822 = vpop.f32.mrf.mxu0
      %v823 = vadd.f32 0.0, %v822
      %v824 = vpop.f32.mrf.mxu0
      %825 = vmatprep.mubr.f32.mxu0 0.0
      %826 = vmatmul.mubr.f32.gmra.mxu0 %v603
      %v827 = vpop.f32.mrf.mxu0
      %v828 = vadd.f32 0.0, %v827
      %v829 = vpop.f32.mrf.mxu0
      %830 = vmatprep.mubr.f32.mxu0 0.0
      %831 = vmatmul.mubr.f32.gmra.mxu0 %v605
      %v832 = vpop.f32.mrf.mxu0
      %v833 = vadd.f32 0.0, %v832
      %v834 = vpop.f32.mrf.mxu0
      %835 = vdwg.mxu0
      %v836 = vsel %vm542, %v356, 0
      %v838 = vsel %vm542, %v357, 0
      %v840 = vsel %vm542, %v359, 0
      %v842 = vsel %vm542, %v360, 0
      %v844 = vsel %vm542, %v362, 0
      %v846 = vsel %vm542, %v363, 0
      %v848 = vsel %vm542, %v365, 0
      %v850 = vsel %vm542, %v366, 0
      %v852 = vsel %vm542, %v368, 0
      %v854 = vsel %vm542, %v369, 0
      %v856 = vsel %vm542, %v371, 0
      %v858 = vsel %vm542, %v372, 0
      %v860 = vsel %vm542, %v374, 0
      %v862 = vsel %vm542, %v375, 0
      %v864 = vsel %vm542, %v377, 0
      %v866 = vsel %vm542, %v378, 0
      %v868 = vsel %vm542, %v380, 0
      %v870 = vsel %vm542, %v381, 0
      %v872 = vsel %vm542, %v383, 0
      %v874 = vsel %vm542, %v384, 0
      %v876 = vsel %vm542, %v386, 0
      %v878 = vsel %vm542, %v387, 0
      %v880 = vsel %vm542, %v389, 0
      %v882 = vsel %vm542, %v390, 0
      %v884 = vsel %vm542, %v392, 0
      %v886 = vsel %vm542, %v393, 0
      %v888 = vsel %vm542, %v395, 0
      %v890 = vsel %vm542, %v396, 0
      %v892 = vsel %vm542, %v398, 0
      %v894 = vsel %vm542, %v399, 0
      %v896 = vsel %vm542, %v401, 0
      %v898 = vsel %vm542, %v402, 0
      %v901 = vsel %vm607, %v410, 0
      %903 = vmatprep.subr.mxu0 0.0
      %904 = vmatpush1.msra.mxu0 0.0
      %905 = vmatprep.subr.mxu0 0.0
      %906 = vmatpush1.msra.mxu0 0.0
      %907 = vmatprep.subr.mxu0 0.0
      %908 = vmatpush1.msra.mxu0 0.0
      %909 = vmatprep.subr.mxu0 0.0
      %910 = vmatpush1.msra.mxu0 0.0
      %911 = vmatprep.subr.mxu0 0.0
      %912 = vmatpush1.msra.mxu0 0.0
      %913 = vmatprep.subr.mxu0 0.0
      %914 = vmatpush1.msra.mxu0 0.0
      %915 = vmatprep.subr.mxu0 0.0
      %916 = vmatpush1.msra.mxu0 0.0
      %917 = vmatprep.subr.mxu0 0.0
      %918 = vmatpush1.msra.mxu0 0.0
      %919 = vmatprep.subr.mxu0 0.0
      %920 = vmatpush1.msra.mxu0 0.0
      %921 = vmatprep.subr.mxu0 0.0
      %922 = vmatpush1.msra.mxu0 0.0
      %923 = vmatprep.subr.mxu0 0.0
      %924 = vmatpush1.msra.mxu0 0.0
      %925 = vmatprep.subr.mxu0 0.0
      %926 = vmatpush1.msra.mxu0 0.0
      %927 = vmatprep.subr.mxu0 0.0
      %928 = vmatpush1.msra.mxu0 0.0
      %929 = vmatprep.subr.mxu0 0.0
      %930 = vmatpush1.msra.mxu0 0.0
      %931 = vmatprep.subr.mxu0 0.0
      %932 = vmatpush1.msra.mxu0 0.0
      %933 = vmatprep.subr.mxu0 0.0
      %934 = vmatpush1.msra.mxu0 %v901
      %935 = vmatprep.subr.mxu0 0.0
      %936 = vmatpush2.msra.mxu0 0.0
      %937 = vmatprep.subr.mxu0 0.0
      %938 = vmatpush2.msra.mxu0 0.0
      %939 = vmatprep.subr.mxu0 0.0
      %940 = vmatpush2.msra.mxu0 0.0
      %941 = vmatprep.subr.mxu0 0.0
      %942 = vmatpush2.msra.mxu0 0.0
      %943 = vmatprep.subr.mxu0 0.0
      %944 = vmatpush2.msra.mxu0 0.0
      %945 = vmatprep.subr.mxu0 0.0
      %946 = vmatpush2.msra.mxu0 0.0
      %947 = vmatprep.subr.mxu0 0.0
      %948 = vmatpush2.msra.mxu0 0.0
      %949 = vmatprep.subr.mxu0 0.0
      %950 = vmatpush2.msra.mxu0 0.0
      %951 = vmatprep.subr.mxu0 0.0
      %952 = vmatpush2.msra.mxu0 0.0
      %953 = vmatprep.subr.mxu0 0.0
      %954 = vmatpush2.msra.mxu0 0.0
      %955 = vmatprep.subr.mxu0 0.0
      %956 = vmatpush2.msra.mxu0 0.0
      %957 = vmatprep.subr.mxu0 0.0
      %958 = vmatpush2.msra.mxu0 0.0
      %959 = vmatprep.subr.mxu0 0.0
      %960 = vmatpush2.msra.mxu0 0.0
      %961 = vmatprep.subr.mxu0 0.0
      %962 = vmatpush2.msra.mxu0 0.0
      %963 = vmatprep.subr.mxu0 0.0
      %964 = vmatpush2.msra.mxu0 0.0
      %965 = vmatprep.subr.mxu0 0.0
      %966 = vmatpush2.msra.mxu0 0.0
      %967 = vmatprep.mubr.f32.mxu0 0.0
      %968 = vmatmul.mubr.f32.gmra.mxu0 %v836
      %v969 = vpop.f32.mrf.mxu0
      %v970 = vadd.f32 %v678, %v969
      %v971 = vpop.f32.mrf.mxu0
      %972 = vmatprep.mubr.f32.mxu0 0.0
      %973 = vmatmul.mubr.f32.gmra.mxu0 %v838
      %v974 = vpop.f32.mrf.mxu0
      %v975 = vadd.f32 %v683, %v974
      %v976 = vpop.f32.mrf.mxu0
      %977 = vmatprep.mubr.f32.mxu0 0.0
      %978 = vmatmul.mubr.f32.gmra.mxu0 %v840
      %v979 = vpop.f32.mrf.mxu0
      %v980 = vadd.f32 %v688, %v979
      %v981 = vpop.f32.mrf.mxu0
      %982 = vmatprep.mubr.f32.mxu0 0.0
      %983 = vmatmul.mubr.f32.gmra.mxu0 %v842
      %v984 = vpop.f32.mrf.mxu0
      %v985 = vadd.f32 %v693, %v984
      %v986 = vpop.f32.mrf.mxu0
      %987 = vmatprep.mubr.f32.mxu0 0.0
      %988 = vmatmul.mubr.f32.gmra.mxu0 %v844
      %v989 = vpop.f32.mrf.mxu0
      %v990 = vadd.f32 %v698, %v989
      %v991 = vpop.f32.mrf.mxu0
      %992 = vmatprep.mubr.f32.mxu0 0.0
      %993 = vmatmul.mubr.f32.gmra.mxu0 %v846
      %v994 = vpop.f32.mrf.mxu0
      %v995 = vadd.f32 %v703, %v994
      %v996 = vpop.f32.mrf.mxu0
      %997 = vmatprep.mubr.f32.mxu0 0.0
      %998 = vmatmul.mubr.f32.gmra.mxu0 %v848
      %v999 = vpop.f32.mrf.mxu0
      %v1000 = vadd.f32 %v708, %v999
      %v1001 = vpop.f32.mrf.mxu0
      %1002 = vmatprep.mubr.f32.mxu0 0.0
      %1003 = vmatmul.mubr.f32.gmra.mxu0 %v850
      %v1004 = vpop.f32.mrf.mxu0
      %v1005 = vadd.f32 %v713, %v1004
      %v1006 = vpop.f32.mrf.mxu0
      %1007 = vmatprep.mubr.f32.mxu0 0.0
      %1008 = vmatmul.mubr.f32.gmra.mxu0 %v852
      %v1009 = vpop.f32.mrf.mxu0
      %v1010 = vadd.f32 %v718, %v1009
      %v1011 = vpop.f32.mrf.mxu0
      %1012 = vmatprep.mubr.f32.mxu0 0.0
      %1013 = vmatmul.mubr.f32.gmra.mxu0 %v854
      %v1014 = vpop.f32.mrf.mxu0
      %v1015 = vadd.f32 %v723, %v1014
      %v1016 = vpop.f32.mrf.mxu0
      %1017 = vmatprep.mubr.f32.mxu0 0.0
      %1018 = vmatmul.mubr.f32.gmra.mxu0 %v856
      %v1019 = vpop.f32.mrf.mxu0
      %v1020 = vadd.f32 %v728, %v1019
      %v1021 = vpop.f32.mrf.mxu0
      %1022 = vmatprep.mubr.f32.mxu0 0.0
      %1023 = vmatmul.mubr.f32.gmra.mxu0 %v858
      %v1024 = vpop.f32.mrf.mxu0
      %v1025 = vadd.f32 %v733, %v1024
      %v1026 = vpop.f32.mrf.mxu0
      %1027 = vmatprep.mubr.f32.mxu0 0.0
      %1028 = vmatmul.mubr.f32.gmra.mxu0 %v860
      %v1029 = vpop.f32.mrf.mxu0
      %v1030 = vadd.f32 %v738, %v1029
      %v1031 = vpop.f32.mrf.mxu0
      %1032 = vmatprep.mubr.f32.mxu0 0.0
      %1033 = vmatmul.mubr.f32.gmra.mxu0 %v862
      %v1034 = vpop.f32.mrf.mxu0
      %v1035 = vadd.f32 %v743, %v1034
      %v1036 = vpop.f32.mrf.mxu0
      %1037 = vmatprep.mubr.f32.mxu0 0.0
      %1038 = vmatmul.mubr.f32.gmra.mxu0 %v864
      %v1039 = vpop.f32.mrf.mxu0
      %v1040 = vadd.f32 %v748, %v1039
      %v1041 = vpop.f32.mrf.mxu0
      %1042 = vmatprep.mubr.f32.mxu0 0.0
      %1043 = vmatmul.mubr.f32.gmra.mxu0 %v866
      %v1044 = vpop.f32.mrf.mxu0
      %v1045 = vadd.f32 %v753, %v1044
      %v1046 = vpop.f32.mrf.mxu0
      %1047 = vmatprep.mubr.f32.mxu0 0.0
      %1048 = vmatmul.mubr.f32.gmra.mxu0 %v868
      %v1049 = vpop.f32.mrf.mxu0
      %v1050 = vadd.f32 %v758, %v1049
      %v1051 = vpop.f32.mrf.mxu0
      %1052 = vmatprep.mubr.f32.mxu0 0.0
      %1053 = vmatmul.mubr.f32.gmra.mxu0 %v870
      %v1054 = vpop.f32.mrf.mxu0
      %v1055 = vadd.f32 %v763, %v1054
      %v1056 = vpop.f32.mrf.mxu0
      %1057 = vmatprep.mubr.f32.mxu0 0.0
      %1058 = vmatmul.mubr.f32.gmra.mxu0 %v872
      %v1059 = vpop.f32.mrf.mxu0
      %v1060 = vadd.f32 %v768, %v1059
      %v1061 = vpop.f32.mrf.mxu0
      %1062 = vmatprep.mubr.f32.mxu0 0.0
      %1063 = vmatmul.mubr.f32.gmra.mxu0 %v874
      %v1064 = vpop.f32.mrf.mxu0
      %v1065 = vadd.f32 %v773, %v1064
      %v1066 = vpop.f32.mrf.mxu0
      %1067 = vmatprep.mubr.f32.mxu0 0.0
      %1068 = vmatmul.mubr.f32.gmra.mxu0 %v876
      %v1069 = vpop.f32.mrf.mxu0
      %v1070 = vadd.f32 %v778, %v1069
      %v1071 = vpop.f32.mrf.mxu0
      %1072 = vmatprep.mubr.f32.mxu0 0.0
      %1073 = vmatmul.mubr.f32.gmra.mxu0 %v878
      %v1074 = vpop.f32.mrf.mxu0
      %v1075 = vadd.f32 %v783, %v1074
      %v1076 = vpop.f32.mrf.mxu0
      %1077 = vmatprep.mubr.f32.mxu0 0.0
      %1078 = vmatmul.mubr.f32.gmra.mxu0 %v880
      %v1079 = vpop.f32.mrf.mxu0
      %v1080 = vadd.f32 %v788, %v1079
      %v1081 = vpop.f32.mrf.mxu0
      %1082 = vmatprep.mubr.f32.mxu0 0.0
      %1083 = vmatmul.mubr.f32.gmra.mxu0 %v882
      %v1084 = vpop.f32.mrf.mxu0
      %v1085 = vadd.f32 %v793, %v1084
      %v1086 = vpop.f32.mrf.mxu0
      %1087 = vmatprep.mubr.f32.mxu0 0.0
      %1088 = vmatmul.mubr.f32.gmra.mxu0 %v884
      %v1089 = vpop.f32.mrf.mxu0
      %v1090 = vadd.f32 %v798, %v1089
      %v1091 = vpop.f32.mrf.mxu0
      %1092 = vmatprep.mubr.f32.mxu0 0.0
      %1093 = vmatmul.mubr.f32.gmra.mxu0 %v886
      %v1094 = vpop.f32.mrf.mxu0
      %v1095 = vadd.f32 %v803, %v1094
      %v1096 = vpop.f32.mrf.mxu0
      %1097 = vmatprep.mubr.f32.mxu0 0.0
      %1098 = vmatmul.mubr.f32.gmra.mxu0 %v888
      %v1099 = vpop.f32.mrf.mxu0
      %v1100 = vadd.f32 %v808, %v1099
      %v1101 = vpop.f32.mrf.mxu0
      %1102 = vmatprep.mubr.f32.mxu0 0.0
      %1103 = vmatmul.mubr.f32.gmra.mxu0 %v890
      %v1104 = vpop.f32.mrf.mxu0
      %v1105 = vadd.f32 %v813, %v1104
      %v1106 = vpop.f32.mrf.mxu0
      %1107 = vmatprep.mubr.f32.mxu0 0.0
      %1108 = vmatmul.mubr.f32.gmra.mxu0 %v892
      %v1109 = vpop.f32.mrf.mxu0
      %v1110 = vadd.f32 %v818, %v1109
      %v1111 = vpop.f32.mrf.mxu0
      %1112 = vmatprep.mubr.f32.mxu0 0.0
      %1113 = vmatmul.mubr.f32.gmra.mxu0 %v894
      %v1114 = vpop.f32.mrf.mxu0
      %v1115 = vadd.f32 %v823, %v1114
      %v1116 = vpop.f32.mrf.mxu0
      %1117 = vmatprep.mubr.f32.mxu0 0.0
      %1118 = vmatmul.mubr.f32.gmra.mxu0 %v896
      %v1119 = vpop.f32.mrf.mxu0
      %v1120 = vadd.f32 %v828, %v1119
      %v1121 = vpop.f32.mrf.mxu0
      %1122 = vmatprep.mubr.f32.mxu0 0.0
      %1123 = vmatmul.mubr.f32.gmra.mxu0 %v898
      %v1124 = vpop.f32.mrf.mxu0
      %v1125 = vadd.f32 %v833, %v1124
      %v1126 = vpop.f32.mrf.mxu0
      %1127 = vdwg.mxu0
      %vm1128 = vcmask 1045504
      %v1129 = vrot.slane %v356, 2
      %v1130 = vrot.slane %v357, 2
      %v1131 = vsel %vm1128, %v1129, %v1130
      %v1132 = vrot.slane %v358, 2
      %v1133 = vsel %vm1128, %v1130, %v1132
      %v1134 = vrot.slane %v359, 2
      %v1135 = vrot.slane %v360, 2
      %v1136 = vsel %vm1128, %v1134, %v1135
      %v1137 = vrot.slane %v361, 2
      %v1138 = vsel %vm1128, %v1135, %v1137
      %v1139 = vrot.slane %v362, 2
      %v1140 = vrot.slane %v363, 2
      %v1141 = vsel %vm1128, %v1139, %v1140
      %v1142 = vrot.slane %v364, 2
      %v1143 = vsel %vm1128, %v1140, %v1142
      %v1144 = vrot.slane %v365, 2
      %v1145 = vrot.slane %v366, 2
      %v1146 = vsel %vm1128, %v1144, %v1145
      %v1147 = vrot.slane %v367, 2
      %v1148 = vsel %vm1128, %v1145, %v1147
      %v1149 = vrot.slane %v368, 2
      %v1150 = vrot.slane %v369, 2
      %v1151 = vsel %vm1128, %v1149, %v1150
      %v1152 = vrot.slane %v370, 2
      %v1153 = vsel %vm1128, %v1150, %v1152
      %v1154 = vrot.slane %v371, 2
      %v1155 = vrot.slane %v372, 2
      %v1156 = vsel %vm1128, %v1154, %v1155
      %v1157 = vrot.slane %v373, 2
      %v1158 = vsel %vm1128, %v1155, %v1157
      %v1159 = vrot.slane %v374, 2
      %v1160 = vrot.slane %v375, 2
      %v1161 = vsel %vm1128, %v1159, %v1160
      %v1162 = vrot.slane %v376, 2
      %v1163 = vsel %vm1128, %v1160, %v1162
      %v1164 = vrot.slane %v377, 2
      %v1165 = vrot.slane %v378, 2
      %v1166 = vsel %vm1128, %v1164, %v1165
      %v1167 = vrot.slane %v379, 2
      %v1168 = vsel %vm1128, %v1165, %v1167
      %v1169 = vrot.slane %v380, 2
      %v1170 = vrot.slane %v381, 2
      %v1171 = vsel %vm1128, %v1169, %v1170
      %v1172 = vrot.slane %v382, 2
      %v1173 = vsel %vm1128, %v1170, %v1172
      %v1174 = vrot.slane %v383, 2
      %v1175 = vrot.slane %v384, 2
      %v1176 = vsel %vm1128, %v1174, %v1175
      %v1177 = vrot.slane %v385, 2
      %v1178 = vsel %vm1128, %v1175, %v1177
      %v1179 = vrot.slane %v386, 2
      %v1180 = vrot.slane %v387, 2
      %v1181 = vsel %vm1128, %v1179, %v1180
      %v1182 = vrot.slane %v388, 2
      %v1183 = vsel %vm1128, %v1180, %v1182
      %v1184 = vrot.slane %v389, 2
      %v1185 = vrot.slane %v390, 2
      %v1186 = vsel %vm1128, %v1184, %v1185
      %v1187 = vrot.slane %v391, 2
      %v1188 = vsel %vm1128, %v1185, %v1187
      %v1189 = vrot.slane %v392, 2
      %v1190 = vrot.slane %v393, 2
      %v1191 = vsel %vm1128, %v1189, %v1190
      %v1192 = vrot.slane %v394, 2
      %v1193 = vsel %vm1128, %v1190, %v1192
      %v1194 = vrot.slane %v395, 2
      %v1195 = vrot.slane %v396, 2
      %v1196 = vsel %vm1128, %v1194, %v1195
      %v1197 = vrot.slane %v397, 2
      %v1198 = vsel %vm1128, %v1195, %v1197
      %v1199 = vrot.slane %v398, 2
      %v1200 = vrot.slane %v399, 2
      %v1201 = vsel %vm1128, %v1199, %v1200
      %v1202 = vrot.slane %v400, 2
      %v1203 = vsel %vm1128, %v1200, %v1202
      %v1204 = vrot.slane %v401, 2
      %v1205 = vrot.slane %v402, 2
      %v1206 = vsel %vm1128, %v1204, %v1205
      %v1207 = vrot.slane %v403, 2
      %v1208 = vsel %vm1128, %v1205, %v1207
      %s1209 = scalar_lea.vmem %s0, 8
      %v1210 = vld [vmem:[%s1209] sm:$0xf]
      %v1211 = vsel %vm542, %v1131, 0
      %v1213 = vsel %vm542, %v1133, 0
      %v1215 = vsel %vm542, %v1136, 0
      %v1217 = vsel %vm542, %v1138, 0
      %v1219 = vsel %vm542, %v1141, 0
      %v1221 = vsel %vm542, %v1143, 0
      %v1223 = vsel %vm542, %v1146, 0
      %v1225 = vsel %vm542, %v1148, 0
      %v1227 = vsel %vm542, %v1151, 0
      %v1229 = vsel %vm542, %v1153, 0
      %v1231 = vsel %vm542, %v1156, 0
      %v1233 = vsel %vm542, %v1158, 0
      %v1235 = vsel %vm542, %v1161, 0
      %v1237 = vsel %vm542, %v1163, 0
      %v1239 = vsel %vm542, %v1166, 0
      %v1241 = vsel %vm542, %v1168, 0
      %v1243 = vsel %vm542, %v1171, 0
      %v1245 = vsel %vm542, %v1173, 0
      %v1247 = vsel %vm542, %v1176, 0
      %v1249 = vsel %vm542, %v1178, 0
      %v1251 = vsel %vm542, %v1181, 0
      %v1253 = vsel %vm542, %v1183, 0
      %v1255 = vsel %vm542, %v1186, 0
      %v1257 = vsel %vm542, %v1188, 0
      %v1259 = vsel %vm542, %v1191, 0
      %v1261 = vsel %vm542, %v1193, 0
      %v1263 = vsel %vm542, %v1196, 0
      %v1265 = vsel %vm542, %v1198, 0
      %v1267 = vsel %vm542, %v1201, 0
      %v1269 = vsel %vm542, %v1203, 0
      %v1271 = vsel %vm542, %v1206, 0
      %v1273 = vsel %vm542, %v1208, 0
      %v1276 = vsel %vm607, %v1210, 0
      %1278 = vmatprep.subr.mxu0 0.0
      %1279 = vmatpush1.msra.mxu0 0.0
      %1280 = vmatprep.subr.mxu0 0.0
      %1281 = vmatpush1.msra.mxu0 0.0
      %1282 = vmatprep.subr.mxu0 0.0
      %1283 = vmatpush1.msra.mxu0 0.0
      %1284 = vmatprep.subr.mxu0 0.0
      %1285 = vmatpush1.msra.mxu0 0.0
      %1286 = vmatprep.subr.mxu0 0.0
      %1287 = vmatpush1.msra.mxu0 0.0
      %1288 = vmatprep.subr.mxu0 0.0
      %1289 = vmatpush1.msra.mxu0 0.0
      %1290 = vmatprep.subr.mxu0 0.0
      %1291 = vmatpush1.msra.mxu0 0.0
      %1292 = vmatprep.subr.mxu0 0.0
      %1293 = vmatpush1.msra.mxu0 0.0
      %1294 = vmatprep.subr.mxu0 0.0
      %1295 = vmatpush1.msra.mxu0 0.0
      %1296 = vmatprep.subr.mxu0 0.0
      %1297 = vmatpush1.msra.mxu0 0.0
      %1298 = vmatprep.subr.mxu0 0.0
      %1299 = vmatpush1.msra.mxu0 0.0
      %1300 = vmatprep.subr.mxu0 0.0
      %1301 = vmatpush1.msra.mxu0 0.0
      %1302 = vmatprep.subr.mxu0 0.0
      %1303 = vmatpush1.msra.mxu0 0.0
      %1304 = vmatprep.subr.mxu0 0.0
      %1305 = vmatpush1.msra.mxu0 0.0
      %1306 = vmatprep.subr.mxu0 0.0
      %1307 = vmatpush1.msra.mxu0 0.0
      %1308 = vmatprep.subr.mxu0 0.0
      %1309 = vmatpush1.msra.mxu0 %v1276
      %1310 = vmatprep.subr.mxu0 0.0
      %1311 = vmatpush2.msra.mxu0 0.0
      %1312 = vmatprep.subr.mxu0 0.0
      %1313 = vmatpush2.msra.mxu0 0.0
      %1314 = vmatprep.subr.mxu0 0.0
      %1315 = vmatpush2.msra.mxu0 0.0
      %1316 = vmatprep.subr.mxu0 0.0
      %1317 = vmatpush2.msra.mxu0 0.0
      %1318 = vmatprep.subr.mxu0 0.0
      %1319 = vmatpush2.msra.mxu0 0.0
      %1320 = vmatprep.subr.mxu0 0.0
      %1321 = vmatpush2.msra.mxu0 0.0
      %1322 = vmatprep.subr.mxu0 0.0
      %1323 = vmatpush2.msra.mxu0 0.0
      %1324 = vmatprep.subr.mxu0 0.0
      %1325 = vmatpush2.msra.mxu0 0.0
      %1326 = vmatprep.subr.mxu0 0.0
      %1327 = vmatpush2.msra.mxu0 0.0
      %1328 = vmatprep.subr.mxu0 0.0
      %1329 = vmatpush2.msra.mxu0 0.0
      %1330 = vmatprep.subr.mxu0 0.0
      %1331 = vmatpush2.msra.mxu0 0.0
      %1332 = vmatprep.subr.mxu0 0.0
      %1333 = vmatpush2.msra.mxu0 0.0
      %1334 = vmatprep.subr.mxu0 0.0
      %1335 = vmatpush2.msra.mxu0 0.0
      %1336 = vmatprep.subr.mxu0 0.0
      %1337 = vmatpush2.msra.mxu0 0.0
      %1338 = vmatprep.subr.mxu0 0.0
      %1339 = vmatpush2.msra.mxu0 0.0
      %1340 = vmatprep.subr.mxu0 0.0
      %1341 = vmatpush2.msra.mxu0 0.0
      %1342 = vmatprep.mubr.f32.mxu0 0.0
      %1343 = vmatmul.mubr.f32.gmra.mxu0 %v1211
      %v1344 = vpop.f32.mrf.mxu0
      %v1345 = vadd.f32 0.0, %v1344
      %v1346 = vpop.f32.mrf.mxu0
      %1347 = vmatprep.mubr.f32.mxu0 0.0
      %1348 = vmatmul.mubr.f32.gmra.mxu0 %v1213
      %v1349 = vpop.f32.mrf.mxu0
      %v1350 = vadd.f32 0.0, %v1349
      %v1351 = vpop.f32.mrf.mxu0
      %1352 = vmatprep.mubr.f32.mxu0 0.0
      %1353 = vmatmul.mubr.f32.gmra.mxu0 %v1215
      %v1354 = vpop.f32.mrf.mxu0
      %v1355 = vadd.f32 0.0, %v1354
      %v1356 = vpop.f32.mrf.mxu0
      %1357 = vmatprep.mubr.f32.mxu0 0.0
      %1358 = vmatmul.mubr.f32.gmra.mxu0 %v1217
      %v1359 = vpop.f32.mrf.mxu0
      %v1360 = vadd.f32 0.0, %v1359
      %v1361 = vpop.f32.mrf.mxu0
      %1362 = vmatprep.mubr.f32.mxu0 0.0
      %1363 = vmatmul.mubr.f32.gmra.mxu0 %v1219
      %v1364 = vpop.f32.mrf.mxu0
      %v1365 = vadd.f32 0.0, %v1364
      %v1366 = vpop.f32.mrf.mxu0
      %1367 = vmatprep.mubr.f32.mxu0 0.0
      %1368 = vmatmul.mubr.f32.gmra.mxu0 %v1221
      %v1369 = vpop.f32.mrf.mxu0
      %v1370 = vadd.f32 0.0, %v1369
      %v1371 = vpop.f32.mrf.mxu0
      %1372 = vmatprep.mubr.f32.mxu0 0.0
      %1373 = vmatmul.mubr.f32.gmra.mxu0 %v1223
      %v1374 = vpop.f32.mrf.mxu0
      %v1375 = vadd.f32 0.0, %v1374
      %v1376 = vpop.f32.mrf.mxu0
      %1377 = vmatprep.mubr.f32.mxu0 0.0
      %1378 = vmatmul.mubr.f32.gmra.mxu0 %v1225
      %v1379 = vpop.f32.mrf.mxu0
      %v1380 = vadd.f32 0.0, %v1379
      %v1381 = vpop.f32.mrf.mxu0
      %1382 = vmatprep.mubr.f32.mxu0 0.0
      %1383 = vmatmul.mubr.f32.gmra.mxu0 %v1227
      %v1384 = vpop.f32.mrf.mxu0
      %v1385 = vadd.f32 0.0, %v1384
      %v1386 = vpop.f32.mrf.mxu0
      %1387 = vmatprep.mubr.f32.mxu0 0.0
      %1388 = vmatmul.mubr.f32.gmra.mxu0 %v1229
      %v1389 = vpop.f32.mrf.mxu0
      %v1390 = vadd.f32 0.0, %v1389
      %v1391 = vpop.f32.mrf.mxu0
      %1392 = vmatprep.mubr.f32.mxu0 0.0
      %1393 = vmatmul.mubr.f32.gmra.mxu0 %v1231
      %v1394 = vpop.f32.mrf.mxu0
      %v1395 = vadd.f32 0.0, %v1394
      %v1396 = vpop.f32.mrf.mxu0
      %1397 = vmatprep.mubr.f32.mxu0 0.0
      %1398 = vmatmul.mubr.f32.gmra.mxu0 %v1233
      %v1399 = vpop.f32.mrf.mxu0
      %v1400 = vadd.f32 0.0, %v1399
      %v1401 = vpop.f32.mrf.mxu0
      %1402 = vmatprep.mubr.f32.mxu0 0.0
      %1403 = vmatmul.mubr.f32.gmra.mxu0 %v1235
      %v1404 = vpop.f32.mrf.mxu0
      %v1405 = vadd.f32 0.0, %v1404
      %v1406 = vpop.f32.mrf.mxu0
      %1407 = vmatprep.mubr.f32.mxu0 0.0
      %1408 = vmatmul.mubr.f32.gmra.mxu0 %v1237
      %v1409 = vpop.f32.mrf.mxu0
      %v1410 = vadd.f32 0.0, %v1409
      %v1411 = vpop.f32.mrf.mxu0
      %1412 = vmatprep.mubr.f32.mxu0 0.0
      %1413 = vmatmul.mubr.f32.gmra.mxu0 %v1239
      %v1414 = vpop.f32.mrf.mxu0
      %v1415 = vadd.f32 0.0, %v1414
      %v1416 = vpop.f32.mrf.mxu0
      %1417 = vmatprep.mubr.f32.mxu0 0.0
      %1418 = vmatmul.mubr.f32.gmra.mxu0 %v1241
      %v1419 = vpop.f32.mrf.mxu0
      %v1420 = vadd.f32 0.0, %v1419
      %v1421 = vpop.f32.mrf.mxu0
      %1422 = vmatprep.mubr.f32.mxu0 0.0
      %1423 = vmatmul.mubr.f32.gmra.mxu0 %v1243
      %v1424 = vpop.f32.mrf.mxu0
      %v1425 = vadd.f32 0.0, %v1424
      %v1426 = vpop.f32.mrf.mxu0
      %1427 = vmatprep.mubr.f32.mxu0 0.0
      %1428 = vmatmul.mubr.f32.gmra.mxu0 %v1245
      %v1429 = vpop.f32.mrf.mxu0
      %v1430 = vadd.f32 0.0, %v1429
      %v1431 = vpop.f32.mrf.mxu0
      %1432 = vmatprep.mubr.f32.mxu0 0.0
      %1433 = vmatmul.mubr.f32.gmra.mxu0 %v1247
      %v1434 = vpop.f32.mrf.mxu0
      %v1435 = vadd.f32 0.0, %v1434
      %v1436 = vpop.f32.mrf.mxu0
      %1437 = vmatprep.mubr.f32.mxu0 0.0
      %1438 = vmatmul.mubr.f32.gmra.mxu0 %v1249
      %v1439 = vpop.f32.mrf.mxu0
      %v1440 = vadd.f32 0.0, %v1439
      %v1441 = vpop.f32.mrf.mxu0
      %1442 = vmatprep.mubr.f32.mxu0 0.0
      %1443 = vmatmul.mubr.f32.gmra.mxu0 %v1251
      %v1444 = vpop.f32.mrf.mxu0
      %v1445 = vadd.f32 0.0, %v1444
      %v1446 = vpop.f32.mrf.mxu0
      %1447 = vmatprep.mubr.f32.mxu0 0.0
      %1448 = vmatmul.mubr.f32.gmra.mxu0 %v1253
      %v1449 = vpop.f32.mrf.mxu0
      %v1450 = vadd.f32 0.0, %v1449
      %v1451 = vpop.f32.mrf.mxu0
      %1452 = vmatprep.mubr.f32.mxu0 0.0
      %1453 = vmatmul.mubr.f32.gmra.mxu0 %v1255
      %v1454 = vpop.f32.mrf.mxu0
      %v1455 = vadd.f32 0.0, %v1454
      %v1456 = vpop.f32.mrf.mxu0
      %1457 = vmatprep.mubr.f32.mxu0 0.0
      %1458 = vmatmul.mubr.f32.gmra.mxu0 %v1257
      %v1459 = vpop.f32.mrf.mxu0
      %v1460 = vadd.f32 0.0, %v1459
      %v1461 = vpop.f32.mrf.mxu0
      %1462 = vmatprep.mubr.f32.mxu0 0.0
      %1463 = vmatmul.mubr.f32.gmra.mxu0 %v1259
      %v1464 = vpop.f32.mrf.mxu0
      %v1465 = vadd.f32 0.0, %v1464
      %v1466 = vpop.f32.mrf.mxu0
      %1467 = vmatprep.mubr.f32.mxu0 0.0
      %1468 = vmatmul.mubr.f32.gmra.mxu0 %v1261
      %v1469 = vpop.f32.mrf.mxu0
      %v1470 = vadd.f32 0.0, %v1469
      %v1471 = vpop.f32.mrf.mxu0
      %1472 = vmatprep.mubr.f32.mxu0 0.0
      %1473 = vmatmul.mubr.f32.gmra.mxu0 %v1263
      %v1474 = vpop.f32.mrf.mxu0
      %v1475 = vadd.f32 0.0, %v1474
      %v1476 = vpop.f32.mrf.mxu0
      %1477 = vmatprep.mubr.f32.mxu0 0.0
      %1478 = vmatmul.mubr.f32.gmra.mxu0 %v1265
      %v1479 = vpop.f32.mrf.mxu0
      %v1480 = vadd.f32 0.0, %v1479
      %v1481 = vpop.f32.mrf.mxu0
      %1482 = vmatprep.mubr.f32.mxu0 0.0
      %1483 = vmatmul.mubr.f32.gmra.mxu0 %v1267
      %v1484 = vpop.f32.mrf.mxu0
      %v1485 = vadd.f32 0.0, %v1484
      %v1486 = vpop.f32.mrf.mxu0
      %1487 = vmatprep.mubr.f32.mxu0 0.0
      %1488 = vmatmul.mubr.f32.gmra.mxu0 %v1269
      %v1489 = vpop.f32.mrf.mxu0
      %v1490 = vadd.f32 0.0, %v1489
      %v1491 = vpop.f32.mrf.mxu0
      %1492 = vmatprep.mubr.f32.mxu0 0.0
      %1493 = vmatmul.mubr.f32.gmra.mxu0 %v1271
      %v1494 = vpop.f32.mrf.mxu0
      %v1495 = vadd.f32 0.0, %v1494
      %v1496 = vpop.f32.mrf.mxu0
      %1497 = vmatprep.mubr.f32.mxu0 0.0
      %1498 = vmatmul.mubr.f32.gmra.mxu0 %v1273
      %v1499 = vpop.f32.mrf.mxu0
      %v1500 = vadd.f32 0.0, %v1499
      %v1501 = vpop.f32.mrf.mxu0
      %1502 = vdwg.mxu0
      %v1503 = vadd.f32 %v970, %v1345
      %v1504 = vadd.f32 %v975, %v1350
      %v1505 = vadd.f32 %v980, %v1355
      %v1506 = vadd.f32 %v985, %v1360
      %v1507 = vadd.f32 %v990, %v1365
      %v1508 = vadd.f32 %v995, %v1370
      %v1509 = vadd.f32 %v1000, %v1375
      %v1510 = vadd.f32 %v1005, %v1380
      %v1511 = vadd.f32 %v1010, %v1385
      %v1512 = vadd.f32 %v1015, %v1390
      %v1513 = vadd.f32 %v1020, %v1395
      %v1514 = vadd.f32 %v1025, %v1400
      %v1515 = vadd.f32 %v1030, %v1405
      %v1516 = vadd.f32 %v1035, %v1410
      %v1517 = vadd.f32 %v1040, %v1415
      %v1518 = vadd.f32 %v1045, %v1420
      %v1519 = vadd.f32 %v1050, %v1425
      %v1520 = vadd.f32 %v1055, %v1430
      %v1521 = vadd.f32 %v1060, %v1435
      %v1522 = vadd.f32 %v1065, %v1440
      %v1523 = vadd.f32 %v1070, %v1445
      %v1524 = vadd.f32 %v1075, %v1450
      %v1525 = vadd.f32 %v1080, %v1455
      %v1526 = vadd.f32 %v1085, %v1460
      %v1527 = vadd.f32 %v1090, %v1465
      %v1528 = vadd.f32 %v1095, %v1470
      %v1529 = vadd.f32 %v1100, %v1475
      %v1530 = vadd.f32 %v1105, %v1480
      %v1531 = vadd.f32 %v1110, %v1485
      %v1532 = vadd.f32 %v1115, %v1490
      %v1533 = vadd.f32 %v1120, %v1495
      %v1534 = vadd.f32 %v1125, %v1500
      %s1535 = scalar_lea.vmem %s0, 12
      %v1536 = vld [vmem:[%s1535] sm:$0xf]
      %v1538 = vsel %vm542, %v404, 0
      %v1541 = vsel %vm542, %v405, 0
      %v1544 = vsel %vm607, %v1536, 0
      %1546 = vmatprep.subr.mxu0 0.0
      %1547 = vmatpush1.msra.mxu0 0.0
      %1548 = vmatprep.subr.mxu0 0.0
      %1549 = vmatpush1.msra.mxu0 0.0
      %1550 = vmatprep.subr.mxu0 0.0
      %1551 = vmatpush1.msra.mxu0 0.0
      %1552 = vmatprep.subr.mxu0 0.0
      %1553 = vmatpush1.msra.mxu0 0.0
      %1554 = vmatprep.subr.mxu0 0.0
      %1555 = vmatpush1.msra.mxu0 0.0
      %1556 = vmatprep.subr.mxu0 0.0
      %1557 = vmatpush1.msra.mxu0 0.0
      %1558 = vmatprep.subr.mxu0 0.0
      %1559 = vmatpush1.msra.mxu0 0.0
      %1560 = vmatprep.subr.mxu0 0.0
      %1561 = vmatpush1.msra.mxu0 0.0
      %1562 = vmatprep.subr.mxu0 0.0
      %1563 = vmatpush1.msra.mxu0 0.0
      %1564 = vmatprep.subr.mxu0 0.0
      %1565 = vmatpush1.msra.mxu0 0.0
      %1566 = vmatprep.subr.mxu0 0.0
      %1567 = vmatpush1.msra.mxu0 0.0
      %1568 = vmatprep.subr.mxu0 0.0
      %1569 = vmatpush1.msra.mxu0 0.0
      %1570 = vmatprep.subr.mxu0 0.0
      %1571 = vmatpush1.msra.mxu0 0.0
      %1572 = vmatprep.subr.mxu0 0.0
      %1573 = vmatpush1.msra.mxu0 0.0
      %1574 = vmatprep.subr.mxu0 0.0
      %1575 = vmatpush1.msra.mxu0 0.0
      %1576 = vmatprep.subr.mxu0 0.0
      %1577 = vmatpush1.msra.mxu0 %v1544
      %1578 = vmatprep.subr.mxu0 0.0
      %1579 = vmatpush2.msra.mxu0 0.0
      %1580 = vmatprep.subr.mxu0 0.0
      %1581 = vmatpush2.msra.mxu0 0.0
      %1582 = vmatprep.subr.mxu0 0.0
      %1583 = vmatpush2.msra.mxu0 0.0
      %1584 = vmatprep.subr.mxu0 0.0
      %1585 = vmatpush2.msra.mxu0 0.0
      %1586 = vmatprep.subr.mxu0 0.0
      %1587 = vmatpush2.msra.mxu0 0.0
      %1588 = vmatprep.subr.mxu0 0.0
      %1589 = vmatpush2.msra.mxu0 0.0
      %1590 = vmatprep.subr.mxu0 0.0
      %1591 = vmatpush2.msra.mxu0 0.0
      %1592 = vmatprep.subr.mxu0 0.0
      %1593 = vmatpush2.msra.mxu0 0.0
      %1594 = vmatprep.subr.mxu0 0.0
      %1595 = vmatpush2.msra.mxu0 0.0
      %1596 = vmatprep.subr.mxu0 0.0
      %1597 = vmatpush2.msra.mxu0 0.0
      %1598 = vmatprep.subr.mxu0 0.0
      %1599 = vmatpush2.msra.mxu0 0.0
      %1600 = vmatprep.subr.mxu0 0.0
      %1601 = vmatpush2.msra.mxu0 0.0
      %1602 = vmatprep.subr.mxu0 0.0
      %1603 = vmatpush2.msra.mxu0 0.0
      %1604 = vmatprep.subr.mxu0 0.0
      %1605 = vmatpush2.msra.mxu0 0.0
      %1606 = vmatprep.subr.mxu0 0.0
      %1607 = vmatpush2.msra.mxu0 0.0
      %1608 = vmatprep.subr.mxu0 0.0
      %1609 = vmatpush2.msra.mxu0 0.0
      %1610 = vmatprep.mubr.f32.mxu0 0.0
      %1611 = vmatmul.mubr.f32.gmra.mxu0 %v840
      %v1612 = vpop.f32.mrf.mxu0
      %v1613 = vadd.f32 0.0, %v1612
      %v1614 = vpop.f32.mrf.mxu0
      %1615 = vmatprep.mubr.f32.mxu0 0.0
      %1616 = vmatmul.mubr.f32.gmra.mxu0 %v842
      %v1617 = vpop.f32.mrf.mxu0
      %v1618 = vadd.f32 0.0, %v1617
      %v1619 = vpop.f32.mrf.mxu0
      %1620 = vmatprep.mubr.f32.mxu0 0.0
      %1621 = vmatmul.mubr.f32.gmra.mxu0 %v844
      %v1622 = vpop.f32.mrf.mxu0
      %v1623 = vadd.f32 0.0, %v1622
      %v1624 = vpop.f32.mrf.mxu0
      %1625 = vmatprep.mubr.f32.mxu0 0.0
      %1626 = vmatmul.mubr.f32.gmra.mxu0 %v846
      %v1627 = vpop.f32.mrf.mxu0
      %v1628 = vadd.f32 0.0, %v1627
      %v1629 = vpop.f32.mrf.mxu0
      %1630 = vmatprep.mubr.f32.mxu0 0.0
      %1631 = vmatmul.mubr.f32.gmra.mxu0 %v848
      %v1632 = vpop.f32.mrf.mxu0
      %v1633 = vadd.f32 0.0, %v1632
      %v1634 = vpop.f32.mrf.mxu0
      %1635 = vmatprep.mubr.f32.mxu0 0.0
      %1636 = vmatmul.mubr.f32.gmra.mxu0 %v850
      %v1637 = vpop.f32.mrf.mxu0
      %v1638 = vadd.f32 0.0, %v1637
      %v1639 = vpop.f32.mrf.mxu0
      %1640 = vmatprep.mubr.f32.mxu0 0.0
      %1641 = vmatmul.mubr.f32.gmra.mxu0 %v852
      %v1642 = vpop.f32.mrf.mxu0
      %v1643 = vadd.f32 0.0, %v1642
      %v1644 = vpop.f32.mrf.mxu0
      %1645 = vmatprep.mubr.f32.mxu0 0.0
      %1646 = vmatmul.mubr.f32.gmra.mxu0 %v854
      %v1647 = vpop.f32.mrf.mxu0
      %v1648 = vadd.f32 0.0, %v1647
      %v1649 = vpop.f32.mrf.mxu0
      %1650 = vmatprep.mubr.f32.mxu0 0.0
      %1651 = vmatmul.mubr.f32.gmra.mxu0 %v856
      %v1652 = vpop.f32.mrf.mxu0
      %v1653 = vadd.f32 0.0, %v1652
      %v1654 = vpop.f32.mrf.mxu0
      %1655 = vmatprep.mubr.f32.mxu0 0.0
      %1656 = vmatmul.mubr.f32.gmra.mxu0 %v858
      %v1657 = vpop.f32.mrf.mxu0
      %v1658 = vadd.f32 0.0, %v1657
      %v1659 = vpop.f32.mrf.mxu0
      %1660 = vmatprep.mubr.f32.mxu0 0.0
      %1661 = vmatmul.mubr.f32.gmra.mxu0 %v860
      %v1662 = vpop.f32.mrf.mxu0
      %v1663 = vadd.f32 0.0, %v1662
      %v1664 = vpop.f32.mrf.mxu0
      %1665 = vmatprep.mubr.f32.mxu0 0.0
      %1666 = vmatmul.mubr.f32.gmra.mxu0 %v862
      %v1667 = vpop.f32.mrf.mxu0
      %v1668 = vadd.f32 0.0, %v1667
      %v1669 = vpop.f32.mrf.mxu0
      %1670 = vmatprep.mubr.f32.mxu0 0.0
      %1671 = vmatmul.mubr.f32.gmra.mxu0 %v864
      %v1672 = vpop.f32.mrf.mxu0
      %v1673 = vadd.f32 0.0, %v1672
      %v1674 = vpop.f32.mrf.mxu0
      %1675 = vmatprep.mubr.f32.mxu0 0.0
      %1676 = vmatmul.mubr.f32.gmra.mxu0 %v866
      %v1677 = vpop.f32.mrf.mxu0
      %v1678 = vadd.f32 0.0, %v1677
      %v1679 = vpop.f32.mrf.mxu0
      %1680 = vmatprep.mubr.f32.mxu0 0.0
      %1681 = vmatmul.mubr.f32.gmra.mxu0 %v868
      %v1682 = vpop.f32.mrf.mxu0
      %v1683 = vadd.f32 0.0, %v1682
      %v1684 = vpop.f32.mrf.mxu0
      %1685 = vmatprep.mubr.f32.mxu0 0.0
      %1686 = vmatmul.mubr.f32.gmra.mxu0 %v870
      %v1687 = vpop.f32.mrf.mxu0
      %v1688 = vadd.f32 0.0, %v1687
      %v1689 = vpop.f32.mrf.mxu0
      %1690 = vmatprep.mubr.f32.mxu0 0.0
      %1691 = vmatmul.mubr.f32.gmra.mxu0 %v872
      %v1692 = vpop.f32.mrf.mxu0
      %v1693 = vadd.f32 0.0, %v1692
      %v1694 = vpop.f32.mrf.mxu0
      %1695 = vmatprep.mubr.f32.mxu0 0.0
      %1696 = vmatmul.mubr.f32.gmra.mxu0 %v874
      %v1697 = vpop.f32.mrf.mxu0
      %v1698 = vadd.f32 0.0, %v1697
      %v1699 = vpop.f32.mrf.mxu0
      %1700 = vmatprep.mubr.f32.mxu0 0.0
      %1701 = vmatmul.mubr.f32.gmra.mxu0 %v876
      %v1702 = vpop.f32.mrf.mxu0
      %v1703 = vadd.f32 0.0, %v1702
      %v1704 = vpop.f32.mrf.mxu0
      %1705 = vmatprep.mubr.f32.mxu0 0.0
      %1706 = vmatmul.mubr.f32.gmra.mxu0 %v878
      %v1707 = vpop.f32.mrf.mxu0
      %v1708 = vadd.f32 0.0, %v1707
      %v1709 = vpop.f32.mrf.mxu0
      %1710 = vmatprep.mubr.f32.mxu0 0.0
      %1711 = vmatmul.mubr.f32.gmra.mxu0 %v880
      %v1712 = vpop.f32.mrf.mxu0
      %v1713 = vadd.f32 0.0, %v1712
      %v1714 = vpop.f32.mrf.mxu0
      %1715 = vmatprep.mubr.f32.mxu0 0.0
      %1716 = vmatmul.mubr.f32.gmra.mxu0 %v882
      %v1717 = vpop.f32.mrf.mxu0
      %v1718 = vadd.f32 0.0, %v1717
      %v1719 = vpop.f32.mrf.mxu0
      %1720 = vmatprep.mubr.f32.mxu0 0.0
      %1721 = vmatmul.mubr.f32.gmra.mxu0 %v884
      %v1722 = vpop.f32.mrf.mxu0
      %v1723 = vadd.f32 0.0, %v1722
      %v1724 = vpop.f32.mrf.mxu0
      %1725 = vmatprep.mubr.f32.mxu0 0.0
      %1726 = vmatmul.mubr.f32.gmra.mxu0 %v886
      %v1727 = vpop.f32.mrf.mxu0
      %v1728 = vadd.f32 0.0, %v1727
      %v1729 = vpop.f32.mrf.mxu0
      %1730 = vmatprep.mubr.f32.mxu0 0.0
      %1731 = vmatmul.mubr.f32.gmra.mxu0 %v888
      %v1732 = vpop.f32.mrf.mxu0
      %v1733 = vadd.f32 0.0, %v1732
      %v1734 = vpop.f32.mrf.mxu0
      %1735 = vmatprep.mubr.f32.mxu0 0.0
      %1736 = vmatmul.mubr.f32.gmra.mxu0 %v890
      %v1737 = vpop.f32.mrf.mxu0
      %v1738 = vadd.f32 0.0, %v1737
      %v1739 = vpop.f32.mrf.mxu0
      %1740 = vmatprep.mubr.f32.mxu0 0.0
      %1741 = vmatmul.mubr.f32.gmra.mxu0 %v892
      %v1742 = vpop.f32.mrf.mxu0
      %v1743 = vadd.f32 0.0, %v1742
      %v1744 = vpop.f32.mrf.mxu0
      %1745 = vmatprep.mubr.f32.mxu0 0.0
      %1746 = vmatmul.mubr.f32.gmra.mxu0 %v894
      %v1747 = vpop.f32.mrf.mxu0
      %v1748 = vadd.f32 0.0, %v1747
      %v1749 = vpop.f32.mrf.mxu0
      %1750 = vmatprep.mubr.f32.mxu0 0.0
      %1751 = vmatmul.mubr.f32.gmra.mxu0 %v896
      %v1752 = vpop.f32.mrf.mxu0
      %v1753 = vadd.f32 0.0, %v1752
      %v1754 = vpop.f32.mrf.mxu0
      %1755 = vmatprep.mubr.f32.mxu0 0.0
      %1756 = vmatmul.mubr.f32.gmra.mxu0 %v898
      %v1757 = vpop.f32.mrf.mxu0
      %v1758 = vadd.f32 0.0, %v1757
      %v1759 = vpop.f32.mrf.mxu0
      %1760 = vmatprep.mubr.f32.mxu0 0.0
      %1761 = vmatmul.mubr.f32.gmra.mxu0 %v1538
      %v1762 = vpop.f32.mrf.mxu0
      %v1763 = vadd.f32 0.0, %v1762
      %v1764 = vpop.f32.mrf.mxu0
      %1765 = vmatprep.mubr.f32.mxu0 0.0
      %1766 = vmatmul.mubr.f32.gmra.mxu0 %v1541
      %v1767 = vpop.f32.mrf.mxu0
      %v1768 = vadd.f32 0.0, %v1767
      %v1769 = vpop.f32.mrf.mxu0
      %1770 = vdwg.mxu0
      %v1771 = vadd.f32 %v1503, %v1613
      %v1772 = vadd.f32 %v1504, %v1618
      %v1773 = vadd.f32 %v1505, %v1623
      %v1774 = vadd.f32 %v1506, %v1628
      %v1775 = vadd.f32 %v1507, %v1633
      %v1776 = vadd.f32 %v1508, %v1638
      %v1777 = vadd.f32 %v1509, %v1643
      %v1778 = vadd.f32 %v1510, %v1648
      %v1779 = vadd.f32 %v1511, %v1653
      %v1780 = vadd.f32 %v1512, %v1658
      %v1781 = vadd.f32 %v1513, %v1663
      %v1782 = vadd.f32 %v1514, %v1668
      %v1783 = vadd.f32 %v1515, %v1673
      %v1784 = vadd.f32 %v1516, %v1678
      %v1785 = vadd.f32 %v1517, %v1683
      %v1786 = vadd.f32 %v1518, %v1688
      %v1787 = vadd.f32 %v1519, %v1693
      %v1788 = vadd.f32 %v1520, %v1698
      %v1789 = vadd.f32 %v1521, %v1703
      %v1790 = vadd.f32 %v1522, %v1708
      %v1791 = vadd.f32 %v1523, %v1713
      %v1792 = vadd.f32 %v1524, %v1718
      %v1793 = vadd.f32 %v1525, %v1723
      %v1794 = vadd.f32 %v1526, %v1728
      %v1795 = vadd.f32 %v1527, %v1733
      %v1796 = vadd.f32 %v1528, %v1738
      %v1797 = vadd.f32 %v1529, %v1743
      %v1798 = vadd.f32 %v1530, %v1748
      %v1799 = vadd.f32 %v1531, %v1753
      %v1800 = vadd.f32 %v1532, %v1758
      %v1801 = vadd.f32 %v1533, %v1763
      %v1802 = vadd.f32 %v1534, %v1768
      %v1804 = vrot.slane %v404, 1
      %v1805 = vrot.slane %v405, 1
      %v1806 = vsel %vm459, %v1804, %v1805
      %v1807 = vrot.slane %v406, 1
      %v1808 = vsel %vm459, %v1805, %v1807
      %s1809 = scalar_lea.vmem %s0, 16
      %v1810 = vld [vmem:[%s1809] sm:$0xf]
      %v1811 = vsel %vm542, %v1806, 0
      %v1813 = vsel %vm542, %v1808, 0
      %v1816 = vsel %vm607, %v1810, 0
      %1818 = vmatprep.subr.mxu0 0.0
      %1819 = vmatpush1.msra.mxu0 0.0
      %1820 = vmatprep.subr.mxu0 0.0
      %1821 = vmatpush1.msra.mxu0 0.0
      %1822 = vmatprep.subr.mxu0 0.0
      %1823 = vmatpush1.msra.mxu0 0.0
      %1824 = vmatprep.subr.mxu0 0.0
      %1825 = vmatpush1.msra.mxu0 0.0
      %1826 = vmatprep.subr.mxu0 0.0
      %1827 = vmatpush1.msra.mxu0 0.0
      %1828 = vmatprep.subr.mxu0 0.0
      %1829 = vmatpush1.msra.mxu0 0.0
      %1830 = vmatprep.subr.mxu0 0.0
      %1831 = vmatpush1.msra.mxu0 0.0
      %1832 = vmatprep.subr.mxu0 0.0
      %1833 = vmatpush1.msra.mxu0 0.0
      %1834 = vmatprep.subr.mxu0 0.0
      %1835 = vmatpush1.msra.mxu0 0.0
      %1836 = vmatprep.subr.mxu0 0.0
      %1837 = vmatpush1.msra.mxu0 0.0
      %1838 = vmatprep.subr.mxu0 0.0
      %1839 = vmatpush1.msra.mxu0 0.0
      %1840 = vmatprep.subr.mxu0 0.0
      %1841 = vmatpush1.msra.mxu0 0.0
      %1842 = vmatprep.subr.mxu0 0.0
      %1843 = vmatpush1.msra.mxu0 0.0
      %1844 = vmatprep.subr.mxu0 0.0
      %1845 = vmatpush1.msra.mxu0 0.0
      %1846 = vmatprep.subr.mxu0 0.0
      %1847 = vmatpush1.msra.mxu0 0.0
      %1848 = vmatprep.subr.mxu0 0.0
      %1849 = vmatpush1.msra.mxu0 %v1816
      %1850 = vmatprep.subr.mxu0 0.0
      %1851 = vmatpush2.msra.mxu0 0.0
      %1852 = vmatprep.subr.mxu0 0.0
      %1853 = vmatpush2.msra.mxu0 0.0
      %1854 = vmatprep.subr.mxu0 0.0
      %1855 = vmatpush2.msra.mxu0 0.0
      %1856 = vmatprep.subr.mxu0 0.0
      %1857 = vmatpush2.msra.mxu0 0.0
      %1858 = vmatprep.subr.mxu0 0.0
      %1859 = vmatpush2.msra.mxu0 0.0
      %1860 = vmatprep.subr.mxu0 0.0
      %1861 = vmatpush2.msra.mxu0 0.0
      %1862 = vmatprep.subr.mxu0 0.0
      %1863 = vmatpush2.msra.mxu0 0.0
      %1864 = vmatprep.subr.mxu0 0.0
      %1865 = vmatpush2.msra.mxu0 0.0
      %1866 = vmatprep.subr.mxu0 0.0
      %1867 = vmatpush2.msra.mxu0 0.0
      %1868 = vmatprep.subr.mxu0 0.0
      %1869 = vmatpush2.msra.mxu0 0.0
      %1870 = vmatprep.subr.mxu0 0.0
      %1871 = vmatpush2.msra.mxu0 0.0
      %1872 = vmatprep.subr.mxu0 0.0
      %1873 = vmatpush2.msra.mxu0 0.0
      %1874 = vmatprep.subr.mxu0 0.0
      %1875 = vmatpush2.msra.mxu0 0.0
      %1876 = vmatprep.subr.mxu0 0.0
      %1877 = vmatpush2.msra.mxu0 0.0
      %1878 = vmatprep.subr.mxu0 0.0
      %1879 = vmatpush2.msra.mxu0 0.0
      %1880 = vmatprep.subr.mxu0 0.0
      %1881 = vmatpush2.msra.mxu0 0.0
      %1882 = vmatprep.mubr.f32.mxu0 0.0
      %1883 = vmatmul.mubr.f32.gmra.mxu0 %v547
      %v1884 = vpop.f32.mrf.mxu0
      %v1885 = vadd.f32 0.0, %v1884
      %v1886 = vpop.f32.mrf.mxu0
      %1887 = vmatprep.mubr.f32.mxu0 0.0
      %1888 = vmatmul.mubr.f32.gmra.mxu0 %v549
      %v1889 = vpop.f32.mrf.mxu0
      %v1890 = vadd.f32 0.0, %v1889
      %v1891 = vpop.f32.mrf.mxu0
      %1892 = vmatprep.mubr.f32.mxu0 0.0
      %1893 = vmatmul.mubr.f32.gmra.mxu0 %v551
      %v1894 = vpop.f32.mrf.mxu0
      %v1895 = vadd.f32 0.0, %v1894
      %v1896 = vpop.f32.mrf.mxu0
      %1897 = vmatprep.mubr.f32.mxu0 0.0
      %1898 = vmatmul.mubr.f32.gmra.mxu0 %v553
      %v1899 = vpop.f32.mrf.mxu0
      %v1900 = vadd.f32 0.0, %v1899
      %v1901 = vpop.f32.mrf.mxu0
      %1902 = vmatprep.mubr.f32.mxu0 0.0
      %1903 = vmatmul.mubr.f32.gmra.mxu0 %v555
      %v1904 = vpop.f32.mrf.mxu0
      %v1905 = vadd.f32 0.0, %v1904
      %v1906 = vpop.f32.mrf.mxu0
      %1907 = vmatprep.mubr.f32.mxu0 0.0
      %1908 = vmatmul.mubr.f32.gmra.mxu0 %v557
      %v1909 = vpop.f32.mrf.mxu0
      %v1910 = vadd.f32 0.0, %v1909
      %v1911 = vpop.f32.mrf.mxu0
      %1912 = vmatprep.mubr.f32.mxu0 0.0
      %1913 = vmatmul.mubr.f32.gmra.mxu0 %v559
      %v1914 = vpop.f32.mrf.mxu0
      %v1915 = vadd.f32 0.0, %v1914
      %v1916 = vpop.f32.mrf.mxu0
      %1917 = vmatprep.mubr.f32.mxu0 0.0
      %1918 = vmatmul.mubr.f32.gmra.mxu0 %v561
      %v1919 = vpop.f32.mrf.mxu0
      %v1920 = vadd.f32 0.0, %v1919
      %v1921 = vpop.f32.mrf.mxu0
      %1922 = vmatprep.mubr.f32.mxu0 0.0
      %1923 = vmatmul.mubr.f32.gmra.mxu0 %v563
      %v1924 = vpop.f32.mrf.mxu0
      %v1925 = vadd.f32 0.0, %v1924
      %v1926 = vpop.f32.mrf.mxu0
      %1927 = vmatprep.mubr.f32.mxu0 0.0
      %1928 = vmatmul.mubr.f32.gmra.mxu0 %v565
      %v1929 = vpop.f32.mrf.mxu0
      %v1930 = vadd.f32 0.0, %v1929
      %v1931 = vpop.f32.mrf.mxu0
      %1932 = vmatprep.mubr.f32.mxu0 0.0
      %1933 = vmatmul.mubr.f32.gmra.mxu0 %v567
      %v1934 = vpop.f32.mrf.mxu0
      %v1935 = vadd.f32 0.0, %v1934
      %v1936 = vpop.f32.mrf.mxu0
      %1937 = vmatprep.mubr.f32.mxu0 0.0
      %1938 = vmatmul.mubr.f32.gmra.mxu0 %v569
      %v1939 = vpop.f32.mrf.mxu0
      %v1940 = vadd.f32 0.0, %v1939
      %v1941 = vpop.f32.mrf.mxu0
      %1942 = vmatprep.mubr.f32.mxu0 0.0
      %1943 = vmatmul.mubr.f32.gmra.mxu0 %v571
      %v1944 = vpop.f32.mrf.mxu0
      %v1945 = vadd.f32 0.0, %v1944
      %v1946 = vpop.f32.mrf.mxu0
      %1947 = vmatprep.mubr.f32.mxu0 0.0
      %1948 = vmatmul.mubr.f32.gmra.mxu0 %v573
      %v1949 = vpop.f32.mrf.mxu0
      %v1950 = vadd.f32 0.0, %v1949
      %v1951 = vpop.f32.mrf.mxu0
      %1952 = vmatprep.mubr.f32.mxu0 0.0
      %1953 = vmatmul.mubr.f32.gmra.mxu0 %v575
      %v1954 = vpop.f32.mrf.mxu0
      %v1955 = vadd.f32 0.0, %v1954
      %v1956 = vpop.f32.mrf.mxu0
      %1957 = vmatprep.mubr.f32.mxu0 0.0
      %1958 = vmatmul.mubr.f32.gmra.mxu0 %v577
      %v1959 = vpop.f32.mrf.mxu0
      %v1960 = vadd.f32 0.0, %v1959
      %v1961 = vpop.f32.mrf.mxu0
      %1962 = vmatprep.mubr.f32.mxu0 0.0
      %1963 = vmatmul.mubr.f32.gmra.mxu0 %v579
      %v1964 = vpop.f32.mrf.mxu0
      %v1965 = vadd.f32 0.0, %v1964
      %v1966 = vpop.f32.mrf.mxu0
      %1967 = vmatprep.mubr.f32.mxu0 0.0
      %1968 = vmatmul.mubr.f32.gmra.mxu0 %v581
      %v1969 = vpop.f32.mrf.mxu0
      %v1970 = vadd.f32 0.0, %v1969
      %v1971 = vpop.f32.mrf.mxu0
      %1972 = vmatprep.mubr.f32.mxu0 0.0
      %1973 = vmatmul.mubr.f32.gmra.mxu0 %v583
      %v1974 = vpop.f32.mrf.mxu0
      %v1975 = vadd.f32 0.0, %v1974
      %v1976 = vpop.f32.mrf.mxu0
      %1977 = vmatprep.mubr.f32.mxu0 0.0
      %1978 = vmatmul.mubr.f32.gmra.mxu0 %v585
      %v1979 = vpop.f32.mrf.mxu0
      %v1980 = vadd.f32 0.0, %v1979
      %v1981 = vpop.f32.mrf.mxu0
      %1982 = vmatprep.mubr.f32.mxu0 0.0
      %1983 = vmatmul.mubr.f32.gmra.mxu0 %v587
      %v1984 = vpop.f32.mrf.mxu0
      %v1985 = vadd.f32 0.0, %v1984
      %v1986 = vpop.f32.mrf.mxu0
      %1987 = vmatprep.mubr.f32.mxu0 0.0
      %1988 = vmatmul.mubr.f32.gmra.mxu0 %v589
      %v1989 = vpop.f32.mrf.mxu0
      %v1990 = vadd.f32 0.0, %v1989
      %v1991 = vpop.f32.mrf.mxu0
      %1992 = vmatprep.mubr.f32.mxu0 0.0
      %1993 = vmatmul.mubr.f32.gmra.mxu0 %v591
      %v1994 = vpop.f32.mrf.mxu0
      %v1995 = vadd.f32 0.0, %v1994
      %v1996 = vpop.f32.mrf.mxu0
      %1997 = vmatprep.mubr.f32.mxu0 0.0
      %1998 = vmatmul.mubr.f32.gmra.mxu0 %v593
      %v1999 = vpop.f32.mrf.mxu0
      %v2000 = vadd.f32 0.0, %v1999
      %v2001 = vpop.f32.mrf.mxu0
      %2002 = vmatprep.mubr.f32.mxu0 0.0
      %2003 = vmatmul.mubr.f32.gmra.mxu0 %v595
      %v2004 = vpop.f32.mrf.mxu0
      %v2005 = vadd.f32 0.0, %v2004
      %v2006 = vpop.f32.mrf.mxu0
      %2007 = vmatprep.mubr.f32.mxu0 0.0
      %2008 = vmatmul.mubr.f32.gmra.mxu0 %v597
      %v2009 = vpop.f32.mrf.mxu0
      %v2010 = vadd.f32 0.0, %v2009
      %v2011 = vpop.f32.mrf.mxu0
      %2012 = vmatprep.mubr.f32.mxu0 0.0
      %2013 = vmatmul.mubr.f32.gmra.mxu0 %v599
      %v2014 = vpop.f32.mrf.mxu0
      %v2015 = vadd.f32 0.0, %v2014
      %v2016 = vpop.f32.mrf.mxu0
      %2017 = vmatprep.mubr.f32.mxu0 0.0
      %2018 = vmatmul.mubr.f32.gmra.mxu0 %v601
      %v2019 = vpop.f32.mrf.mxu0
      %v2020 = vadd.f32 0.0, %v2019
      %v2021 = vpop.f32.mrf.mxu0
      %2022 = vmatprep.mubr.f32.mxu0 0.0
      %2023 = vmatmul.mubr.f32.gmra.mxu0 %v603
      %v2024 = vpop.f32.mrf.mxu0
      %v2025 = vadd.f32 0.0, %v2024
      %v2026 = vpop.f32.mrf.mxu0
      %2027 = vmatprep.mubr.f32.mxu0 0.0
      %2028 = vmatmul.mubr.f32.gmra.mxu0 %v605
      %v2029 = vpop.f32.mrf.mxu0
      %v2030 = vadd.f32 0.0, %v2029
      %v2031 = vpop.f32.mrf.mxu0
      %2032 = vmatprep.mubr.f32.mxu0 0.0
      %2033 = vmatmul.mubr.f32.gmra.mxu0 %v1811
      %v2034 = vpop.f32.mrf.mxu0
      %v2035 = vadd.f32 0.0, %v2034
      %v2036 = vpop.f32.mrf.mxu0
      %2037 = vmatprep.mubr.f32.mxu0 0.0
      %2038 = vmatmul.mubr.f32.gmra.mxu0 %v1813
      %v2039 = vpop.f32.mrf.mxu0
      %v2040 = vadd.f32 0.0, %v2039
      %v2041 = vpop.f32.mrf.mxu0
      %2042 = vdwg.mxu0
      %v2043 = vadd.f32 %v1771, %v1885
      %v2044 = vadd.f32 %v1772, %v1890
      %v2045 = vadd.f32 %v1773, %v1895
      %v2046 = vadd.f32 %v1774, %v1900
      %v2047 = vadd.f32 %v1775, %v1905
      %v2048 = vadd.f32 %v1776, %v1910
      %v2049 = vadd.f32 %v1777, %v1915
      %v2050 = vadd.f32 %v1778, %v1920
      %v2051 = vadd.f32 %v1779, %v1925
      %v2052 = vadd.f32 %v1780, %v1930
      %v2053 = vadd.f32 %v1781, %v1935
      %v2054 = vadd.f32 %v1782, %v1940
      %v2055 = vadd.f32 %v1783, %v1945
      %v2056 = vadd.f32 %v1784, %v1950
      %v2057 = vadd.f32 %v1785, %v1955
      %v2058 = vadd.f32 %v1786, %v1960
      %v2059 = vadd.f32 %v1787, %v1965
      %v2060 = vadd.f32 %v1788, %v1970
      %v2061 = vadd.f32 %v1789, %v1975
      %v2062 = vadd.f32 %v1790, %v1980
      %v2063 = vadd.f32 %v1791, %v1985
      %v2064 = vadd.f32 %v1792, %v1990
      %v2065 = vadd.f32 %v1793, %v1995
      %v2066 = vadd.f32 %v1794, %v2000
      %v2067 = vadd.f32 %v1795, %v2005
      %v2068 = vadd.f32 %v1796, %v2010
      %v2069 = vadd.f32 %v1797, %v2015
      %v2070 = vadd.f32 %v1798, %v2020
      %v2071 = vadd.f32 %v1799, %v2025
      %v2072 = vadd.f32 %v1800, %v2030
      %v2073 = vadd.f32 %v1801, %v2035
      %v2074 = vadd.f32 %v1802, %v2040
      %v2075 = vrot.slane %v404, 2
      %v2076 = vrot.slane %v405, 2
      %v2077 = vsel %vm1128, %v2075, %v2076
      %v2078 = vrot.slane %v406, 2
      %v2079 = vsel %vm1128, %v2076, %v2078
      %s2080 = scalar_lea.vmem %s0, 20
      %v2081 = vld [vmem:[%s2080] sm:$0xf]
      %v2082 = vsel %vm542, %v2077, 0
      %v2084 = vsel %vm542, %v2079, 0
      %v2087 = vsel %vm607, %v2081, 0
      %2089 = vmatprep.subr.mxu0 0.0
      %2090 = vmatpush1.msra.mxu0 0.0
      %2091 = vmatprep.subr.mxu0 0.0
      %2092 = vmatpush1.msra.mxu0 0.0
      %2093 = vmatprep.subr.mxu0 0.0
      %2094 = vmatpush1.msra.mxu0 0.0
      %2095 = vmatprep.subr.mxu0 0.0
      %2096 = vmatpush1.msra.mxu0 0.0
      %2097 = vmatprep.subr.mxu0 0.0
      %2098 = vmatpush1.msra.mxu0 0.0
      %2099 = vmatprep.subr.mxu0 0.0
      %2100 = vmatpush1.msra.mxu0 0.0
      %2101 = vmatprep.subr.mxu0 0.0
      %2102 = vmatpush1.msra.mxu0 0.0
      %2103 = vmatprep.subr.mxu0 0.0
      %2104 = vmatpush1.msra.mxu0 0.0
      %2105 = vmatprep.subr.mxu0 0.0
      %2106 = vmatpush1.msra.mxu0 0.0
      %2107 = vmatprep.subr.mxu0 0.0
      %2108 = vmatpush1.msra.mxu0 0.0
      %2109 = vmatprep.subr.mxu0 0.0
      %2110 = vmatpush1.msra.mxu0 0.0
      %2111 = vmatprep.subr.mxu0 0.0
      %2112 = vmatpush1.msra.mxu0 0.0
      %2113 = vmatprep.subr.mxu0 0.0
      %2114 = vmatpush1.msra.mxu0 0.0
      %2115 = vmatprep.subr.mxu0 0.0
      %2116 = vmatpush1.msra.mxu0 0.0
      %2117 = vmatprep.subr.mxu0 0.0
      %2118 = vmatpush1.msra.mxu0 0.0
      %2119 = vmatprep.subr.mxu0 0.0
      %2120 = vmatpush1.msra.mxu0 %v2087
      %2121 = vmatprep.subr.mxu0 0.0
      %2122 = vmatpush2.msra.mxu0 0.0
      %2123 = vmatprep.subr.mxu0 0.0
      %2124 = vmatpush2.msra.mxu0 0.0
      %2125 = vmatprep.subr.mxu0 0.0
      %2126 = vmatpush2.msra.mxu0 0.0
      %2127 = vmatprep.subr.mxu0 0.0
      %2128 = vmatpush2.msra.mxu0 0.0
      %2129 = vmatprep.subr.mxu0 0.0
      %2130 = vmatpush2.msra.mxu0 0.0
      %2131 = vmatprep.subr.mxu0 0.0
      %2132 = vmatpush2.msra.mxu0 0.0
      %2133 = vmatprep.subr.mxu0 0.0
      %2134 = vmatpush2.msra.mxu0 0.0
      %2135 = vmatprep.subr.mxu0 0.0
      %2136 = vmatpush2.msra.mxu0 0.0
      %2137 = vmatprep.subr.mxu0 0.0
      %2138 = vmatpush2.msra.mxu0 0.0
      %2139 = vmatprep.subr.mxu0 0.0
      %2140 = vmatpush2.msra.mxu0 0.0
      %2141 = vmatprep.subr.mxu0 0.0
      %2142 = vmatpush2.msra.mxu0 0.0
      %2143 = vmatprep.subr.mxu0 0.0
      %2144 = vmatpush2.msra.mxu0 0.0
      %2145 = vmatprep.subr.mxu0 0.0
      %2146 = vmatpush2.msra.mxu0 0.0
      %2147 = vmatprep.subr.mxu0 0.0
      %2148 = vmatpush2.msra.mxu0 0.0
      %2149 = vmatprep.subr.mxu0 0.0
      %2150 = vmatpush2.msra.mxu0 0.0
      %2151 = vmatprep.subr.mxu0 0.0
      %2152 = vmatpush2.msra.mxu0 0.0
      %2153 = vmatprep.mubr.f32.mxu0 0.0
      %2154 = vmatmul.mubr.f32.gmra.mxu0 %v1215
      %v2155 = vpop.f32.mrf.mxu0
      %v2156 = vadd.f32 0.0, %v2155
      %v2157 = vpop.f32.mrf.mxu0
      %2158 = vmatprep.mubr.f32.mxu0 0.0
      %2159 = vmatmul.mubr.f32.gmra.mxu0 %v1217
      %v2160 = vpop.f32.mrf.mxu0
      %v2161 = vadd.f32 0.0, %v2160
      %v2162 = vpop.f32.mrf.mxu0
      %2163 = vmatprep.mubr.f32.mxu0 0.0
      %2164 = vmatmul.mubr.f32.gmra.mxu0 %v1219
      %v2165 = vpop.f32.mrf.mxu0
      %v2166 = vadd.f32 0.0, %v2165
      %v2167 = vpop.f32.mrf.mxu0
      %2168 = vmatprep.mubr.f32.mxu0 0.0
      %2169 = vmatmul.mubr.f32.gmra.mxu0 %v1221
      %v2170 = vpop.f32.mrf.mxu0
      %v2171 = vadd.f32 0.0, %v2170
      %v2172 = vpop.f32.mrf.mxu0
      %2173 = vmatprep.mubr.f32.mxu0 0.0
      %2174 = vmatmul.mubr.f32.gmra.mxu0 %v1223
      %v2175 = vpop.f32.mrf.mxu0
      %v2176 = vadd.f32 0.0, %v2175
      %v2177 = vpop.f32.mrf.mxu0
      %2178 = vmatprep.mubr.f32.mxu0 0.0
      %2179 = vmatmul.mubr.f32.gmra.mxu0 %v1225
      %v2180 = vpop.f32.mrf.mxu0
      %v2181 = vadd.f32 0.0, %v2180
      %v2182 = vpop.f32.mrf.mxu0
      %2183 = vmatprep.mubr.f32.mxu0 0.0
      %2184 = vmatmul.mubr.f32.gmra.mxu0 %v1227
      %v2185 = vpop.f32.mrf.mxu0
      %v2186 = vadd.f32 0.0, %v2185
      %v2187 = vpop.f32.mrf.mxu0
      %2188 = vmatprep.mubr.f32.mxu0 0.0
      %2189 = vmatmul.mubr.f32.gmra.mxu0 %v1229
      %v2190 = vpop.f32.mrf.mxu0
      %v2191 = vadd.f32 0.0, %v2190
      %v2192 = vpop.f32.mrf.mxu0
      %2193 = vmatprep.mubr.f32.mxu0 0.0
      %2194 = vmatmul.mubr.f32.gmra.mxu0 %v1231
      %v2195 = vpop.f32.mrf.mxu0
      %v2196 = vadd.f32 0.0, %v2195
      %v2197 = vpop.f32.mrf.mxu0
      %2198 = vmatprep.mubr.f32.mxu0 0.0
      %2199 = vmatmul.mubr.f32.gmra.mxu0 %v1233
      %v2200 = vpop.f32.mrf.mxu0
      %v2201 = vadd.f32 0.0, %v2200
      %v2202 = vpop.f32.mrf.mxu0
      %2203 = vmatprep.mubr.f32.mxu0 0.0
      %2204 = vmatmul.mubr.f32.gmra.mxu0 %v1235
      %v2205 = vpop.f32.mrf.mxu0
      %v2206 = vadd.f32 0.0, %v2205
      %v2207 = vpop.f32.mrf.mxu0
      %2208 = vmatprep.mubr.f32.mxu0 0.0
      %2209 = vmatmul.mubr.f32.gmra.mxu0 %v1237
      %v2210 = vpop.f32.mrf.mxu0
      %v2211 = vadd.f32 0.0, %v2210
      %v2212 = vpop.f32.mrf.mxu0
      %2213 = vmatprep.mubr.f32.mxu0 0.0
      %2214 = vmatmul.mubr.f32.gmra.mxu0 %v1239
      %v2215 = vpop.f32.mrf.mxu0
      %v2216 = vadd.f32 0.0, %v2215
      %v2217 = vpop.f32.mrf.mxu0
      %2218 = vmatprep.mubr.f32.mxu0 0.0
      %2219 = vmatmul.mubr.f32.gmra.mxu0 %v1241
      %v2220 = vpop.f32.mrf.mxu0
      %v2221 = vadd.f32 0.0, %v2220
      %v2222 = vpop.f32.mrf.mxu0
      %2223 = vmatprep.mubr.f32.mxu0 0.0
      %2224 = vmatmul.mubr.f32.gmra.mxu0 %v1243
      %v2225 = vpop.f32.mrf.mxu0
      %v2226 = vadd.f32 0.0, %v2225
      %v2227 = vpop.f32.mrf.mxu0
      %2228 = vmatprep.mubr.f32.mxu0 0.0
      %2229 = vmatmul.mubr.f32.gmra.mxu0 %v1245
      %v2230 = vpop.f32.mrf.mxu0
      %v2231 = vadd.f32 0.0, %v2230
      %v2232 = vpop.f32.mrf.mxu0
      %2233 = vmatprep.mubr.f32.mxu0 0.0
      %2234 = vmatmul.mubr.f32.gmra.mxu0 %v1247
      %v2235 = vpop.f32.mrf.mxu0
      %v2236 = vadd.f32 0.0, %v2235
      %v2237 = vpop.f32.mrf.mxu0
      %2238 = vmatprep.mubr.f32.mxu0 0.0
      %2239 = vmatmul.mubr.f32.gmra.mxu0 %v1249
      %v2240 = vpop.f32.mrf.mxu0
      %v2241 = vadd.f32 0.0, %v2240
      %v2242 = vpop.f32.mrf.mxu0
      %2243 = vmatprep.mubr.f32.mxu0 0.0
      %2244 = vmatmul.mubr.f32.gmra.mxu0 %v1251
      %v2245 = vpop.f32.mrf.mxu0
      %v2246 = vadd.f32 0.0, %v2245
      %v2247 = vpop.f32.mrf.mxu0
      %2248 = vmatprep.mubr.f32.mxu0 0.0
      %2249 = vmatmul.mubr.f32.gmra.mxu0 %v1253
      %v2250 = vpop.f32.mrf.mxu0
      %v2251 = vadd.f32 0.0, %v2250
      %v2252 = vpop.f32.mrf.mxu0
      %2253 = vmatprep.mubr.f32.mxu0 0.0
      %2254 = vmatmul.mubr.f32.gmra.mxu0 %v1255
      %v2255 = vpop.f32.mrf.mxu0
      %v2256 = vadd.f32 0.0, %v2255
      %v2257 = vpop.f32.mrf.mxu0
      %2258 = vmatprep.mubr.f32.mxu0 0.0
      %2259 = vmatmul.mubr.f32.gmra.mxu0 %v1257
      %v2260 = vpop.f32.mrf.mxu0
      %v2261 = vadd.f32 0.0, %v2260
      %v2262 = vpop.f32.mrf.mxu0
      %2263 = vmatprep.mubr.f32.mxu0 0.0
      %2264 = vmatmul.mubr.f32.gmra.mxu0 %v1259
      %v2265 = vpop.f32.mrf.mxu0
      %v2266 = vadd.f32 0.0, %v2265
      %v2267 = vpop.f32.mrf.mxu0
      %2268 = vmatprep.mubr.f32.mxu0 0.0
      %2269 = vmatmul.mubr.f32.gmra.mxu0 %v1261
      %v2270 = vpop.f32.mrf.mxu0
      %v2271 = vadd.f32 0.0, %v2270
      %v2272 = vpop.f32.mrf.mxu0
      %2273 = vmatprep.mubr.f32.mxu0 0.0
      %2274 = vmatmul.mubr.f32.gmra.mxu0 %v1263
      %v2275 = vpop.f32.mrf.mxu0
      %v2276 = vadd.f32 0.0, %v2275
      %v2277 = vpop.f32.mrf.mxu0
      %2278 = vmatprep.mubr.f32.mxu0 0.0
      %2279 = vmatmul.mubr.f32.gmra.mxu0 %v1265
      %v2280 = vpop.f32.mrf.mxu0
      %v2281 = vadd.f32 0.0, %v2280
      %v2282 = vpop.f32.mrf.mxu0
      %2283 = vmatprep.mubr.f32.mxu0 0.0
      %2284 = vmatmul.mubr.f32.gmra.mxu0 %v1267
      %v2285 = vpop.f32.mrf.mxu0
      %v2286 = vadd.f32 0.0, %v2285
      %v2287 = vpop.f32.mrf.mxu0
      %2288 = vmatprep.mubr.f32.mxu0 0.0
      %2289 = vmatmul.mubr.f32.gmra.mxu0 %v1269
      %v2290 = vpop.f32.mrf.mxu0
      %v2291 = vadd.f32 0.0, %v2290
      %v2292 = vpop.f32.mrf.mxu0
      %2293 = vmatprep.mubr.f32.mxu0 0.0
      %2294 = vmatmul.mubr.f32.gmra.mxu0 %v1271
      %v2295 = vpop.f32.mrf.mxu0
      %v2296 = vadd.f32 0.0, %v2295
      %v2297 = vpop.f32.mrf.mxu0
      %2298 = vmatprep.mubr.f32.mxu0 0.0
      %2299 = vmatmul.mubr.f32.gmra.mxu0 %v1273
      %v2300 = vpop.f32.mrf.mxu0
      %v2301 = vadd.f32 0.0, %v2300
      %v2302 = vpop.f32.mrf.mxu0
      %2303 = vmatprep.mubr.f32.mxu0 0.0
      %2304 = vmatmul.mubr.f32.gmra.mxu0 %v2082
      %v2305 = vpop.f32.mrf.mxu0
      %v2306 = vadd.f32 0.0, %v2305
      %v2307 = vpop.f32.mrf.mxu0
      %2308 = vmatprep.mubr.f32.mxu0 0.0
      %2309 = vmatmul.mubr.f32.gmra.mxu0 %v2084
      %v2310 = vpop.f32.mrf.mxu0
      %v2311 = vadd.f32 0.0, %v2310
      %v2312 = vpop.f32.mrf.mxu0
      %2313 = vdwg.mxu0
      %v2314 = vadd.f32 %v2043, %v2156
      %v2315 = vadd.f32 %v2044, %v2161
      %v2316 = vadd.f32 %v2045, %v2166
      %v2317 = vadd.f32 %v2046, %v2171
      %v2318 = vadd.f32 %v2047, %v2176
      %v2319 = vadd.f32 %v2048, %v2181
      %v2320 = vadd.f32 %v2049, %v2186
      %v2321 = vadd.f32 %v2050, %v2191
      %v2322 = vadd.f32 %v2051, %v2196
      %v2323 = vadd.f32 %v2052, %v2201
      %v2324 = vadd.f32 %v2053, %v2206
      %v2325 = vadd.f32 %v2054, %v2211
      %v2326 = vadd.f32 %v2055, %v2216
      %v2327 = vadd.f32 %v2056, %v2221
      %v2328 = vadd.f32 %v2057, %v2226
      %v2329 = vadd.f32 %v2058, %v2231
      %v2330 = vadd.f32 %v2059, %v2236
      %v2331 = vadd.f32 %v2060, %v2241
      %v2332 = vadd.f32 %v2061, %v2246
      %v2333 = vadd.f32 %v2062, %v2251
      %v2334 = vadd.f32 %v2063, %v2256
      %v2335 = vadd.f32 %v2064, %v2261
      %v2336 = vadd.f32 %v2065, %v2266
      %v2337 = vadd.f32 %v2066, %v2271
      %v2338 = vadd.f32 %v2067, %v2276
      %v2339 = vadd.f32 %v2068, %v2281
      %v2340 = vadd.f32 %v2069, %v2286
      %v2341 = vadd.f32 %v2070, %v2291
      %v2342 = vadd.f32 %v2071, %v2296
      %v2343 = vadd.f32 %v2072, %v2301
      %v2344 = vadd.f32 %v2073, %v2306
      %v2345 = vadd.f32 %v2074, %v2311
      %s2346 = scalar_lea.vmem %s0, 24
      %v2347 = vld [vmem:[%s2346] sm:$0xf]
      %v2349 = vsel %vm542, %v407, 0
      %v2352 = vsel %vm542, %v408, 0
      %v2355 = vsel %vm607, %v2347, 0
      %2357 = vmatprep.subr.mxu0 0.0
      %2358 = vmatpush1.msra.mxu0 0.0
      %2359 = vmatprep.subr.mxu0 0.0
      %2360 = vmatpush1.msra.mxu0 0.0
      %2361 = vmatprep.subr.mxu0 0.0
      %2362 = vmatpush1.msra.mxu0 0.0
      %2363 = vmatprep.subr.mxu0 0.0
      %2364 = vmatpush1.msra.mxu0 0.0
      %2365 = vmatprep.subr.mxu0 0.0
      %2366 = vmatpush1.msra.mxu0 0.0
      %2367 = vmatprep.subr.mxu0 0.0
      %2368 = vmatpush1.msra.mxu0 0.0
      %2369 = vmatprep.subr.mxu0 0.0
      %2370 = vmatpush1.msra.mxu0 0.0
      %2371 = vmatprep.subr.mxu0 0.0
      %2372 = vmatpush1.msra.mxu0 0.0
      %2373 = vmatprep.subr.mxu0 0.0
      %2374 = vmatpush1.msra.mxu0 0.0
      %2375 = vmatprep.subr.mxu0 0.0
      %2376 = vmatpush1.msra.mxu0 0.0
      %2377 = vmatprep.subr.mxu0 0.0
      %2378 = vmatpush1.msra.mxu0 0.0
      %2379 = vmatprep.subr.mxu0 0.0
      %2380 = vmatpush1.msra.mxu0 0.0
      %2381 = vmatprep.subr.mxu0 0.0
      %2382 = vmatpush1.msra.mxu0 0.0
      %2383 = vmatprep.subr.mxu0 0.0
      %2384 = vmatpush1.msra.mxu0 0.0
      %2385 = vmatprep.subr.mxu0 0.0
      %2386 = vmatpush1.msra.mxu0 0.0
      %2387 = vmatprep.subr.mxu0 0.0
      %2388 = vmatpush1.msra.mxu0 %v2355
      %2389 = vmatprep.subr.mxu0 0.0
      %2390 = vmatpush2.msra.mxu0 0.0
      %2391 = vmatprep.subr.mxu0 0.0
      %2392 = vmatpush2.msra.mxu0 0.0
      %2393 = vmatprep.subr.mxu0 0.0
      %2394 = vmatpush2.msra.mxu0 0.0
      %2395 = vmatprep.subr.mxu0 0.0
      %2396 = vmatpush2.msra.mxu0 0.0
      %2397 = vmatprep.subr.mxu0 0.0
      %2398 = vmatpush2.msra.mxu0 0.0
      %2399 = vmatprep.subr.mxu0 0.0
      %2400 = vmatpush2.msra.mxu0 0.0
      %2401 = vmatprep.subr.mxu0 0.0
      %2402 = vmatpush2.msra.mxu0 0.0
      %2403 = vmatprep.subr.mxu0 0.0
      %2404 = vmatpush2.msra.mxu0 0.0
      %2405 = vmatprep.subr.mxu0 0.0
      %2406 = vmatpush2.msra.mxu0 0.0
      %2407 = vmatprep.subr.mxu0 0.0
      %2408 = vmatpush2.msra.mxu0 0.0
      %2409 = vmatprep.subr.mxu0 0.0
      %2410 = vmatpush2.msra.mxu0 0.0
      %2411 = vmatprep.subr.mxu0 0.0
      %2412 = vmatpush2.msra.mxu0 0.0
      %2413 = vmatprep.subr.mxu0 0.0
      %2414 = vmatpush2.msra.mxu0 0.0
      %2415 = vmatprep.subr.mxu0 0.0
      %2416 = vmatpush2.msra.mxu0 0.0
      %2417 = vmatprep.subr.mxu0 0.0
      %2418 = vmatpush2.msra.mxu0 0.0
      %2419 = vmatprep.subr.mxu0 0.0
      %2420 = vmatpush2.msra.mxu0 0.0
      %2421 = vmatprep.mubr.f32.mxu0 0.0
      %2422 = vmatmul.mubr.f32.gmra.mxu0 %v844
      %v2423 = vpop.f32.mrf.mxu0
      %v2424 = vadd.f32 0.0, %v2423
      %v2425 = vpop.f32.mrf.mxu0
      %2426 = vmatprep.mubr.f32.mxu0 0.0
      %2427 = vmatmul.mubr.f32.gmra.mxu0 %v846
      %v2428 = vpop.f32.mrf.mxu0
      %v2429 = vadd.f32 0.0, %v2428
      %v2430 = vpop.f32.mrf.mxu0
      %2431 = vmatprep.mubr.f32.mxu0 0.0
      %2432 = vmatmul.mubr.f32.gmra.mxu0 %v848
      %v2433 = vpop.f32.mrf.mxu0
      %v2434 = vadd.f32 0.0, %v2433
      %v2435 = vpop.f32.mrf.mxu0
      %2436 = vmatprep.mubr.f32.mxu0 0.0
      %2437 = vmatmul.mubr.f32.gmra.mxu0 %v850
      %v2438 = vpop.f32.mrf.mxu0
      %v2439 = vadd.f32 0.0, %v2438
      %v2440 = vpop.f32.mrf.mxu0
      %2441 = vmatprep.mubr.f32.mxu0 0.0
      %2442 = vmatmul.mubr.f32.gmra.mxu0 %v852
      %v2443 = vpop.f32.mrf.mxu0
      %v2444 = vadd.f32 0.0, %v2443
      %v2445 = vpop.f32.mrf.mxu0
      %2446 = vmatprep.mubr.f32.mxu0 0.0
      %2447 = vmatmul.mubr.f32.gmra.mxu0 %v854
      %v2448 = vpop.f32.mrf.mxu0
      %v2449 = vadd.f32 0.0, %v2448
      %v2450 = vpop.f32.mrf.mxu0
      %2451 = vmatprep.mubr.f32.mxu0 0.0
      %2452 = vmatmul.mubr.f32.gmra.mxu0 %v856
      %v2453 = vpop.f32.mrf.mxu0
      %v2454 = vadd.f32 0.0, %v2453
      %v2455 = vpop.f32.mrf.mxu0
      %2456 = vmatprep.mubr.f32.mxu0 0.0
      %2457 = vmatmul.mubr.f32.gmra.mxu0 %v858
      %v2458 = vpop.f32.mrf.mxu0
      %v2459 = vadd.f32 0.0, %v2458
      %v2460 = vpop.f32.mrf.mxu0
      %2461 = vmatprep.mubr.f32.mxu0 0.0
      %2462 = vmatmul.mubr.f32.gmra.mxu0 %v860
      %v2463 = vpop.f32.mrf.mxu0
      %v2464 = vadd.f32 0.0, %v2463
      %v2465 = vpop.f32.mrf.mxu0
      %2466 = vmatprep.mubr.f32.mxu0 0.0
      %2467 = vmatmul.mubr.f32.gmra.mxu0 %v862
      %v2468 = vpop.f32.mrf.mxu0
      %v2469 = vadd.f32 0.0, %v2468
      %v2470 = vpop.f32.mrf.mxu0
      %2471 = vmatprep.mubr.f32.mxu0 0.0
      %2472 = vmatmul.mubr.f32.gmra.mxu0 %v864
      %v2473 = vpop.f32.mrf.mxu0
      %v2474 = vadd.f32 0.0, %v2473
      %v2475 = vpop.f32.mrf.mxu0
      %2476 = vmatprep.mubr.f32.mxu0 0.0
      %2477 = vmatmul.mubr.f32.gmra.mxu0 %v866
      %v2478 = vpop.f32.mrf.mxu0
      %v2479 = vadd.f32 0.0, %v2478
      %v2480 = vpop.f32.mrf.mxu0
      %2481 = vmatprep.mubr.f32.mxu0 0.0
      %2482 = vmatmul.mubr.f32.gmra.mxu0 %v868
      %v2483 = vpop.f32.mrf.mxu0
      %v2484 = vadd.f32 0.0, %v2483
      %v2485 = vpop.f32.mrf.mxu0
      %2486 = vmatprep.mubr.f32.mxu0 0.0
      %2487 = vmatmul.mubr.f32.gmra.mxu0 %v870
      %v2488 = vpop.f32.mrf.mxu0
      %v2489 = vadd.f32 0.0, %v2488
      %v2490 = vpop.f32.mrf.mxu0
      %2491 = vmatprep.mubr.f32.mxu0 0.0
      %2492 = vmatmul.mubr.f32.gmra.mxu0 %v872
      %v2493 = vpop.f32.mrf.mxu0
      %v2494 = vadd.f32 0.0, %v2493
      %v2495 = vpop.f32.mrf.mxu0
      %2496 = vmatprep.mubr.f32.mxu0 0.0
      %2497 = vmatmul.mubr.f32.gmra.mxu0 %v874
      %v2498 = vpop.f32.mrf.mxu0
      %v2499 = vadd.f32 0.0, %v2498
      %v2500 = vpop.f32.mrf.mxu0
      %2501 = vmatprep.mubr.f32.mxu0 0.0
      %2502 = vmatmul.mubr.f32.gmra.mxu0 %v876
      %v2503 = vpop.f32.mrf.mxu0
      %v2504 = vadd.f32 0.0, %v2503
      %v2505 = vpop.f32.mrf.mxu0
      %2506 = vmatprep.mubr.f32.mxu0 0.0
      %2507 = vmatmul.mubr.f32.gmra.mxu0 %v878
      %v2508 = vpop.f32.mrf.mxu0
      %v2509 = vadd.f32 0.0, %v2508
      %v2510 = vpop.f32.mrf.mxu0
      %2511 = vmatprep.mubr.f32.mxu0 0.0
      %2512 = vmatmul.mubr.f32.gmra.mxu0 %v880
      %v2513 = vpop.f32.mrf.mxu0
      %v2514 = vadd.f32 0.0, %v2513
      %v2515 = vpop.f32.mrf.mxu0
      %2516 = vmatprep.mubr.f32.mxu0 0.0
      %2517 = vmatmul.mubr.f32.gmra.mxu0 %v882
      %v2518 = vpop.f32.mrf.mxu0
      %v2519 = vadd.f32 0.0, %v2518
      %v2520 = vpop.f32.mrf.mxu0
      %2521 = vmatprep.mubr.f32.mxu0 0.0
      %2522 = vmatmul.mubr.f32.gmra.mxu0 %v884
      %v2523 = vpop.f32.mrf.mxu0
      %v2524 = vadd.f32 0.0, %v2523
      %v2525 = vpop.f32.mrf.mxu0
      %2526 = vmatprep.mubr.f32.mxu0 0.0
      %2527 = vmatmul.mubr.f32.gmra.mxu0 %v886
      %v2528 = vpop.f32.mrf.mxu0
      %v2529 = vadd.f32 0.0, %v2528
      %v2530 = vpop.f32.mrf.mxu0
      %2531 = vmatprep.mubr.f32.mxu0 0.0
      %2532 = vmatmul.mubr.f32.gmra.mxu0 %v888
      %v2533 = vpop.f32.mrf.mxu0
      %v2534 = vadd.f32 0.0, %v2533
      %v2535 = vpop.f32.mrf.mxu0
      %2536 = vmatprep.mubr.f32.mxu0 0.0
      %2537 = vmatmul.mubr.f32.gmra.mxu0 %v890
      %v2538 = vpop.f32.mrf.mxu0
      %v2539 = vadd.f32 0.0, %v2538
      %v2540 = vpop.f32.mrf.mxu0
      %2541 = vmatprep.mubr.f32.mxu0 0.0
      %2542 = vmatmul.mubr.f32.gmra.mxu0 %v892
      %v2543 = vpop.f32.mrf.mxu0
      %v2544 = vadd.f32 0.0, %v2543
      %v2545 = vpop.f32.mrf.mxu0
      %2546 = vmatprep.mubr.f32.mxu0 0.0
      %2547 = vmatmul.mubr.f32.gmra.mxu0 %v894
      %v2548 = vpop.f32.mrf.mxu0
      %v2549 = vadd.f32 0.0, %v2548
      %v2550 = vpop.f32.mrf.mxu0
      %2551 = vmatprep.mubr.f32.mxu0 0.0
      %2552 = vmatmul.mubr.f32.gmra.mxu0 %v896
      %v2553 = vpop.f32.mrf.mxu0
      %v2554 = vadd.f32 0.0, %v2553
      %v2555 = vpop.f32.mrf.mxu0
      %2556 = vmatprep.mubr.f32.mxu0 0.0
      %2557 = vmatmul.mubr.f32.gmra.mxu0 %v898
      %v2558 = vpop.f32.mrf.mxu0
      %v2559 = vadd.f32 0.0, %v2558
      %v2560 = vpop.f32.mrf.mxu0
      %2561 = vmatprep.mubr.f32.mxu0 0.0
      %2562 = vmatmul.mubr.f32.gmra.mxu0 %v1538
      %v2563 = vpop.f32.mrf.mxu0
      %v2564 = vadd.f32 0.0, %v2563
      %v2565 = vpop.f32.mrf.mxu0
      %2566 = vmatprep.mubr.f32.mxu0 0.0
      %2567 = vmatmul.mubr.f32.gmra.mxu0 %v1541
      %v2568 = vpop.f32.mrf.mxu0
      %v2569 = vadd.f32 0.0, %v2568
      %v2570 = vpop.f32.mrf.mxu0
      %2571 = vmatprep.mubr.f32.mxu0 0.0
      %2572 = vmatmul.mubr.f32.gmra.mxu0 %v2349
      %v2573 = vpop.f32.mrf.mxu0
      %v2574 = vadd.f32 0.0, %v2573
      %v2575 = vpop.f32.mrf.mxu0
      %2576 = vmatprep.mubr.f32.mxu0 0.0
      %2577 = vmatmul.mubr.f32.gmra.mxu0 %v2352
      %v2578 = vpop.f32.mrf.mxu0
      %v2579 = vadd.f32 0.0, %v2578
      %v2580 = vpop.f32.mrf.mxu0
      %2581 = vdwg.mxu0
      %v2582 = vadd.f32 %v2314, %v2424
      %v2583 = vadd.f32 %v2315, %v2429
      %v2584 = vadd.f32 %v2316, %v2434
      %v2585 = vadd.f32 %v2317, %v2439
      %v2586 = vadd.f32 %v2318, %v2444
      %v2587 = vadd.f32 %v2319, %v2449
      %v2588 = vadd.f32 %v2320, %v2454
      %v2589 = vadd.f32 %v2321, %v2459
      %v2590 = vadd.f32 %v2322, %v2464
      %v2591 = vadd.f32 %v2323, %v2469
      %v2592 = vadd.f32 %v2324, %v2474
      %v2593 = vadd.f32 %v2325, %v2479
      %v2594 = vadd.f32 %v2326, %v2484
      %v2595 = vadd.f32 %v2327, %v2489
      %v2596 = vadd.f32 %v2328, %v2494
      %v2597 = vadd.f32 %v2329, %v2499
      %v2598 = vadd.f32 %v2330, %v2504
      %v2599 = vadd.f32 %v2331, %v2509
      %v2600 = vadd.f32 %v2332, %v2514
      %v2601 = vadd.f32 %v2333, %v2519
      %v2602 = vadd.f32 %v2334, %v2524
      %v2603 = vadd.f32 %v2335, %v2529
      %v2604 = vadd.f32 %v2336, %v2534
      %v2605 = vadd.f32 %v2337, %v2539
      %v2606 = vadd.f32 %v2338, %v2544
      %v2607 = vadd.f32 %v2339, %v2549
      %v2608 = vadd.f32 %v2340, %v2554
      %v2609 = vadd.f32 %v2341, %v2559
      %v2610 = vadd.f32 %v2342, %v2564
      %v2611 = vadd.f32 %v2343, %v2569
      %v2612 = vadd.f32 %v2344, %v2574
      %v2613 = vadd.f32 %v2345, %v2579
      %v2615 = vrot.slane %v407, 1
      %v2616 = vrot.slane %v408, 1
      %v2617 = vsel %vm459, %v2615, %v2616
      %v2618 = vrot.slane %v409, 1
      %v2619 = vsel %vm459, %v2616, %v2618
      %s2620 = scalar_lea.vmem %s0, 28
      %v2621 = vld [vmem:[%s2620] sm:$0xf]
      %v2622 = vsel %vm542, %v2617, 0
      %v2624 = vsel %vm542, %v2619, 0
      %v2627 = vsel %vm607, %v2621, 0
      %2629 = vmatprep.subr.mxu0 0.0
      %2630 = vmatpush1.msra.mxu0 0.0
      %2631 = vmatprep.subr.mxu0 0.0
      %2632 = vmatpush1.msra.mxu0 0.0
      %2633 = vmatprep.subr.mxu0 0.0
      %2634 = vmatpush1.msra.mxu0 0.0
      %2635 = vmatprep.subr.mxu0 0.0
      %2636 = vmatpush1.msra.mxu0 0.0
      %2637 = vmatprep.subr.mxu0 0.0
      %2638 = vmatpush1.msra.mxu0 0.0
      %2639 = vmatprep.subr.mxu0 0.0
      %2640 = vmatpush1.msra.mxu0 0.0
      %2641 = vmatprep.subr.mxu0 0.0
      %2642 = vmatpush1.msra.mxu0 0.0
      %2643 = vmatprep.subr.mxu0 0.0
      %2644 = vmatpush1.msra.mxu0 0.0
      %2645 = vmatprep.subr.mxu0 0.0
      %2646 = vmatpush1.msra.mxu0 0.0
      %2647 = vmatprep.subr.mxu0 0.0
      %2648 = vmatpush1.msra.mxu0 0.0
      %2649 = vmatprep.subr.mxu0 0.0
      %2650 = vmatpush1.msra.mxu0 0.0
      %2651 = vmatprep.subr.mxu0 0.0
      %2652 = vmatpush1.msra.mxu0 0.0
      %2653 = vmatprep.subr.mxu0 0.0
      %2654 = vmatpush1.msra.mxu0 0.0
      %2655 = vmatprep.subr.mxu0 0.0
      %2656 = vmatpush1.msra.mxu0 0.0
      %2657 = vmatprep.subr.mxu0 0.0
      %2658 = vmatpush1.msra.mxu0 0.0
      %2659 = vmatprep.subr.mxu0 0.0
      %2660 = vmatpush1.msra.mxu0 %v2627
      %2661 = vmatprep.subr.mxu0 0.0
      %2662 = vmatpush2.msra.mxu0 0.0
      %2663 = vmatprep.subr.mxu0 0.0
      %2664 = vmatpush2.msra.mxu0 0.0
      %2665 = vmatprep.subr.mxu0 0.0
      %2666 = vmatpush2.msra.mxu0 0.0
      %2667 = vmatprep.subr.mxu0 0.0
      %2668 = vmatpush2.msra.mxu0 0.0
      %2669 = vmatprep.subr.mxu0 0.0
      %2670 = vmatpush2.msra.mxu0 0.0
      %2671 = vmatprep.subr.mxu0 0.0
      %2672 = vmatpush2.msra.mxu0 0.0
      %2673 = vmatprep.subr.mxu0 0.0
      %2674 = vmatpush2.msra.mxu0 0.0
      %2675 = vmatprep.subr.mxu0 0.0
      %2676 = vmatpush2.msra.mxu0 0.0
      %2677 = vmatprep.subr.mxu0 0.0
      %2678 = vmatpush2.msra.mxu0 0.0
      %2679 = vmatprep.subr.mxu0 0.0
      %2680 = vmatpush2.msra.mxu0 0.0
      %2681 = vmatprep.subr.mxu0 0.0
      %2682 = vmatpush2.msra.mxu0 0.0
      %2683 = vmatprep.subr.mxu0 0.0
      %2684 = vmatpush2.msra.mxu0 0.0
      %2685 = vmatprep.subr.mxu0 0.0
      %2686 = vmatpush2.msra.mxu0 0.0
      %2687 = vmatprep.subr.mxu0 0.0
      %2688 = vmatpush2.msra.mxu0 0.0
      %2689 = vmatprep.subr.mxu0 0.0
      %2690 = vmatpush2.msra.mxu0 0.0
      %2691 = vmatprep.subr.mxu0 0.0
      %2692 = vmatpush2.msra.mxu0 0.0
      %2693 = vmatprep.mubr.f32.mxu0 0.0
      %2694 = vmatmul.mubr.f32.gmra.mxu0 %v551
      %v2695 = vpop.f32.mrf.mxu0
      %v2696 = vadd.f32 0.0, %v2695
      %v2697 = vpop.f32.mrf.mxu0
      %2698 = vmatprep.mubr.f32.mxu0 0.0
      %2699 = vmatmul.mubr.f32.gmra.mxu0 %v553
      %v2700 = vpop.f32.mrf.mxu0
      %v2701 = vadd.f32 0.0, %v2700
      %v2702 = vpop.f32.mrf.mxu0
      %2703 = vmatprep.mubr.f32.mxu0 0.0
      %2704 = vmatmul.mubr.f32.gmra.mxu0 %v555
      %v2705 = vpop.f32.mrf.mxu0
      %v2706 = vadd.f32 0.0, %v2705
      %v2707 = vpop.f32.mrf.mxu0
      %2708 = vmatprep.mubr.f32.mxu0 0.0
      %2709 = vmatmul.mubr.f32.gmra.mxu0 %v557
      %v2710 = vpop.f32.mrf.mxu0
      %v2711 = vadd.f32 0.0, %v2710
      %v2712 = vpop.f32.mrf.mxu0
      %2713 = vmatprep.mubr.f32.mxu0 0.0
      %2714 = vmatmul.mubr.f32.gmra.mxu0 %v559
      %v2715 = vpop.f32.mrf.mxu0
      %v2716 = vadd.f32 0.0, %v2715
      %v2717 = vpop.f32.mrf.mxu0
      %2718 = vmatprep.mubr.f32.mxu0 0.0
      %2719 = vmatmul.mubr.f32.gmra.mxu0 %v561
      %v2720 = vpop.f32.mrf.mxu0
      %v2721 = vadd.f32 0.0, %v2720
      %v2722 = vpop.f32.mrf.mxu0
      %2723 = vmatprep.mubr.f32.mxu0 0.0
      %2724 = vmatmul.mubr.f32.gmra.mxu0 %v563
      %v2725 = vpop.f32.mrf.mxu0
      %v2726 = vadd.f32 0.0, %v2725
      %v2727 = vpop.f32.mrf.mxu0
      %2728 = vmatprep.mubr.f32.mxu0 0.0
      %2729 = vmatmul.mubr.f32.gmra.mxu0 %v565
      %v2730 = vpop.f32.mrf.mxu0
      %v2731 = vadd.f32 0.0, %v2730
      %v2732 = vpop.f32.mrf.mxu0
      %2733 = vmatprep.mubr.f32.mxu0 0.0
      %2734 = vmatmul.mubr.f32.gmra.mxu0 %v567
      %v2735 = vpop.f32.mrf.mxu0
      %v2736 = vadd.f32 0.0, %v2735
      %v2737 = vpop.f32.mrf.mxu0
      %2738 = vmatprep.mubr.f32.mxu0 0.0
      %2739 = vmatmul.mubr.f32.gmra.mxu0 %v569
      %v2740 = vpop.f32.mrf.mxu0
      %v2741 = vadd.f32 0.0, %v2740
      %v2742 = vpop.f32.mrf.mxu0
      %2743 = vmatprep.mubr.f32.mxu0 0.0
      %2744 = vmatmul.mubr.f32.gmra.mxu0 %v571
      %v2745 = vpop.f32.mrf.mxu0
      %v2746 = vadd.f32 0.0, %v2745
      %v2747 = vpop.f32.mrf.mxu0
      %2748 = vmatprep.mubr.f32.mxu0 0.0
      %2749 = vmatmul.mubr.f32.gmra.mxu0 %v573
      %v2750 = vpop.f32.mrf.mxu0
      %v2751 = vadd.f32 0.0, %v2750
      %v2752 = vpop.f32.mrf.mxu0
      %2753 = vmatprep.mubr.f32.mxu0 0.0
      %2754 = vmatmul.mubr.f32.gmra.mxu0 %v575
      %v2755 = vpop.f32.mrf.mxu0
      %v2756 = vadd.f32 0.0, %v2755
      %v2757 = vpop.f32.mrf.mxu0
      %2758 = vmatprep.mubr.f32.mxu0 0.0
      %2759 = vmatmul.mubr.f32.gmra.mxu0 %v577
      %v2760 = vpop.f32.mrf.mxu0
      %v2761 = vadd.f32 0.0, %v2760
      %v2762 = vpop.f32.mrf.mxu0
      %2763 = vmatprep.mubr.f32.mxu0 0.0
      %2764 = vmatmul.mubr.f32.gmra.mxu0 %v579
      %v2765 = vpop.f32.mrf.mxu0
      %v2766 = vadd.f32 0.0, %v2765
      %v2767 = vpop.f32.mrf.mxu0
      %2768 = vmatprep.mubr.f32.mxu0 0.0
      %2769 = vmatmul.mubr.f32.gmra.mxu0 %v581
      %v2770 = vpop.f32.mrf.mxu0
      %v2771 = vadd.f32 0.0, %v2770
      %v2772 = vpop.f32.mrf.mxu0
      %2773 = vmatprep.mubr.f32.mxu0 0.0
      %2774 = vmatmul.mubr.f32.gmra.mxu0 %v583
      %v2775 = vpop.f32.mrf.mxu0
      %v2776 = vadd.f32 0.0, %v2775
      %v2777 = vpop.f32.mrf.mxu0
      %2778 = vmatprep.mubr.f32.mxu0 0.0
      %2779 = vmatmul.mubr.f32.gmra.mxu0 %v585
      %v2780 = vpop.f32.mrf.mxu0
      %v2781 = vadd.f32 0.0, %v2780
      %v2782 = vpop.f32.mrf.mxu0
      %2783 = vmatprep.mubr.f32.mxu0 0.0
      %2784 = vmatmul.mubr.f32.gmra.mxu0 %v587
      %v2785 = vpop.f32.mrf.mxu0
      %v2786 = vadd.f32 0.0, %v2785
      %v2787 = vpop.f32.mrf.mxu0
      %2788 = vmatprep.mubr.f32.mxu0 0.0
      %2789 = vmatmul.mubr.f32.gmra.mxu0 %v589
      %v2790 = vpop.f32.mrf.mxu0
      %v2791 = vadd.f32 0.0, %v2790
      %v2792 = vpop.f32.mrf.mxu0
      %2793 = vmatprep.mubr.f32.mxu0 0.0
      %2794 = vmatmul.mubr.f32.gmra.mxu0 %v591
      %v2795 = vpop.f32.mrf.mxu0
      %v2796 = vadd.f32 0.0, %v2795
      %v2797 = vpop.f32.mrf.mxu0
      %2798 = vmatprep.mubr.f32.mxu0 0.0
      %2799 = vmatmul.mubr.f32.gmra.mxu0 %v593
      %v2800 = vpop.f32.mrf.mxu0
      %v2801 = vadd.f32 0.0, %v2800
      %v2802 = vpop.f32.mrf.mxu0
      %2803 = vmatprep.mubr.f32.mxu0 0.0
      %2804 = vmatmul.mubr.f32.gmra.mxu0 %v595
      %v2805 = vpop.f32.mrf.mxu0
      %v2806 = vadd.f32 0.0, %v2805
      %v2807 = vpop.f32.mrf.mxu0
      %2808 = vmatprep.mubr.f32.mxu0 0.0
      %2809 = vmatmul.mubr.f32.gmra.mxu0 %v597
      %v2810 = vpop.f32.mrf.mxu0
      %v2811 = vadd.f32 0.0, %v2810
      %v2812 = vpop.f32.mrf.mxu0
      %2813 = vmatprep.mubr.f32.mxu0 0.0
      %2814 = vmatmul.mubr.f32.gmra.mxu0 %v599
      %v2815 = vpop.f32.mrf.mxu0
      %v2816 = vadd.f32 0.0, %v2815
      %v2817 = vpop.f32.mrf.mxu0
      %2818 = vmatprep.mubr.f32.mxu0 0.0
      %2819 = vmatmul.mubr.f32.gmra.mxu0 %v601
      %v2820 = vpop.f32.mrf.mxu0
      %v2821 = vadd.f32 0.0, %v2820
      %v2822 = vpop.f32.mrf.mxu0
      %2823 = vmatprep.mubr.f32.mxu0 0.0
      %2824 = vmatmul.mubr.f32.gmra.mxu0 %v603
      %v2825 = vpop.f32.mrf.mxu0
      %v2826 = vadd.f32 0.0, %v2825
      %v2827 = vpop.f32.mrf.mxu0
      %2828 = vmatprep.mubr.f32.mxu0 0.0
      %2829 = vmatmul.mubr.f32.gmra.mxu0 %v605
      %v2830 = vpop.f32.mrf.mxu0
      %v2831 = vadd.f32 0.0, %v2830
      %v2832 = vpop.f32.mrf.mxu0
      %2833 = vmatprep.mubr.f32.mxu0 0.0
      %2834 = vmatmul.mubr.f32.gmra.mxu0 %v1811
      %v2835 = vpop.f32.mrf.mxu0
      %v2836 = vadd.f32 0.0, %v2835
      %v2837 = vpop.f32.mrf.mxu0
      %2838 = vmatprep.mubr.f32.mxu0 0.0
      %2839 = vmatmul.mubr.f32.gmra.mxu0 %v1813
      %v2840 = vpop.f32.mrf.mxu0
      %v2841 = vadd.f32 0.0, %v2840
      %v2842 = vpop.f32.mrf.mxu0
      %2843 = vmatprep.mubr.f32.mxu0 0.0
      %2844 = vmatmul.mubr.f32.gmra.mxu0 %v2622
      %v2845 = vpop.f32.mrf.mxu0
      %v2846 = vadd.f32 0.0, %v2845
      %v2847 = vpop.f32.mrf.mxu0
      %2848 = vmatprep.mubr.f32.mxu0 0.0
      %2849 = vmatmul.mubr.f32.gmra.mxu0 %v2624
      %v2850 = vpop.f32.mrf.mxu0
      %v2851 = vadd.f32 0.0, %v2850
      %v2852 = vpop.f32.mrf.mxu0
      %2853 = vdwg.mxu0
      %v2854 = vadd.f32 %v2582, %v2696
      %v2855 = vadd.f32 %v2583, %v2701
      %v2856 = vadd.f32 %v2584, %v2706
      %v2857 = vadd.f32 %v2585, %v2711
      %v2858 = vadd.f32 %v2586, %v2716
      %v2859 = vadd.f32 %v2587, %v2721
      %v2860 = vadd.f32 %v2588, %v2726
      %v2861 = vadd.f32 %v2589, %v2731
      %v2862 = vadd.f32 %v2590, %v2736
      %v2863 = vadd.f32 %v2591, %v2741
      %v2864 = vadd.f32 %v2592, %v2746
      %v2865 = vadd.f32 %v2593, %v2751
      %v2866 = vadd.f32 %v2594, %v2756
      %v2867 = vadd.f32 %v2595, %v2761
      %v2868 = vadd.f32 %v2596, %v2766
      %v2869 = vadd.f32 %v2597, %v2771
      %v2870 = vadd.f32 %v2598, %v2776
      %v2871 = vadd.f32 %v2599, %v2781
      %v2872 = vadd.f32 %v2600, %v2786
      %v2873 = vadd.f32 %v2601, %v2791
      %v2874 = vadd.f32 %v2602, %v2796
      %v2875 = vadd.f32 %v2603, %v2801
      %v2876 = vadd.f32 %v2604, %v2806
      %v2877 = vadd.f32 %v2605, %v2811
      %v2878 = vadd.f32 %v2606, %v2816
      %v2879 = vadd.f32 %v2607, %v2821
      %v2880 = vadd.f32 %v2608, %v2826
      %v2881 = vadd.f32 %v2609, %v2831
      %v2882 = vadd.f32 %v2610, %v2836
      %v2883 = vadd.f32 %v2611, %v2841
      %v2884 = vadd.f32 %v2612, %v2846
      %v2885 = vadd.f32 %v2613, %v2851
      %v2886 = vrot.slane %v407, 2
      %v2887 = vrot.slane %v408, 2
      %v2888 = vsel %vm1128, %v2886, %v2887
      %v2889 = vrot.slane %v409, 2
      %v2890 = vsel %vm1128, %v2887, %v2889
      %s2891 = scalar_lea.vmem %s0, 32
      %v2892 = vld [vmem:[%s2891] sm:$0xf]
      %v2893 = vsel %vm542, %v2888, 0
      %v2895 = vsel %vm542, %v2890, 0
      %v2898 = vsel %vm607, %v2892, 0
      %2900 = vmatprep.subr.mxu0 0.0
      %2901 = vmatpush1.msra.mxu0 0.0
      %2902 = vmatprep.subr.mxu0 0.0
      %2903 = vmatpush1.msra.mxu0 0.0
      %2904 = vmatprep.subr.mxu0 0.0
      %2905 = vmatpush1.msra.mxu0 0.0
      %2906 = vmatprep.subr.mxu0 0.0
      %2907 = vmatpush1.msra.mxu0 0.0
      %2908 = vmatprep.subr.mxu0 0.0
      %2909 = vmatpush1.msra.mxu0 0.0
      %2910 = vmatprep.subr.mxu0 0.0
      %2911 = vmatpush1.msra.mxu0 0.0
      %2912 = vmatprep.subr.mxu0 0.0
      %2913 = vmatpush1.msra.mxu0 0.0
      %2914 = vmatprep.subr.mxu0 0.0
      %2915 = vmatpush1.msra.mxu0 0.0
      %2916 = vmatprep.subr.mxu0 0.0
      %2917 = vmatpush1.msra.mxu0 0.0
      %2918 = vmatprep.subr.mxu0 0.0
      %2919 = vmatpush1.msra.mxu0 0.0
      %2920 = vmatprep.subr.mxu0 0.0
      %2921 = vmatpush1.msra.mxu0 0.0
      %2922 = vmatprep.subr.mxu0 0.0
      %2923 = vmatpush1.msra.mxu0 0.0
      %2924 = vmatprep.subr.mxu0 0.0
      %2925 = vmatpush1.msra.mxu0 0.0
      %2926 = vmatprep.subr.mxu0 0.0
      %2927 = vmatpush1.msra.mxu0 0.0
      %2928 = vmatprep.subr.mxu0 0.0
      %2929 = vmatpush1.msra.mxu0 0.0
      %2930 = vmatprep.subr.mxu0 0.0
      %2931 = vmatpush1.msra.mxu0 %v2898
      %2932 = vmatprep.subr.mxu0 0.0
      %2933 = vmatpush2.msra.mxu0 0.0
      %2934 = vmatprep.subr.mxu0 0.0
      %2935 = vmatpush2.msra.mxu0 0.0
      %2936 = vmatprep.subr.mxu0 0.0
      %2937 = vmatpush2.msra.mxu0 0.0
      %2938 = vmatprep.subr.mxu0 0.0
      %2939 = vmatpush2.msra.mxu0 0.0
      %2940 = vmatprep.subr.mxu0 0.0
      %2941 = vmatpush2.msra.mxu0 0.0
      %2942 = vmatprep.subr.mxu0 0.0
      %2943 = vmatpush2.msra.mxu0 0.0
      %2944 = vmatprep.subr.mxu0 0.0
      %2945 = vmatpush2.msra.mxu0 0.0
      %2946 = vmatprep.subr.mxu0 0.0
      %2947 = vmatpush2.msra.mxu0 0.0
      %2948 = vmatprep.subr.mxu0 0.0
      %2949 = vmatpush2.msra.mxu0 0.0
      %2950 = vmatprep.subr.mxu0 0.0
      %2951 = vmatpush2.msra.mxu0 0.0
      %2952 = vmatprep.subr.mxu0 0.0
      %2953 = vmatpush2.msra.mxu0 0.0
      %2954 = vmatprep.subr.mxu0 0.0
      %2955 = vmatpush2.msra.mxu0 0.0
      %2956 = vmatprep.subr.mxu0 0.0
      %2957 = vmatpush2.msra.mxu0 0.0
      %2958 = vmatprep.subr.mxu0 0.0
      %2959 = vmatpush2.msra.mxu0 0.0
      %2960 = vmatprep.subr.mxu0 0.0
      %2961 = vmatpush2.msra.mxu0 0.0
      %2962 = vmatprep.subr.mxu0 0.0
      %2963 = vmatpush2.msra.mxu0 0.0
      %2964 = vmatprep.mubr.f32.mxu0 0.0
      %2965 = vmatmul.mubr.f32.gmra.mxu0 %v1219
      %v2966 = vpop.f32.mrf.mxu0
      %v2967 = vadd.f32 0.0, %v2966
      %v2968 = vpop.f32.mrf.mxu0
      %2969 = vmatprep.mubr.f32.mxu0 0.0
      %2970 = vmatmul.mubr.f32.gmra.mxu0 %v1221
      %v2971 = vpop.f32.mrf.mxu0
      %v2972 = vadd.f32 0.0, %v2971
      %v2973 = vpop.f32.mrf.mxu0
      %2974 = vmatprep.mubr.f32.mxu0 0.0
      %2975 = vmatmul.mubr.f32.gmra.mxu0 %v1223
      %v2976 = vpop.f32.mrf.mxu0
      %v2977 = vadd.f32 0.0, %v2976
      %v2978 = vpop.f32.mrf.mxu0
      %2979 = vmatprep.mubr.f32.mxu0 0.0
      %2980 = vmatmul.mubr.f32.gmra.mxu0 %v1225
      %v2981 = vpop.f32.mrf.mxu0
      %v2982 = vadd.f32 0.0, %v2981
      %v2983 = vpop.f32.mrf.mxu0
      %2984 = vmatprep.mubr.f32.mxu0 0.0
      %2985 = vmatmul.mubr.f32.gmra.mxu0 %v1227
      %v2986 = vpop.f32.mrf.mxu0
      %v2987 = vadd.f32 0.0, %v2986
      %v2988 = vpop.f32.mrf.mxu0
      %2989 = vmatprep.mubr.f32.mxu0 0.0
      %2990 = vmatmul.mubr.f32.gmra.mxu0 %v1229
      %v2991 = vpop.f32.mrf.mxu0
      %v2992 = vadd.f32 0.0, %v2991
      %v2993 = vpop.f32.mrf.mxu0
      %2994 = vmatprep.mubr.f32.mxu0 0.0
      %2995 = vmatmul.mubr.f32.gmra.mxu0 %v1231
      %v2996 = vpop.f32.mrf.mxu0
      %v2997 = vadd.f32 0.0, %v2996
      %v2998 = vpop.f32.mrf.mxu0
      %2999 = vmatprep.mubr.f32.mxu0 0.0
      %3000 = vmatmul.mubr.f32.gmra.mxu0 %v1233
      %v3001 = vpop.f32.mrf.mxu0
      %v3002 = vadd.f32 0.0, %v3001
      %v3003 = vpop.f32.mrf.mxu0
      %3004 = vmatprep.mubr.f32.mxu0 0.0
      %3005 = vmatmul.mubr.f32.gmra.mxu0 %v1235
      %v3006 = vpop.f32.mrf.mxu0
      %v3007 = vadd.f32 0.0, %v3006
      %v3008 = vpop.f32.mrf.mxu0
      %3009 = vmatprep.mubr.f32.mxu0 0.0
      %3010 = vmatmul.mubr.f32.gmra.mxu0 %v1237
      %v3011 = vpop.f32.mrf.mxu0
      %v3012 = vadd.f32 0.0, %v3011
      %v3013 = vpop.f32.mrf.mxu0
      %3014 = vmatprep.mubr.f32.mxu0 0.0
      %3015 = vmatmul.mubr.f32.gmra.mxu0 %v1239
      %v3016 = vpop.f32.mrf.mxu0
      %v3017 = vadd.f32 0.0, %v3016
      %v3018 = vpop.f32.mrf.mxu0
      %3019 = vmatprep.mubr.f32.mxu0 0.0
      %3020 = vmatmul.mubr.f32.gmra.mxu0 %v1241
      %v3021 = vpop.f32.mrf.mxu0
      %v3022 = vadd.f32 0.0, %v3021
      %v3023 = vpop.f32.mrf.mxu0
      %3024 = vmatprep.mubr.f32.mxu0 0.0
      %3025 = vmatmul.mubr.f32.gmra.mxu0 %v1243
      %v3026 = vpop.f32.mrf.mxu0
      %v3027 = vadd.f32 0.0, %v3026
      %v3028 = vpop.f32.mrf.mxu0
      %3029 = vmatprep.mubr.f32.mxu0 0.0
      %3030 = vmatmul.mubr.f32.gmra.mxu0 %v1245
      %v3031 = vpop.f32.mrf.mxu0
      %v3032 = vadd.f32 0.0, %v3031
      %v3033 = vpop.f32.mrf.mxu0
      %3034 = vmatprep.mubr.f32.mxu0 0.0
      %3035 = vmatmul.mubr.f32.gmra.mxu0 %v1247
      %v3036 = vpop.f32.mrf.mxu0
      %v3037 = vadd.f32 0.0, %v3036
      %v3038 = vpop.f32.mrf.mxu0
      %3039 = vmatprep.mubr.f32.mxu0 0.0
      %3040 = vmatmul.mubr.f32.gmra.mxu0 %v1249
      %v3041 = vpop.f32.mrf.mxu0
      %v3042 = vadd.f32 0.0, %v3041
      %v3043 = vpop.f32.mrf.mxu0
      %3044 = vmatprep.mubr.f32.mxu0 0.0
      %3045 = vmatmul.mubr.f32.gmra.mxu0 %v1251
      %v3046 = vpop.f32.mrf.mxu0
      %v3047 = vadd.f32 0.0, %v3046
      %v3048 = vpop.f32.mrf.mxu0
      %3049 = vmatprep.mubr.f32.mxu0 0.0
      %3050 = vmatmul.mubr.f32.gmra.mxu0 %v1253
      %v3051 = vpop.f32.mrf.mxu0
      %v3052 = vadd.f32 0.0, %v3051
      %v3053 = vpop.f32.mrf.mxu0
      %3054 = vmatprep.mubr.f32.mxu0 0.0
      %3055 = vmatmul.mubr.f32.gmra.mxu0 %v1255
      %v3056 = vpop.f32.mrf.mxu0
      %v3057 = vadd.f32 0.0, %v3056
      %v3058 = vpop.f32.mrf.mxu0
      %3059 = vmatprep.mubr.f32.mxu0 0.0
      %3060 = vmatmul.mubr.f32.gmra.mxu0 %v1257
      %v3061 = vpop.f32.mrf.mxu0
      %v3062 = vadd.f32 0.0, %v3061
      %v3063 = vpop.f32.mrf.mxu0
      %3064 = vmatprep.mubr.f32.mxu0 0.0
      %3065 = vmatmul.mubr.f32.gmra.mxu0 %v1259
      %v3066 = vpop.f32.mrf.mxu0
      %v3067 = vadd.f32 0.0, %v3066
      %v3068 = vpop.f32.mrf.mxu0
      %3069 = vmatprep.mubr.f32.mxu0 0.0
      %3070 = vmatmul.mubr.f32.gmra.mxu0 %v1261
      %v3071 = vpop.f32.mrf.mxu0
      %v3072 = vadd.f32 0.0, %v3071
      %v3073 = vpop.f32.mrf.mxu0
      %3074 = vmatprep.mubr.f32.mxu0 0.0
      %3075 = vmatmul.mubr.f32.gmra.mxu0 %v1263
      %v3076 = vpop.f32.mrf.mxu0
      %v3077 = vadd.f32 0.0, %v3076
      %v3078 = vpop.f32.mrf.mxu0
      %3079 = vmatprep.mubr.f32.mxu0 0.0
      %3080 = vmatmul.mubr.f32.gmra.mxu0 %v1265
      %v3081 = vpop.f32.mrf.mxu0
      %v3082 = vadd.f32 0.0, %v3081
      %v3083 = vpop.f32.mrf.mxu0
      %3084 = vmatprep.mubr.f32.mxu0 0.0
      %3085 = vmatmul.mubr.f32.gmra.mxu0 %v1267
      %v3086 = vpop.f32.mrf.mxu0
      %v3087 = vadd.f32 0.0, %v3086
      %v3088 = vpop.f32.mrf.mxu0
      %3089 = vmatprep.mubr.f32.mxu0 0.0
      %3090 = vmatmul.mubr.f32.gmra.mxu0 %v1269
      %v3091 = vpop.f32.mrf.mxu0
      %v3092 = vadd.f32 0.0, %v3091
      %v3093 = vpop.f32.mrf.mxu0
      %3094 = vmatprep.mubr.f32.mxu0 0.0
      %3095 = vmatmul.mubr.f32.gmra.mxu0 %v1271
      %v3096 = vpop.f32.mrf.mxu0
      %v3097 = vadd.f32 0.0, %v3096
      %v3098 = vpop.f32.mrf.mxu0
      %3099 = vmatprep.mubr.f32.mxu0 0.0
      %3100 = vmatmul.mubr.f32.gmra.mxu0 %v1273
      %v3101 = vpop.f32.mrf.mxu0
      %v3102 = vadd.f32 0.0, %v3101
      %v3103 = vpop.f32.mrf.mxu0
      %3104 = vmatprep.mubr.f32.mxu0 0.0
      %3105 = vmatmul.mubr.f32.gmra.mxu0 %v2082
      %v3106 = vpop.f32.mrf.mxu0
      %v3107 = vadd.f32 0.0, %v3106
      %v3108 = vpop.f32.mrf.mxu0
      %3109 = vmatprep.mubr.f32.mxu0 0.0
      %3110 = vmatmul.mubr.f32.gmra.mxu0 %v2084
      %v3111 = vpop.f32.mrf.mxu0
      %v3112 = vadd.f32 0.0, %v3111
      %v3113 = vpop.f32.mrf.mxu0
      %3114 = vmatprep.mubr.f32.mxu0 0.0
      %3115 = vmatmul.mubr.f32.gmra.mxu0 %v2893
      %v3116 = vpop.f32.mrf.mxu0
      %v3117 = vadd.f32 0.0, %v3116
      %v3118 = vpop.f32.mrf.mxu0
      %3119 = vmatprep.mubr.f32.mxu0 0.0
      %3120 = vmatmul.mubr.f32.gmra.mxu0 %v2895
      %v3121 = vpop.f32.mrf.mxu0
      %v3122 = vadd.f32 0.0, %v3121
      %v3123 = vpop.f32.mrf.mxu0
      %3124 = vdwg.mxu0
      %v3125 = vadd.f32 %v2854, %v2967
      %v3126 = vadd.f32 %v2855, %v2972
      %v3127 = vadd.f32 %v2856, %v2977
      %v3128 = vadd.f32 %v2857, %v2982
      %v3129 = vadd.f32 %v2858, %v2987
      %v3130 = vadd.f32 %v2859, %v2992
      %v3131 = vadd.f32 %v2860, %v2997
      %v3132 = vadd.f32 %v2861, %v3002
      %v3133 = vadd.f32 %v2862, %v3007
      %v3134 = vadd.f32 %v2863, %v3012
      %v3135 = vadd.f32 %v2864, %v3017
      %v3136 = vadd.f32 %v2865, %v3022
      %v3137 = vadd.f32 %v2866, %v3027
      %v3138 = vadd.f32 %v2867, %v3032
      %v3139 = vadd.f32 %v2868, %v3037
      %v3140 = vadd.f32 %v2869, %v3042
      %v3141 = vadd.f32 %v2870, %v3047
      %v3142 = vadd.f32 %v2871, %v3052
      %v3143 = vadd.f32 %v2872, %v3057
      %v3144 = vadd.f32 %v2873, %v3062
      %v3145 = vadd.f32 %v2874, %v3067
      %v3146 = vadd.f32 %v2875, %v3072
      %v3147 = vadd.f32 %v2876, %v3077
      %v3148 = vadd.f32 %v2877, %v3082
      %v3149 = vadd.f32 %v2878, %v3087
      %v3150 = vadd.f32 %v2879, %v3092
      %v3151 = vadd.f32 %v2880, %v3097
      %v3152 = vadd.f32 %v2881, %v3102
      %v3153 = vadd.f32 %v2882, %v3107
      %v3154 = vadd.f32 %v2883, %v3112
      %v3155 = vadd.f32 %v2884, %v3117
      %v3156 = vadd.f32 %v2885, %v3122
      %v3157 = vld [vmem:[%s1] sm:$0x1]
      %v3159 = vlaneseq
      %v3160 = vshrl.u32 %v3159, 7
      %v3161 = vsub.s32 0, %v3160
      %v3162 = vrot.slane %v3157, %v3161
      %v3164 = vadd.f32 %v3125, %v3162
      %v3165 = vadd.f32 %v3126, %v3162
      %v3166 = vadd.f32 %v3127, %v3162
      %v3167 = vadd.f32 %v3128, %v3162
      %v3168 = vadd.f32 %v3129, %v3162
      %v3169 = vadd.f32 %v3130, %v3162
      %v3170 = vadd.f32 %v3131, %v3162
      %v3171 = vadd.f32 %v3132, %v3162
      %v3172 = vadd.f32 %v3133, %v3162
      %v3173 = vadd.f32 %v3134, %v3162
      %v3174 = vadd.f32 %v3135, %v3162
      %v3175 = vadd.f32 %v3136, %v3162
      %v3176 = vadd.f32 %v3137, %v3162
      %v3177 = vadd.f32 %v3138, %v3162
      %v3178 = vadd.f32 %v3139, %v3162
      %v3179 = vadd.f32 %v3140, %v3162
      %v3180 = vadd.f32 %v3141, %v3162
      %v3181 = vadd.f32 %v3142, %v3162
      %v3182 = vadd.f32 %v3143, %v3162
      %v3183 = vadd.f32 %v3144, %v3162
      %v3184 = vadd.f32 %v3145, %v3162
      %v3185 = vadd.f32 %v3146, %v3162
      %v3186 = vadd.f32 %v3147, %v3162
      %v3187 = vadd.f32 %v3148, %v3162
      %v3188 = vadd.f32 %v3149, %v3162
      %v3189 = vadd.f32 %v3150, %v3162
      %v3190 = vadd.f32 %v3151, %v3162
      %v3191 = vadd.f32 %v3152, %v3162
      %v3192 = vadd.f32 %v3153, %v3162
      %v3193 = vadd.f32 %v3154, %v3162
      %v3194 = vadd.f32 %v3155, %v3162
      %v3195 = vadd.f32 %v3156, %v3162
      %vm3196 = vcmp.ge.f32.partialorder %v3164, 0.0
      %vm3197 = vcmp.ge.f32.partialorder %v3165, 0.0
      %vm3198 = vcmp.ge.f32.partialorder %v3166, 0.0
      %vm3199 = vcmp.ge.f32.partialorder %v3167, 0.0
      %vm3200 = vcmp.ge.f32.partialorder %v3168, 0.0
      %vm3201 = vcmp.ge.f32.partialorder %v3169, 0.0
      %vm3202 = vcmp.ge.f32.partialorder %v3170, 0.0
      %vm3203 = vcmp.ge.f32.partialorder %v3171, 0.0
      %vm3204 = vcmp.ge.f32.partialorder %v3172, 0.0
      %vm3205 = vcmp.ge.f32.partialorder %v3173, 0.0
      %vm3206 = vcmp.ge.f32.partialorder %v3174, 0.0
      %vm3207 = vcmp.ge.f32.partialorder %v3175, 0.0
      %vm3208 = vcmp.ge.f32.partialorder %v3176, 0.0
      %vm3209 = vcmp.ge.f32.partialorder %v3177, 0.0
      %vm3210 = vcmp.ge.f32.partialorder %v3178, 0.0
      %vm3211 = vcmp.ge.f32.partialorder %v3179, 0.0
      %vm3212 = vcmp.ge.f32.partialorder %v3180, 0.0
      %vm3213 = vcmp.ge.f32.partialorder %v3181, 0.0
      %vm3214 = vcmp.ge.f32.partialorder %v3182, 0.0
      %vm3215 = vcmp.ge.f32.partialorder %v3183, 0.0
      %vm3216 = vcmp.ge.f32.partialorder %v3184, 0.0
      %vm3217 = vcmp.ge.f32.partialorder %v3185, 0.0
      %vm3218 = vcmp.ge.f32.partialorder %v3186, 0.0
      %vm3219 = vcmp.ge.f32.partialorder %v3187, 0.0
      %vm3220 = vcmp.ge.f32.partialorder %v3188, 0.0
      %vm3221 = vcmp.ge.f32.partialorder %v3189, 0.0
      %vm3222 = vcmp.ge.f32.partialorder %v3190, 0.0
      %vm3223 = vcmp.ge.f32.partialorder %v3191, 0.0
      %vm3224 = vcmp.ge.f32.partialorder %v3192, 0.0
      %vm3225 = vcmp.ge.f32.partialorder %v3193, 0.0
      %vm3226 = vcmp.ge.f32.partialorder %v3194, 0.0
      %vm3227 = vcmp.ge.f32.partialorder %v3195, 0.0
      %v3228 = vmul.f32 %v3164, 0.2
      %v3229 = vmul.f32 %v3165, 0.2
      %v3230 = vmul.f32 %v3166, 0.2
      %v3231 = vmul.f32 %v3167, 0.2
      %v3232 = vmul.f32 %v3168, 0.2
      %v3233 = vmul.f32 %v3169, 0.2
      %v3234 = vmul.f32 %v3170, 0.2
      %v3235 = vmul.f32 %v3171, 0.2
      %v3236 = vmul.f32 %v3172, 0.2
      %v3237 = vmul.f32 %v3173, 0.2
      %v3238 = vmul.f32 %v3174, 0.2
      %v3239 = vmul.f32 %v3175, 0.2
      %v3240 = vmul.f32 %v3176, 0.2
      %v3241 = vmul.f32 %v3177, 0.2
      %v3242 = vmul.f32 %v3178, 0.2
      %v3243 = vmul.f32 %v3179, 0.2
      %v3244 = vmul.f32 %v3180, 0.2
      %v3245 = vmul.f32 %v3181, 0.2
      %v3246 = vmul.f32 %v3182, 0.2
      %v3247 = vmul.f32 %v3183, 0.2
      %v3248 = vmul.f32 %v3184, 0.2
      %v3249 = vmul.f32 %v3185, 0.2
      %v3250 = vmul.f32 %v3186, 0.2
      %v3251 = vmul.f32 %v3187, 0.2
      %v3252 = vmul.f32 %v3188, 0.2
      %v3253 = vmul.f32 %v3189, 0.2
      %v3254 = vmul.f32 %v3190, 0.2
      %v3255 = vmul.f32 %v3191, 0.2
      %v3256 = vmul.f32 %v3192, 0.2
      %v3257 = vmul.f32 %v3193, 0.2
      %v3258 = vmul.f32 %v3194, 0.2
      %v3259 = vmul.f32 %v3195, 0.2
      %v3260 = vsel %vm3196, %v3164, %v3228
      %v3261 = vsel %vm3197, %v3165, %v3229
      %v3262 = vsel %vm3198, %v3166, %v3230
      %v3263 = vsel %vm3199, %v3167, %v3231
      %v3264 = vsel %vm3200, %v3168, %v3232
      %v3265 = vsel %vm3201, %v3169, %v3233
      %v3266 = vsel %vm3202, %v3170, %v3234
      %v3267 = vsel %vm3203, %v3171, %v3235
      %v3268 = vsel %vm3204, %v3172, %v3236
      %v3269 = vsel %vm3205, %v3173, %v3237
      %v3270 = vsel %vm3206, %v3174, %v3238
      %v3271 = vsel %vm3207, %v3175, %v3239
      %v3272 = vsel %vm3208, %v3176, %v3240
      %v3273 = vsel %vm3209, %v3177, %v3241
      %v3274 = vsel %vm3210, %v3178, %v3242
      %v3275 = vsel %vm3211, %v3179, %v3243
      %v3276 = vsel %vm3212, %v3180, %v3244
      %v3277 = vsel %vm3213, %v3181, %v3245
      %v3278 = vsel %vm3214, %v3182, %v3246
      %v3279 = vsel %vm3215, %v3183, %v3247
      %v3280 = vsel %vm3216, %v3184, %v3248
      %v3281 = vsel %vm3217, %v3185, %v3249
      %v3282 = vsel %vm3218, %v3186, %v3250
      %v3283 = vsel %vm3219, %v3187, %v3251
      %v3284 = vsel %vm3220, %v3188, %v3252
      %v3285 = vsel %vm3221, %v3189, %v3253
      %v3286 = vsel %vm3222, %v3190, %v3254
      %v3287 = vsel %vm3223, %v3191, %v3255
      %v3288 = vsel %vm3224, %v3192, %v3256
      %v3289 = vsel %vm3225, %v3193, %v3257
      %v3290 = vsel %vm3226, %v3194, %v3258
      %v3291 = vsel %vm3227, %v3195, %v3259
      %vm3292 = vcmask 64512
      %v3293 = vsel %vm3292, %v3260, 0.0
      %v3294 = vsel %vm3292, %v3261, 0.0
      %v3295 = vadd.f32 %v3293, %v3294
      %v3296 = vsel %vm3292, %v3262, 0.0
      %v3297 = vadd.f32 %v3295, %v3296
      %v3298 = vsel %vm3292, %v3263, 0.0
      %v3299 = vadd.f32 %v3297, %v3298
      %v3300 = vsel %vm3292, %v3264, 0.0
      %v3301 = vadd.f32 %v3299, %v3300
      %v3302 = vsel %vm3292, %v3265, 0.0
      %v3303 = vadd.f32 %v3301, %v3302
      %v3304 = vsel %vm3292, %v3266, 0.0
      %v3305 = vadd.f32 %v3303, %v3304
      %v3306 = vsel %vm3292, %v3267, 0.0
      %v3307 = vadd.f32 %v3305, %v3306
      %v3308 = vsel %vm3292, %v3268, 0.0
      %v3309 = vadd.f32 %v3307, %v3308
      %v3310 = vsel %vm3292, %v3269, 0.0
      %v3311 = vadd.f32 %v3309, %v3310
      %v3312 = vsel %vm3292, %v3270, 0.0
      %v3313 = vadd.f32 %v3311, %v3312
      %v3314 = vsel %vm3292, %v3271, 0.0
      %v3315 = vadd.f32 %v3313, %v3314
      %v3316 = vsel %vm3292, %v3272, 0.0
      %v3317 = vadd.f32 %v3315, %v3316
      %v3318 = vsel %vm3292, %v3273, 0.0
      %v3319 = vadd.f32 %v3317, %v3318
      %v3320 = vsel %vm3292, %v3274, 0.0
      %v3321 = vadd.f32 %v3319, %v3320
      %v3322 = vsel %vm3292, %v3275, 0.0
      %v3323 = vadd.f32 %v3321, %v3322
      %v3324 = vsel %vm3292, %v3276, 0.0
      %v3325 = vadd.f32 %v3323, %v3324
      %v3326 = vsel %vm3292, %v3277, 0.0
      %v3327 = vadd.f32 %v3325, %v3326
      %v3328 = vsel %vm3292, %v3278, 0.0
      %v3329 = vadd.f32 %v3327, %v3328
      %v3330 = vsel %vm3292, %v3279, 0.0
      %v3331 = vadd.f32 %v3329, %v3330
      %v3332 = vsel %vm3292, %v3280, 0.0
      %v3333 = vadd.f32 %v3331, %v3332
      %v3334 = vsel %vm3292, %v3281, 0.0
      %v3335 = vadd.f32 %v3333, %v3334
      %v3336 = vsel %vm3292, %v3282, 0.0
      %v3337 = vadd.f32 %v3335, %v3336
      %v3338 = vsel %vm3292, %v3283, 0.0
      %v3339 = vadd.f32 %v3337, %v3338
      %v3340 = vsel %vm3292, %v3284, 0.0
      %v3341 = vadd.f32 %v3339, %v3340
      %v3342 = vsel %vm3292, %v3285, 0.0
      %v3343 = vadd.f32 %v3341, %v3342
      %v3344 = vsel %vm3292, %v3286, 0.0
      %v3345 = vadd.f32 %v3343, %v3344
      %v3346 = vsel %vm3292, %v3287, 0.0
      %v3347 = vadd.f32 %v3345, %v3346
      %v3348 = vsel %vm3292, %v3288, 0.0
      %v3349 = vadd.f32 %v3347, %v3348
      %v3350 = vsel %vm3292, %v3289, 0.0
      %v3351 = vadd.f32 %v3349, %v3350
      %v3352 = vsel %vm3292, %v3290, 0.0
      %v3353 = vadd.f32 %v3351, %v3352
      %v3354 = vsel %vm3292, %v3291, 0.0
      %v3355 = vadd.f32 %v3353, %v3354
      %v3356 = vrot.slane %v3355, 4
      %v3357 = vadd.f32 %v3355, %v3356
      %v3358 = vrot.slane %v3357, 2
      %v3359 = vadd.f32 %v3357, %v3358
      %v3360 = vrot.slane %v3359, 1
      %v3361 = vadd.f32 %v3359, %v3360
      %v3362 = vmul.f32 %v3260, %v3260
      %v3363 = vmul.f32 %v3261, %v3261
      %v3364 = vmul.f32 %v3262, %v3262
      %v3365 = vmul.f32 %v3263, %v3263
      %v3366 = vmul.f32 %v3264, %v3264
      %v3367 = vmul.f32 %v3265, %v3265
      %v3368 = vmul.f32 %v3266, %v3266
      %v3369 = vmul.f32 %v3267, %v3267
      %v3370 = vmul.f32 %v3268, %v3268
      %v3371 = vmul.f32 %v3269, %v3269
      %v3372 = vmul.f32 %v3270, %v3270
      %v3373 = vmul.f32 %v3271, %v3271
      %v3374 = vmul.f32 %v3272, %v3272
      %v3375 = vmul.f32 %v3273, %v3273
      %v3376 = vmul.f32 %v3274, %v3274
      %v3377 = vmul.f32 %v3275, %v3275
      %v3378 = vmul.f32 %v3276, %v3276
      %v3379 = vmul.f32 %v3277, %v3277
      %v3380 = vmul.f32 %v3278, %v3278
      %v3381 = vmul.f32 %v3279, %v3279
      %v3382 = vmul.f32 %v3280, %v3280
      %v3383 = vmul.f32 %v3281, %v3281
      %v3384 = vmul.f32 %v3282, %v3282
      %v3385 = vmul.f32 %v3283, %v3283
      %v3386 = vmul.f32 %v3284, %v3284
      %v3387 = vmul.f32 %v3285, %v3285
      %v3388 = vmul.f32 %v3286, %v3286
      %v3389 = vmul.f32 %v3287, %v3287
      %v3390 = vmul.f32 %v3288, %v3288
      %v3391 = vmul.f32 %v3289, %v3289
      %v3392 = vmul.f32 %v3290, %v3290
      %v3393 = vmul.f32 %v3291, %v3291
      %v3394 = vsel %vm3292, %v3362, 0.0
      %v3395 = vsel %vm3292, %v3363, 0.0
      %v3396 = vadd.f32 %v3394, %v3395
      %v3397 = vsel %vm3292, %v3364, 0.0
      %v3398 = vadd.f32 %v3396, %v3397
      %v3399 = vsel %vm3292, %v3365, 0.0
      %v3400 = vadd.f32 %v3398, %v3399
      %v3401 = vsel %vm3292, %v3366, 0.0
      %v3402 = vadd.f32 %v3400, %v3401
      %v3403 = vsel %vm3292, %v3367, 0.0
      %v3404 = vadd.f32 %v3402, %v3403
      %v3405 = vsel %vm3292, %v3368, 0.0
      %v3406 = vadd.f32 %v3404, %v3405
      %v3407 = vsel %vm3292, %v3369, 0.0
      %v3408 = vadd.f32 %v3406, %v3407
      %v3409 = vsel %vm3292, %v3370, 0.0
      %v3410 = vadd.f32 %v3408, %v3409
      %v3411 = vsel %vm3292, %v3371, 0.0
      %v3412 = vadd.f32 %v3410, %v3411
      %v3413 = vsel %vm3292, %v3372, 0.0
      %v3414 = vadd.f32 %v3412, %v3413
      %v3415 = vsel %vm3292, %v3373, 0.0
      %v3416 = vadd.f32 %v3414, %v3415
      %v3417 = vsel %vm3292, %v3374, 0.0
      %v3418 = vadd.f32 %v3416, %v3417
      %v3419 = vsel %vm3292, %v3375, 0.0
      %v3420 = vadd.f32 %v3418, %v3419
      %v3421 = vsel %vm3292, %v3376, 0.0
      %v3422 = vadd.f32 %v3420, %v3421
      %v3423 = vsel %vm3292, %v3377, 0.0
      %v3424 = vadd.f32 %v3422, %v3423
      %v3425 = vsel %vm3292, %v3378, 0.0
      %v3426 = vadd.f32 %v3424, %v3425
      %v3427 = vsel %vm3292, %v3379, 0.0
      %v3428 = vadd.f32 %v3426, %v3427
      %v3429 = vsel %vm3292, %v3380, 0.0
      %v3430 = vadd.f32 %v3428, %v3429
      %v3431 = vsel %vm3292, %v3381, 0.0
      %v3432 = vadd.f32 %v3430, %v3431
      %v3433 = vsel %vm3292, %v3382, 0.0
      %v3434 = vadd.f32 %v3432, %v3433
      %v3435 = vsel %vm3292, %v3383, 0.0
      %v3436 = vadd.f32 %v3434, %v3435
      %v3437 = vsel %vm3292, %v3384, 0.0
      %v3438 = vadd.f32 %v3436, %v3437
      %v3439 = vsel %vm3292, %v3385, 0.0
      %v3440 = vadd.f32 %v3438, %v3439
      %v3441 = vsel %vm3292, %v3386, 0.0
      %v3442 = vadd.f32 %v3440, %v3441
      %v3443 = vsel %vm3292, %v3387, 0.0
      %v3444 = vadd.f32 %v3442, %v3443
      %v3445 = vsel %vm3292, %v3388, 0.0
      %v3446 = vadd.f32 %v3444, %v3445
      %v3447 = vsel %vm3292, %v3389, 0.0
      %v3448 = vadd.f32 %v3446, %v3447
      %v3449 = vsel %vm3292, %v3390, 0.0
      %v3450 = vadd.f32 %v3448, %v3449
      %v3451 = vsel %vm3292, %v3391, 0.0
      %v3452 = vadd.f32 %v3450, %v3451
      %v3453 = vsel %vm3292, %v3392, 0.0
      %v3454 = vadd.f32 %v3452, %v3453
      %v3455 = vsel %vm3292, %v3393, 0.0
      %v3456 = vadd.f32 %v3454, %v3455
      %v3457 = vrot.slane %v3456, 4
      %v3458 = vadd.f32 %v3456, %v3457
      %v3459 = vrot.slane %v3458, 2
      %v3460 = vadd.f32 %v3458, %v3459
      %v3461 = vrot.slane %v3460, 1
      %v3462 = vadd.f32 %v3460, %v3461
      %p3463 = scmp.eq.s32.totalorder %s22, 0
      // Predicated region
      $region37: #{conv_layer_forward.2} parent=35 // pred_check
        %p3464 = pneg %p3463
      $region38: #{conv_layer_forward.2} parent=35 // pred_check_branch
        %3466 = sbr.rel (%p3464) target = $region40
      $region39: #{conv_layer_forward.2} parent=35 // pred_region
        %vm3467 = vcmask 57344
        %3468 = vst.msk [vmem:[%s355] sm:$0x1] %vm3467, %v3361
        %3469 = vst.msk [vmem:[%s355 + $0x1] sm:$0x1] %vm3467, %v3462
      $region40: #{conv_layer_forward.2} parent=35 // pred_fallthru
        _
      %p3470 = scmp.ne.s32.totalorder %s22, 0
      // Predicated region
      $region41: #{conv_layer_forward.2} parent=35 // pred_check
        %p3471 = pneg %p3470
      $region42: #{conv_layer_forward.2} parent=35 // pred_check_branch
        %3473 = sbr.rel (%p3471) target = $region44
      $region43: #{conv_layer_forward.2} parent=35 // pred_region
        %v3474 = vld [vmem:[%s355] sm:$0x1]
        %v3475 = vadd.f32 %v3474, %v3361
        %vm3476 = vcmask 57344
        %3477 = vst.msk [vmem:[%s355] sm:$0x1] %vm3476, %v3475
        %v3478 = vld [vmem:[%s355 + $0x1] sm:$0x1]
        %v3479 = vadd.f32 %v3478, %v3462
        %3480 = vst.msk [vmem:[%s355 + $0x1] sm:$0x1] %vm3476, %v3479
      $region44: #{conv_layer_forward.2} parent=35 // pred_fallthru
        _
      %3481 = vst.msk [vmem:[%s350] sm:$0xff] %vm3292, %v3260
      %3482 = vst.msk [vmem:[%s350 + $0x8] sm:$0xff] %vm3292, %v3261
      %3483 = vst.msk [vmem:[%s350 + $0x10] sm:$0xff] %vm3292, %v3262
      %3484 = vst.msk [vmem:[%s350 + $0x18] sm:$0xff] %vm3292, %v3263
      %3485 = vst.msk [vmem:[%s350 + $0x20] sm:$0xff] %vm3292, %v3264
      %3486 = vst.msk [vmem:[%s350 + $0x28] sm:$0xff] %vm3292, %v3265
      %3487 = vst.msk [vmem:[%s350 + $0x30] sm:$0xff] %vm3292, %v3266
      %3488 = vst.msk [vmem:[%s350 + $0x38] sm:$0xff] %vm3292, %v3267
      %3489 = vst.msk [vmem:[%s350 + $0x40] sm:$0xff] %vm3292, %v3268
      %3490 = vst.msk [vmem:[%s350 + $0x48] sm:$0xff] %vm3292, %v3269
      %3491 = vst.msk [vmem:[%s350 + $0x50] sm:$0xff] %vm3292, %v3270
      %3492 = vst.msk [vmem:[%s350 + $0x58] sm:$0xff] %vm3292, %v3271
      %3493 = vst.msk [vmem:[%s350 + $0x60] sm:$0xff] %vm3292, %v3272
      %3494 = vst.msk [vmem:[%s350 + $0x68] sm:$0xff] %vm3292, %v3273
      %3495 = vst.msk [vmem:[%s350 + $0x70] sm:$0xff] %vm3292, %v3274
      %3496 = vst.msk [vmem:[%s350 + $0x78] sm:$0xff] %vm3292, %v3275
      %3497 = vst.msk [vmem:[%s350 + $0x80] sm:$0xff] %vm3292, %v3276
      %3498 = vst.msk [vmem:[%s350 + $0x88] sm:$0xff] %vm3292, %v3277
      %3499 = vst.msk [vmem:[%s350 + $0x90] sm:$0xff] %vm3292, %v3278
      %3500 = vst.msk [vmem:[%s350 + $0x98] sm:$0xff] %vm3292, %v3279
      %3501 = vst.msk [vmem:[%s350 + $0xa0] sm:$0xff] %vm3292, %v3280
      %3502 = vst.msk [vmem:[%s350 + $0xa8] sm:$0xff] %vm3292, %v3281
      %3503 = vst.msk [vmem:[%s350 + $0xb0] sm:$0xff] %vm3292, %v3282
      %3504 = vst.msk [vmem:[%s350 + $0xb8] sm:$0xff] %vm3292, %v3283
      %3505 = vst.msk [vmem:[%s350 + $0xc0] sm:$0xff] %vm3292, %v3284
      %3506 = vst.msk [vmem:[%s350 + $0xc8] sm:$0xff] %vm3292, %v3285
      %3507 = vst.msk [vmem:[%s350 + $0xd0] sm:$0xff] %vm3292, %v3286
      %3508 = vst.msk [vmem:[%s350 + $0xd8] sm:$0xff] %vm3292, %v3287
      %3509 = vst.msk [vmem:[%s350 + $0xe0] sm:$0xff] %vm3292, %v3288
      %3510 = vst.msk [vmem:[%s350 + $0xe8] sm:$0xff] %vm3292, %v3289
      %3511 = vst.msk [vmem:[%s350 + $0xf0] sm:$0xff] %vm3292, %v3290
      %3512 = vst.msk [vmem:[%s350 + $0xf8] sm:$0xff] %vm3292, %v3291
      %s3513 = smul.u32 32, %s22
      %p3514 = scmp.lt.s32.totalorder %s21, 1
      %s3515 = scalar_select %p3514, %s21, 1
      %p3516 = scmp.lt.s32.totalorder %s3513, 31
      %s3517 = scalar_select %p3516, %s3513, 31
      %s3518 = smul.addr %s3515, 32
      %s3519 = sadd.s32 %s3517, %s3518
      %s3520 = smul.addr %s3519, 8
      %s3521 = scalar_lea.vmem %s4, %s3520
      %p3522 = scmp.lt.s32.totalorder %s21, 1
      %s3523 = scalar_select %p3522, %s21, 1
      %s3524 = smul.addr %s3523, 2
      %s3525 = scalar_lea.vmem %s5, %s3524
      // Predicated region
      $region45: #{conv_layer_forward.2} parent=35 // pred_check
        %p3526 = pneg %p151
      $region46: #{conv_layer_forward.2} parent=35 // pred_check_branch
        %3528 = sbr.rel (%p3526) target = $region48
      $region47: #{conv_layer_forward.2} parent=35 // pred_region
        %s3529 = smul.u32 32, %s22
      $region48: #{conv_layer_forward.2} parent=35 // pred_fallthru
        _
      // Predicated region
      $region49: #{conv_layer_forward.2} parent=35 // pred_check
        %p3530 = pneg %p177
      $region50: #{conv_layer_forward.2} parent=35 // pred_check_branch
        %3532 = sbr.rel (%p3530) target = $region52
      $region51: #{conv_layer_forward.2} parent=35 // pred_region
        _
      $region52: #{conv_layer_forward.2} parent=35 // pred_fallthru
        _
    $region36: #{conv_layer_forward.2} parent=5 // pred_fallthru
      _
    %p3533 = scmp.le.s32.totalorder 2, %s12
    // Predicated region
    $region53: #{conv_layer_forward.2} parent=5 // pred_check
      %p3534 = pneg %p3533
    $region54: #{conv_layer_forward.2} parent=5 // pred_check_branch
      %3536 = sbr.rel (%p3534) target = $region56
    $region55: #{conv_layer_forward.2} parent=5 // pred_region
      %s3537 = ssub.s32 %s12, 2
      // Predicated region
      $region57: #{conv_layer_forward.2} parent=55 // pred_check
        %p3538 = pneg %p157
      $region58: #{conv_layer_forward.2} parent=55 // pred_check_branch
        %3540 = sbr.rel (%p3538) target = $region60
      $region59: #{conv_layer_forward.2} parent=55 // pred_region
        %s3541 = smul.u32 32, %s24
        %p3542 = scmp.lt.s32.totalorder %s23, 1
        %s3543 = scalar_select %p3542, %s23, 1
        %p3544 = scmp.lt.s32.totalorder %s3541, 31
        %s3545 = scalar_select %p3544, %s3541, 31
        %s3546 = smul.addr %s3543, 32
        %s3547 = sadd.s32 %s3545, %s3546
        %s3548 = smul.addr %s3547, 8
        %s3549 = scalar_lea.vmem %s4, %s3548
      $region60: #{conv_layer_forward.2} parent=55 // pred_fallthru
        _
      // Predicated region
      $region61: #{conv_layer_forward.2} parent=55 // pred_check
        %p3550 = pneg %p183
      $region62: #{conv_layer_forward.2} parent=55 // pred_check_branch
        %3552 = sbr.rel (%p3550) target = $region64
      $region63: #{conv_layer_forward.2} parent=55 // pred_region
        %p3553 = scmp.lt.s32.totalorder %s23, 1
        %s3554 = scalar_select %p3553, %s23, 1
        %s3555 = smul.addr %s3554, 2
        %s3556 = scalar_lea.vmem %s5, %s3555
      $region64: #{conv_layer_forward.2} parent=55 // pred_fallthru
        _
    $region56: #{conv_layer_forward.2} parent=5 // pred_fallthru
      _
  $region6: #{conv_layer_forward.2} parent=0 // loop_footer
    %s16 = sadd.s32 1, %s12
  $region7: #{conv_layer_forward.2} parent=0 // loop_footer_branch
    %11 = sbr.rel target = $region3
  $region8: #{conv_layer_forward.2} parent=0 // loop_exit
    _

</llo_original>
